<compile_context>
chip_gen: v7x
topology: tpu7x:2x2x1
jax: 0.10.0
libtpu: 0.0.40
codegen_flags: <defaults>
</compile_context>

<pallas_src>
import jax
import jax.numpy as jnp
from jax.experimental import pallas as pl
from jax.experimental.pallas import tpu as pltpu

_LANES = 128


def _pack_rows(entries):
    """Pack (name, 2-D f32 array) entries into one lane-dense [R, 128] buffer.

    Every entry starts on an 8-row (sublane-tile) boundary so in-kernel static
    slices never straddle a tile.  Returns (packed, {name: row_offset}).
    """
    blocks, offsets, r = [], {}, 0
    for name, a in entries:
        a = jnp.asarray(a, jnp.float32)
        h, w = a.shape
        assert w <= _LANES, f"{name}: last dim {w} > {_LANES}"
        offsets[name] = r
        hp = -(-h // 8) * 8
        blk = jnp.zeros((hp, _LANES), jnp.float32).at[:h, :w].set(a)
        blocks.append(blk)
        r += hp
    return jnp.concatenate(blocks, axis=0), offsets


def prepare_params(p):
    """One-time param prep: fold the branch FCs into the classifier (exact: no
    intervening nonlinearity), fuse the two classifier blocks into one matrix,
    and pack everything into a single lane-dense buffer."""
    Cin, Fc = p["w_conv"].shape
    Fin, Hr = p["w_ih"].shape
    NC = p["b_cls"].shape[1]
    w_cls_a = p["w_cls"][:NC, :]          # acts on CNN-branch logits
    w_cls_b = p["w_cls"][NC:, :]          # acts on RNN-branch logits
    w_cls_cnn = p["w_cfc"] @ w_cls_a                                    # [Fc, NC]
    w_cls_rnn = p["w_rfc"] @ w_cls_b                                    # [Hr, NC]
    w_cls_cat = jnp.concatenate([w_cls_cnn, w_cls_rnn], axis=0)         # [Fc+Hr, NC]
    b_fold = p["b_cfc"] @ w_cls_a + p["b_rfc"] @ w_cls_b + p["b_cls"]   # [1, NC]
    packed, offs = _pack_rows([
        ("w_conv_t", p["w_conv"].T),   # [Fc, Cin]
        ("b_conv",   p["b_conv"].T),   # [Fc, 1]
        ("w_ih",     p["w_ih"]),       # [Fin, Hr]
        ("w_hh_t",   p["w_hh"].T),     # [Hr, Hr]  (transposed for lane-reduce matvec)
        ("b_rnn",    p["b_rnn"]),      # [1, Hr]
        ("w_cls",    w_cls_cat),       # [Fc+Hr, NC]  fused classifier
        ("b_cls",    b_fold),          # [1, NC]
    ])
    dims = dict(Cin=Cin, Fc=Fc, Fin=Fin, Hr=Hr, NC=NC)
    return packed, offs, dims


def _make_kernel(B, Cin, HW, Fc, T, Fin, Hr, NC, off):
    inv_hw = 1.0 / float(HW)
    f32 = jnp.float32
    b_aligned = (B % 8 == 0)

    def kernel(x_cnn_ref, x_rnn_ref, p_ref, out_ref, xw_ref):
        # ---- unpack packed parameter buffer (static, 8-row-aligned slices) ----
        w_conv_t = p_ref[off["w_conv_t"]:off["w_conv_t"] + Fc, :Cin]      # [Fc, Cin]
        b_conv   = p_ref[off["b_conv"]:off["b_conv"] + Fc, :1]            # [Fc, 1]
        w_ih     = p_ref[off["w_ih"]:off["w_ih"] + Fin, :Hr]              # [Fin, Hr]
        w_hh_t   = p_ref[off["w_hh_t"]:off["w_hh_t"] + Hr, :Hr]           # [Hr, Hr] = w_hh^T
        b_rnn    = p_ref[off["b_rnn"]:off["b_rnn"] + 1, :Hr]              # [1, Hr]
        w_cls    = p_ref[off["w_cls"]:off["w_cls"] + Fc + Hr, :NC]        # [Fc+Hr, NC]
        b_cls    = p_ref[off["b_cls"]:off["b_cls"] + 1, :NC]              # [1, NC]

        # ---- RNN input projection: one MXU matmul, hoisted off the serial path;
        # b_rnn pre-added so the recurrence has no per-step bias add.
        xw_ref[...] = (jnp.dot(x_rnn_ref[...], w_ih, preferred_element_type=f32)
                       + b_rnn)                                           # [T*B, Hr]

        # ---- CNN branch: 1x1 conv as a VPU channel mix (K=Cin is MXU-hostile),
        # ReLU, then lane-axis mean pooling.  x_cnn is channel-major: x[c] is a
        # dense [B, HW] tile.
        h = jnp.broadcast_to(b_conv[None, :, :], (B, Fc, HW))             # bias-init acc
        for c in range(Cin):                                              # Cin small, static
            h = h + x_cnn_ref[c][:, None, :] * w_conv_t[None, :, c:c + 1]
        pooled = jnp.sum(jnp.maximum(h, 0.0), axis=-1) * inv_hw           # [B, Fc]

        # ---- RNN recurrence: h_t @ w_hh on VPU+XLU (broadcast-mul + lane
        # reduce of the resident transposed weight) — no per-step MXU round trip.
        w_hh_b = jnp.broadcast_to(w_hh_t[None, :, :], (B, Hr, Hr))        # hoisted

        def step(t, h_t):
            start = t * B
            if b_aligned:
                start = pl.multiple_of(start, 8)
            x_t = xw_ref[pl.ds(start, B), :]                              # [B, Hr]
            hw = jnp.sum(h_t[:, None, :] * w_hh_b, axis=-1)               # == h_t @ w_hh
            return jnp.tanh(x_t + hw)

        h_t = jax.lax.fori_loop(0, T, step, jnp.zeros((B, Hr), f32), unroll=True)

        # ---- fused ensemble classifier: one matmul on lane-concatenated features.
        # Mathematically identical to concat([out_cnn, out_rnn], dim=1) @ W_cls + b.
        feats = jnp.concatenate([pooled, h_t], axis=-1)                   # [B, Fc+Hr]
        out_ref[...] = (jnp.dot(feats, w_cls, preferred_element_type=f32) + b_cls)

    return kernel


def ensemble_forward(x_cnn, x_rnn, packed_params, offs, dims):
    B, Cin, H, W = x_cnn.shape
    _, T, Fin = x_rnn.shape
    HW = H * W
    Fc, Hr, NC = dims["Fc"], dims["Hr"], dims["NC"]
    R = packed_params.shape[0]

    # Tiny wrapper-side layout prep (32 KiB + 8 KiB, outside the kernel):
    #   x_cnn -> channel-major [Cin, B, HW] (dense [B,HW] tiles per channel)
    #   x_rnn -> time-major 2D [T*B, Fin]   (one dense matmul operand)
    x_cnn_cm = jnp.transpose(x_cnn.reshape(B, Cin, HW), (1, 0, 2))
    x_rnn_2d = jnp.transpose(x_rnn, (1, 0, 2)).reshape(T * B, Fin)

    kernel = _make_kernel(B, Cin, HW, Fc, T, Fin, Hr, NC, offs)

    out = pl.pallas_call(
        kernel,
        out_shape=jax.ShapeDtypeStruct((B, NC), jnp.float32),
        grid=(1,),   # single grid step: no split overhead on single-TC chips
        in_specs=[
            pl.BlockSpec((Cin, B, HW), lambda i: (0, 0, 0)),
            pl.BlockSpec((T * B, Fin), lambda i: (0, 0)),
            pl.BlockSpec((R, _LANES), lambda i: (0, 0)),
        ],
        out_specs=pl.BlockSpec((B, NC), lambda i: (0, 0)),
        scratch_shapes=[pltpu.VMEM((T * B, Hr), jnp.float32)],   # hoisted x @ W_ih + b
        compiler_params=pltpu.CompilerParams(
            dimension_semantics=("arbitrary",)),
    )(x_cnn_cm, x_rnn_2d, packed_params)
    return out


def init_params(key, Cin, Fc, Fin, Hr, NC):
    ks = jax.random.split(key, 11)
    w = lambda k, s: 0.1 * jax.random.normal(k, s, jnp.float32)
    return dict(
        w_conv=w(ks[0], (Cin, Fc)),   b_conv=w(ks[1], (1, Fc)),
        w_cfc=w(ks[2], (Fc, NC)),     b_cfc=w(ks[3], (1, NC)),
        w_ih=w(ks[4], (Fin, Hr)),     w_hh=w(ks[5], (Hr, Hr)),
        b_rnn=w(ks[6], (1, Hr)),
        w_rfc=w(ks[7], (Hr, NC)),     b_rfc=w(ks[8], (1, NC)),
        w_cls=w(ks[9], (2 * NC, NC)), b_cls=w(ks[10], (1, NC)),
    )


def reference_forward(x_cnn, x_rnn, p):
    """Pure-JAX reference mirroring the PyTorch semantics (concat + Linear)."""
    # model_cnn stand-in
    h = jnp.einsum('bchw,cf->bfhw', x_cnn, p["w_conv"]) + p["b_conv"][0][None, :, None, None]
    h = jnp.maximum(h, 0.0)
    pooled = jnp.mean(h, axis=(2, 3))
    out_cnn = pooled @ p["w_cfc"] + p["b_cfc"]
    # model_rnn stand-in
    ht = jnp.zeros((x_rnn.shape[0], p["w_hh"].shape[0]), jnp.float32)
    for t in range(x_rnn.shape[1]):
        ht = jnp.tanh(x_rnn[:, t, :] @ p["w_ih"] + ht @ p["w_hh"] + p["b_rnn"])
    out_rnn = ht @ p["w_rfc"] + p["b_rfc"]
    # EnsembleModel: concat along dim=1, then classifier
    cat = jnp.concatenate([out_cnn, out_rnn], axis=1)
    return cat @ p["w_cls"] + p["b_cls"]


if __name__ == "__main__":
    B, Cin, H, W = 8, 4, 16, 16
    T, Fin = 8, 32
    Fc, Hr, NC = 16, 32, 16

    key = jax.random.PRNGKey(0)
    kp, kx1, kx2 = jax.random.split(key, 3)
    params = init_params(kp, Cin, Fc, Fin, Hr, NC)
    x_cnn = jax.random.normal(kx1, (B, Cin, H, W), jnp.float32)
    x_rnn = jax.random.normal(kx2, (B, T, Fin), jnp.float32)

    packed, offs, dims = prepare_params(params)   # one-time: fold + fuse + pack params

    out = ensemble_forward(x_cnn, x_rnn, packed, offs, dims)
    out = jax.block_until_ready(out)

    ref = reference_forward(x_cnn, x_rnn, params)
    assert out.shape == (B, NC)
    assert jnp.allclose(out, ref, atol=1e-4, rtol=1e-4), "mismatch vs reference"

    print("KERNEL_OK")
</pallas_src>

<mosaic_0001>
module attributes {stable_mosaic.version = 11 : i64} {
  func.func @kernel(%arg0: i32, %arg1: memref<4x8x256xf32, #tpu.memory_space<vmem>>, %arg2: memref<64x32xf32, #tpu.memory_space<vmem>>, %arg3: memref<160x128xf32, #tpu.memory_space<vmem>>, %arg4: memref<8x16xf32, #tpu.memory_space<vmem>>, %arg5: memref<64x32xf32, #tpu.memory_space<vmem>>) attributes {dimension_semantics = [#tpu.dimension_semantics<arbitrary>], iteration_bounds = array<i64: 1>, scalar_prefetch = 0 : i64, scratch_operands = 1 : i64, tpu.core_type = #tpu.core_type<tc>, window_params = [{pipeline_mode = #tpu.pipeline_mode<synchronous>, transform_indices = @transform_0, window_bounds = array<i64: 4, 8, 256>}, {pipeline_mode = #tpu.pipeline_mode<synchronous>, transform_indices = @transform_1, window_bounds = array<i64: 64, 32>}, {pipeline_mode = #tpu.pipeline_mode<synchronous>, transform_indices = @transform_2, window_bounds = array<i64: 160, 128>}, {pipeline_mode = #tpu.pipeline_mode<synchronous>, transform_indices = @transform_3, window_bounds = array<i64: 8, 16>}]} {
    %c0 = arith.constant 0 : index
    %c0_0 = arith.constant 0 : index
    %0 = vector.load %arg3[%c0, %c0_0] : memref<160x128xf32, #tpu.memory_space<vmem>>, vector<16x4xf32>
    %c16 = arith.constant 16 : index
    %c0_1 = arith.constant 0 : index
    %1 = vector.load %arg3[%c16, %c0_1] : memref<160x128xf32, #tpu.memory_space<vmem>>, vector<16x1xf32>
    %c32 = arith.constant 32 : index
    %c0_2 = arith.constant 0 : index
    %2 = vector.load %arg3[%c32, %c0_2] : memref<160x128xf32, #tpu.memory_space<vmem>>, vector<32x32xf32>
    %c64 = arith.constant 64 : index
    %c0_3 = arith.constant 0 : index
    %3 = vector.load %arg3[%c64, %c0_3] : memref<160x128xf32, #tpu.memory_space<vmem>>, vector<32x32xf32>
    %c96 = arith.constant 96 : index
    %c0_4 = arith.constant 0 : index
    %4 = vector.load %arg3[%c96, %c0_4] : memref<160x128xf32, #tpu.memory_space<vmem>>, vector<1x32xf32>
    %c104 = arith.constant 104 : index
    %c0_5 = arith.constant 0 : index
    %5 = vector.load %arg3[%c104, %c0_5] : memref<160x128xf32, #tpu.memory_space<vmem>>, vector<48x16xf32>
    %c152 = arith.constant 152 : index
    %c0_6 = arith.constant 0 : index
    %6 = vector.load %arg3[%c152, %c0_6] : memref<160x128xf32, #tpu.memory_space<vmem>>, vector<1x16xf32>
    %c0_7 = arith.constant 0 : index
    %c0_8 = arith.constant 0 : index
    %7 = vector.load %arg2[%c0_7, %c0_8] : memref<64x32xf32, #tpu.memory_space<vmem>>, vector<64x32xf32>
    %cst = arith.constant dense<0.000000e+00> : vector<64x32xf32>
    %8 = tpu.matmul %7, %2, %cst {dimension_numbers = #tpu.dot_dimension_numbers<[1], [0], [0], [1], [0, 0, 1, 1], [], []>} : vector<64x32xf32>, vector<32x32xf32>, vector<64x32xf32> -> vector<64x32xf32>
    %9 = vector.broadcast %4 : vector<1x32xf32> to vector<64x32xf32>
    %10 = arith.addf %8, %9 : vector<64x32xf32>
    %c0_9 = arith.constant 0 : index
    %c0_10 = arith.constant 0 : index
    %11 = vector.load %arg5[%c0_9, %c0_10] : memref<64x32xf32, #tpu.memory_space<vmem>>, vector<64x32xf32>
    tpu.vector_store %arg5[%c0_9, %c0_10], %10 {strides = array<i32>} : memref<64x32xf32, #tpu.memory_space<vmem>>, vector<64x32xf32>,
    %12 = vector.shape_cast %1 : vector<16x1xf32> to vector<1x16x1xf32>
    %13 = vector.shape_cast %12 : vector<1x16x1xf32> to vector<1x16x1xf32>
    %14 = vector.broadcast %13 : vector<1x16x1xf32> to vector<8x16x256xf32>
    %c0_11 = arith.constant 0 : index
    %c0_12 = arith.constant 0 : index
    %c0_13 = arith.constant 0 : index
    %15 = vector.load %arg1[%c0_11, %c0_12, %c0_13] : memref<4x8x256xf32, #tpu.memory_space<vmem>>, vector<1x8x256xf32>
    %16 = vector.shape_cast %15 : vector<1x8x256xf32> to vector<8x256xf32>
    %17 = vector.shape_cast %16 : vector<8x256xf32> to vector<8x1x256xf32>
    %18 = vector.extract_strided_slice %0 {offsets = [0, 0], sizes = [16, 1], strides = [1, 1]} : vector<16x4xf32> to vector<16x1xf32>
    %19 = vector.shape_cast %18 : vector<16x1xf32> to vector<1x16x1xf32>
    %20 = vector.broadcast %17 : vector<8x1x256xf32> to vector<8x16x256xf32>
    %21 = vector.broadcast %19 : vector<1x16x1xf32> to vector<8x16x256xf32>
    %22 = arith.mulf %20, %21 : vector<8x16x256xf32>
    %23 = arith.addf %14, %22 : vector<8x16x256xf32>
    %c1 = arith.constant 1 : index
    %c0_14 = arith.constant 0 : index
    %c0_15 = arith.constant 0 : index
    %24 = vector.load %arg1[%c1, %c0_14, %c0_15] : memref<4x8x256xf32, #tpu.memory_space<vmem>>, vector<1x8x256xf32>
    %25 = vector.shape_cast %24 : vector<1x8x256xf32> to vector<8x256xf32>
    %26 = vector.shape_cast %25 : vector<8x256xf32> to vector<8x1x256xf32>
    %27 = vector.extract_strided_slice %0 {offsets = [0, 1], sizes = [16, 1], strides = [1, 1]} : vector<16x4xf32> to vector<16x1xf32>
    %28 = vector.shape_cast %27 : vector<16x1xf32> to vector<1x16x1xf32>
    %29 = vector.broadcast %26 : vector<8x1x256xf32> to vector<8x16x256xf32>
    %30 = vector.broadcast %28 : vector<1x16x1xf32> to vector<8x16x256xf32>
    %31 = arith.mulf %29, %30 : vector<8x16x256xf32>
    %32 = arith.addf %23, %31 : vector<8x16x256xf32>
    %c2 = arith.constant 2 : index
    %c0_16 = arith.constant 0 : index
    %c0_17 = arith.constant 0 : index
    %33 = vector.load %arg1[%c2, %c0_16, %c0_17] : memref<4x8x256xf32, #tpu.memory_space<vmem>>, vector<1x8x256xf32>
    %34 = vector.shape_cast %33 : vector<1x8x256xf32> to vector<8x256xf32>
    %35 = vector.shape_cast %34 : vector<8x256xf32> to vector<8x1x256xf32>
    %36 = vector.extract_strided_slice %0 {offsets = [0, 2], sizes = [16, 1], strides = [1, 1]} : vector<16x4xf32> to vector<16x1xf32>
    %37 = vector.shape_cast %36 : vector<16x1xf32> to vector<1x16x1xf32>
    %38 = vector.broadcast %35 : vector<8x1x256xf32> to vector<8x16x256xf32>
    %39 = vector.broadcast %37 : vector<1x16x1xf32> to vector<8x16x256xf32>
    %40 = arith.mulf %38, %39 : vector<8x16x256xf32>
    %41 = arith.addf %32, %40 : vector<8x16x256xf32>
    %c3 = arith.constant 3 : index
    %c0_18 = arith.constant 0 : index
    %c0_19 = arith.constant 0 : index
    %42 = vector.load %arg1[%c3, %c0_18, %c0_19] : memref<4x8x256xf32, #tpu.memory_space<vmem>>, vector<1x8x256xf32>
    %43 = vector.shape_cast %42 : vector<1x8x256xf32> to vector<8x256xf32>
    %44 = vector.shape_cast %43 : vector<8x256xf32> to vector<8x1x256xf32>
    %45 = vector.extract_strided_slice %0 {offsets = [0, 3], sizes = [16, 1], strides = [1, 1]} : vector<16x4xf32> to vector<16x1xf32>
    %46 = vector.shape_cast %45 : vector<16x1xf32> to vector<1x16x1xf32>
    %47 = vector.broadcast %44 : vector<8x1x256xf32> to vector<8x16x256xf32>
    %48 = vector.broadcast %46 : vector<1x16x1xf32> to vector<8x16x256xf32>
    %49 = arith.mulf %47, %48 : vector<8x16x256xf32>
    %50 = arith.addf %41, %49 : vector<8x16x256xf32>
    %cst_20 = arith.constant 0.000000e+00 : f32
    %51 = vector.broadcast %cst_20 : f32 to vector<8x16x256xf32>
    %52 = arith.maximumf %50, %51 : vector<8x16x256xf32>
    %cst_21 = arith.constant dense<0.000000e+00> : vector<8x16xf32>
    %53 = vector.multi_reduction <add>, %52, %cst_21 [2] : vector<8x16x256xf32> to vector<8x16xf32>
    %cst_22 = arith.constant 3.906250e-03 : f32
    %54 = vector.broadcast %cst_22 : f32 to vector<8x16xf32>
    %55 = arith.mulf %53, %54 : vector<8x16xf32>
    %56 = vector.shape_cast %3 : vector<32x32xf32> to vector<1x32x32xf32>
    %57 = vector.shape_cast %56 : vector<1x32x32xf32> to vector<1x32x32xf32>
    %58 = vector.broadcast %57 : vector<1x32x32xf32> to vector<8x32x32xf32>
    %cst_23 = arith.constant 0.000000e+00 : f32
    %59 = vector.broadcast %cst_23 : f32 to vector<8x32xf32>
    %c0_i32 = arith.constant 0 : i32
    %c8_i32 = arith.constant 8 : i32
    %60 = arith.muli %c0_i32, %c8_i32 : i32
    %61 = tpu.assume_multiple %60, 8 : i32
    %62 = arith.index_cast %61 : i32 to index
    %c0_24 = arith.constant 0 : index
    %63 = vector.load %arg5[%62, %c0_24] : memref<64x32xf32, #tpu.memory_space<vmem>>, vector<8x32xf32>
    %64 = vector.shape_cast %59 : vector<8x32xf32> to vector<8x1x32xf32>
    %65 = vector.broadcast %64 : vector<8x1x32xf32> to vector<8x32x32xf32>
    %66 = arith.mulf %65, %58 : vector<8x32x32xf32>
    %cst_25 = arith.constant dense<0.000000e+00> : vector<8x32xf32>
    %67 = vector.multi_reduction <add>, %66, %cst_25 [2] : vector<8x32x32xf32> to vector<8x32xf32>
    %68 = arith.addf %63, %67 : vector<8x32xf32>
    %69 = math.tanh %68 : vector<8x32xf32>
    %c1_i32 = arith.constant 1 : i32
    %c8_i32_26 = arith.constant 8 : i32
    %70 = arith.muli %c1_i32, %c8_i32_26 : i32
    %71 = tpu.assume_multiple %70, 8 : i32
    %72 = arith.index_cast %71 : i32 to index
    %c0_27 = arith.constant 0 : index
    %73 = vector.load %arg5[%72, %c0_27] : memref<64x32xf32, #tpu.memory_space<vmem>>, vector<8x32xf32>
    %74 = vector.shape_cast %69 : vector<8x32xf32> to vector<8x1x32xf32>
    %75 = vector.broadcast %74 : vector<8x1x32xf32> to vector<8x32x32xf32>
    %76 = arith.mulf %75, %58 : vector<8x32x32xf32>
    %cst_28 = arith.constant dense<0.000000e+00> : vector<8x32xf32>
    %77 = vector.multi_reduction <add>, %76, %cst_28 [2] : vector<8x32x32xf32> to vector<8x32xf32>
    %78 = arith.addf %73, %77 : vector<8x32xf32>
    %79 = math.tanh %78 : vector<8x32xf32>
    %c2_i32 = arith.constant 2 : i32
    %c8_i32_29 = arith.constant 8 : i32
    %80 = arith.muli %c2_i32, %c8_i32_29 : i32
    %81 = tpu.assume_multiple %80, 8 : i32
    %82 = arith.index_cast %81 : i32 to index
    %c0_30 = arith.constant 0 : index
    %83 = vector.load %arg5[%82, %c0_30] : memref<64x32xf32, #tpu.memory_space<vmem>>, vector<8x32xf32>
    %84 = vector.shape_cast %79 : vector<8x32xf32> to vector<8x1x32xf32>
    %85 = vector.broadcast %84 : vector<8x1x32xf32> to vector<8x32x32xf32>
    %86 = arith.mulf %85, %58 : vector<8x32x32xf32>
    %cst_31 = arith.constant dense<0.000000e+00> : vector<8x32xf32>
    %87 = vector.multi_reduction <add>, %86, %cst_31 [2] : vector<8x32x32xf32> to vector<8x32xf32>
    %88 = arith.addf %83, %87 : vector<8x32xf32>
    %89 = math.tanh %88 : vector<8x32xf32>
    %c3_i32 = arith.constant 3 : i32
    %c8_i32_32 = arith.constant 8 : i32
    %90 = arith.muli %c3_i32, %c8_i32_32 : i32
    %91 = tpu.assume_multiple %90, 8 : i32
    %92 = arith.index_cast %91 : i32 to index
    %c0_33 = arith.constant 0 : index
    %93 = vector.load %arg5[%92, %c0_33] : memref<64x32xf32, #tpu.memory_space<vmem>>, vector<8x32xf32>
    %94 = vector.shape_cast %89 : vector<8x32xf32> to vector<8x1x32xf32>
    %95 = vector.broadcast %94 : vector<8x1x32xf32> to vector<8x32x32xf32>
    %96 = arith.mulf %95, %58 : vector<8x32x32xf32>
    %cst_34 = arith.constant dense<0.000000e+00> : vector<8x32xf32>
    %97 = vector.multi_reduction <add>, %96, %cst_34 [2] : vector<8x32x32xf32> to vector<8x32xf32>
    %98 = arith.addf %93, %97 : vector<8x32xf32>
    %99 = math.tanh %98 : vector<8x32xf32>
    %c4_i32 = arith.constant 4 : i32
    %c8_i32_35 = arith.constant 8 : i32
    %100 = arith.muli %c4_i32, %c8_i32_35 : i32
    %101 = tpu.assume_multiple %100, 8 : i32
    %102 = arith.index_cast %101 : i32 to index
    %c0_36 = arith.constant 0 : index
    %103 = vector.load %arg5[%102, %c0_36] : memref<64x32xf32, #tpu.memory_space<vmem>>, vector<8x32xf32>
    %104 = vector.shape_cast %99 : vector<8x32xf32> to vector<8x1x32xf32>
    %105 = vector.broadcast %104 : vector<8x1x32xf32> to vector<8x32x32xf32>
    %106 = arith.mulf %105, %58 : vector<8x32x32xf32>
    %cst_37 = arith.constant dense<0.000000e+00> : vector<8x32xf32>
    %107 = vector.multi_reduction <add>, %106, %cst_37 [2] : vector<8x32x32xf32> to vector<8x32xf32>
    %108 = arith.addf %103, %107 : vector<8x32xf32>
    %109 = math.tanh %108 : vector<8x32xf32>
    %c5_i32 = arith.constant 5 : i32
    %c8_i32_38 = arith.constant 8 : i32
    %110 = arith.muli %c5_i32, %c8_i32_38 : i32
    %111 = tpu.assume_multiple %110, 8 : i32
    %112 = arith.index_cast %111 : i32 to index
    %c0_39 = arith.constant 0 : index
    %113 = vector.load %arg5[%112, %c0_39] : memref<64x32xf32, #tpu.memory_space<vmem>>, vector<8x32xf32>
    %114 = vector.shape_cast %109 : vector<8x32xf32> to vector<8x1x32xf32>
    %115 = vector.broadcast %114 : vector<8x1x32xf32> to vector<8x32x32xf32>
    %116 = arith.mulf %115, %58 : vector<8x32x32xf32>
    %cst_40 = arith.constant dense<0.000000e+00> : vector<8x32xf32>
    %117 = vector.multi_reduction <add>, %116, %cst_40 [2] : vector<8x32x32xf32> to vector<8x32xf32>
    %118 = arith.addf %113, %117 : vector<8x32xf32>
    %119 = math.tanh %118 : vector<8x32xf32>
    %c6_i32 = arith.constant 6 : i32
    %c8_i32_41 = arith.constant 8 : i32
    %120 = arith.muli %c6_i32, %c8_i32_41 : i32
    %121 = tpu.assume_multiple %120, 8 : i32
    %122 = arith.index_cast %121 : i32 to index
    %c0_42 = arith.constant 0 : index
    %123 = vector.load %arg5[%122, %c0_42] : memref<64x32xf32, #tpu.memory_space<vmem>>, vector<8x32xf32>
    %124 = vector.shape_cast %119 : vector<8x32xf32> to vector<8x1x32xf32>
    %125 = vector.broadcast %124 : vector<8x1x32xf32> to vector<8x32x32xf32>
    %126 = arith.mulf %125, %58 : vector<8x32x32xf32>
    %cst_43 = arith.constant dense<0.000000e+00> : vector<8x32xf32>
    %127 = vector.multi_reduction <add>, %126, %cst_43 [2] : vector<8x32x32xf32> to vector<8x32xf32>
    %128 = arith.addf %123, %127 : vector<8x32xf32>
    %129 = math.tanh %128 : vector<8x32xf32>
    %c7_i32 = arith.constant 7 : i32
    %c8_i32_44 = arith.constant 8 : i32
    %130 = arith.muli %c7_i32, %c8_i32_44 : i32
    %131 = tpu.assume_multiple %130, 8 : i32
    %132 = arith.index_cast %131 : i32 to index
    %c0_45 = arith.constant 0 : index
    %133 = vector.load %arg5[%132, %c0_45] : memref<64x32xf32, #tpu.memory_space<vmem>>, vector<8x32xf32>
    %134 = vector.shape_cast %129 : vector<8x32xf32> to vector<8x1x32xf32>
    %135 = vector.broadcast %134 : vector<8x1x32xf32> to vector<8x32x32xf32>
    %136 = arith.mulf %135, %58 : vector<8x32x32xf32>
    %cst_46 = arith.constant dense<0.000000e+00> : vector<8x32xf32>
    %137 = vector.multi_reduction <add>, %136, %cst_46 [2] : vector<8x32x32xf32> to vector<8x32xf32>
    %138 = arith.addf %133, %137 : vector<8x32xf32>
    %139 = math.tanh %138 : vector<8x32xf32>
    %c8_i32_47 = arith.constant 8 : i32
    %140 = tpu.concatenate %55, %139 in 1 : vector<8x16xf32>, vector<8x32xf32> -> vector<8x48xf32>
    %cst_48 = arith.constant dense<0.000000e+00> : vector<8x16xf32>
    %141 = tpu.matmul %140, %5, %cst_48 {dimension_numbers = #tpu.dot_dimension_numbers<[1], [0], [0], [1], [0, 0, 1, 1], [], []>} : vector<8x48xf32>, vector<48x16xf32>, vector<8x16xf32> -> vector<8x16xf32>
    %142 = vector.broadcast %6 : vector<1x16xf32> to vector<8x16xf32>
    %143 = arith.addf %141, %142 : vector<8x16xf32>
    %c0_49 = arith.constant 0 : index
    %c0_50 = arith.constant 0 : index
    %144 = vector.load %arg4[%c0_49, %c0_50] : memref<8x16xf32, #tpu.memory_space<vmem>>, vector<8x16xf32>
    tpu.vector_store %arg4[%c0_49, %c0_50], %143 {strides = array<i32>} : memref<8x16xf32, #tpu.memory_space<vmem>>, vector<8x16xf32>,
    return
  }
  func.func @transform_0(%arg0: i32) -> (i32, i32, i32) {
    %c0_i32 = arith.constant 0 : i32
    %c0_i32_0 = arith.constant 0 : i32
    %c0_i32_1 = arith.constant 0 : i32
    %c0_i32_2 = arith.constant 0 : i32
    return %c0_i32, %c0_i32_0, %c0_i32_1 : i32, i32, i32
  }
  func.func @transform_1(%arg0: i32) -> (i32, i32) {
    %c0_i32 = arith.constant 0 : i32
    %c0_i32_0 = arith.constant 0 : i32
    %c0_i32_1 = arith.constant 0 : i32
    return %c0_i32, %c0_i32_0 : i32, i32
  }
  func.func @transform_2(%arg0: i32) -> (i32, i32) {
    %c0_i32 = arith.constant 0 : i32
    %c0_i32_0 = arith.constant 0 : i32
    %c0_i32_1 = arith.constant 0 : i32
    return %c0_i32, %c0_i32_0 : i32, i32
  }
  func.func @transform_3(%arg0: i32) -> (i32, i32) {
    %c0_i32 = arith.constant 0 : i32
    %c0_i32_0 = arith.constant 0 : i32
    %c0_i32_1 = arith.constant 0 : i32
    return %c0_i32, %c0_i32_0 : i32, i32
  }
}

</mosaic_0001>

<llo_original>
// kernel: tpu_custom_call.1
$region0: #{tpu_custom_call.1}
  #allocation0 [shape = 'u32[]', space=smem, size = 0x4, offset = 0x4, fixed_abs, tag = 'smem constant byte address 0x4 - core index']
  #allocation1 [shape = 'u32[144,128]{1,0:T(1,128)}', space=vmem, size = 0x12000, scoped, tag = 'internal scratch']
  #allocation2 [shape = 'f32[64,32]{1,0:T(8,128)}', space=vmem, size = 0x8000, scoped, tag = 'scratch operand']
  %s0 = inlined_call_operand.vmem [shape: f32[4,8,256], index: 0, kind: input, shape index: {}]
  %s1 = inlined_call_operand.vmem [shape: f32[64,32], index: 1, kind: input, shape index: {}]
  %s2 = inlined_call_operand.hbm [shape: f32[160,128], index: 2, kind: input, shape index: {}]
  %s3 = inlined_call_operand.hbm [shape: f32[8,16], index: 3, kind: output, shape index: {}]
  %s4 = sld [smem:[#allocation0]]
  $region26: #{tpu_custom_call.1} parent=0
    _
  %s6 = ssub.s32 1, %s4
  %s7 = scalar_select 0, %s6, %s4
  $region1: #{tpu_custom_call.1} parent=0
    #allocation3 [shape = 'u8[81920]{0}', space=vmem, size = 0x14000, scoped, tag = 'input window, operand 2, single buffered']
    #allocation4 [shape = 's32[1]{0}', space=sflag, size = 0x4, scoped, tag = 'scoped memory for tpu_custom_call.1']
    #allocation5 [shape = 's32[1]{0}', space=sflag, size = 0x4, scoped, tag = 'scoped memory for tpu_custom_call.1']
    #allocation6 [shape = 'u8[4096]{0}', space=vmem, size = 0x1000, scoped, tag = 'output window, operand 0, single buffered']
    %8 = vsyncpa [#allocation4], 0
    %9 = vsyncpa [#allocation5], 0
    // Predicated region
    $region2: #{tpu_custom_call.1} parent=1 // pred_check
      _
    $region3: #{tpu_custom_call.1} parent=1 // pred_check_branch
      %11 = sbr.rel (0) target = $region5
    $region4: #{tpu_custom_call.1} parent=1 // pred_region
      _
    $region5: #{tpu_custom_call.1} parent=1 // pred_fallthru
      _
    // Predicated region
    $region6: #{tpu_custom_call.1} parent=1 // pred_check
      _
    $region7: #{tpu_custom_call.1} parent=1 // pred_check_branch
      %13 = sbr.rel (0) target = $region9
    $region8: #{tpu_custom_call.1} parent=1 // pred_region
      _
    $region9: #{tpu_custom_call.1} parent=1 // pred_fallthru
      _
    // Predicated region
    $region10: #{tpu_custom_call.1} parent=1 // pred_check
      _
    $region11: #{tpu_custom_call.1} parent=1 // pred_check_branch
      %15 = sbr.rel (0) target = $region13
    $region12: #{tpu_custom_call.1} parent=1 // pred_region
      %s17 = ssub.s32 2560, 2560
      %18 = vsyncadd [#allocation4], %s17
      %s19 = sshll.u32 [#allocation3], 4
      %s20 = int_to_ptr.vmem [resolvable:$true] %s19
      %25 = dma.hbm_to_vmem [thread:$0]  %s2, 2560, %s20, [#allocation4], 128, 128, 8
    $region13: #{tpu_custom_call.1} parent=1 // pred_fallthru
      _
    // Predicated region
    $region14: #{tpu_custom_call.1} parent=1 // pred_check
      _
    $region15: #{tpu_custom_call.1} parent=1 // pred_check_branch
      %27 = sbr.rel (0) target = $region17
    $region16: #{tpu_custom_call.1} parent=1 // pred_region
      %28 = dma.done [#allocation4], 2560
    $region17: #{tpu_custom_call.1} parent=1 // pred_fallthru
      _
    %v29 = vld [vmem:[#allocation3] sm:$0xff]
    %v30 = vld [vmem:[#allocation3 + $0x8] sm:$0xff]
    %v31 = vld [vmem:[#allocation3 + $0x10] sm:$0xff]
    %v32 = vld [vmem:[#allocation3 + $0x18] sm:$0xff]
    %v33 = vld [vmem:[#allocation3 + $0x20] sm:$0xff]
    %v34 = vld [vmem:[#allocation3 + $0x28] sm:$0xff]
    %v35 = vld [vmem:[#allocation3 + $0x30] sm:$0xff]
    %v36 = vld [vmem:[#allocation3 + $0x38] sm:$0xff]
    %v37 = vld [vmem:[#allocation3 + $0x40] sm:$0xff]
    %v38 = vld [vmem:[#allocation3 + $0x48] sm:$0xff]
    %v39 = vld [vmem:[#allocation3 + $0x50] sm:$0xff]
    %v40 = vld [vmem:[#allocation3 + $0x58] sm:$0xff]
    %v41 = vld [vmem:[#allocation3 + $0x60] sm:$0x1]
    %v42 = vld [vmem:[#allocation3 + $0x68] sm:$0xff]
    %v43 = vld [vmem:[#allocation3 + $0x70] sm:$0xff]
    %v44 = vld [vmem:[#allocation3 + $0x78] sm:$0xff]
    %v45 = vld [vmem:[#allocation3 + $0x80] sm:$0xff]
    %v46 = vld [vmem:[#allocation3 + $0x88] sm:$0xff]
    %v47 = vld [vmem:[#allocation3 + $0x90] sm:$0xff]
    %v48 = vld [vmem:[#allocation3 + $0x98] sm:$0x1]
    %v49 = vld [vmem:[%s1] sm:$0xff]
    %v50 = vld [vmem:[%s1 + $0x8] sm:$0xff]
    %v51 = vld [vmem:[%s1 + $0x10] sm:$0xff]
    %v52 = vld [vmem:[%s1 + $0x18] sm:$0xff]
    %v53 = vld [vmem:[%s1 + $0x20] sm:$0xff]
    %v54 = vld [vmem:[%s1 + $0x28] sm:$0xff]
    %v55 = vld [vmem:[%s1 + $0x30] sm:$0xff]
    %v56 = vld [vmem:[%s1 + $0x38] sm:$0xff]
    %v57 = vlaneseq
    %v58 = vshrl.u32 %v57, 7
    %v59 = vsub.s32 0, %v58
    %v60 = vrot.slane %v41, %v59
    %vm61 = vcmask 261120
    %v63 = vsel %vm61, %v49, 0
    %v66 = vsel %vm61, %v50, 0
    %v69 = vsel %vm61, %v51, 0
    %v72 = vsel %vm61, %v52, 0
    %v75 = vsel %vm61, %v53, 0
    %v78 = vsel %vm61, %v54, 0
    %v81 = vsel %vm61, %v55, 0
    %v84 = vsel %vm61, %v56, 0
    %86 = vmatprep.subr.mxu0 0.0
    %87 = vmatpush1.msra.mxu0 %v33
    %88 = vmatprep.subr.mxu0 0.0
    %89 = vmatpush1.msra.mxu0 %v34
    %90 = vmatprep.subr.mxu0 0.0
    %91 = vmatpush1.msra.mxu0 %v35
    %92 = vmatprep.subr.mxu0 0.0
    %93 = vmatpush1.msra.mxu0 %v36
    %94 = vmatprep.subr.mxu0 0.0
    %95 = vmatpush1.msra.mxu0 0.0
    %96 = vmatprep.subr.mxu0 0.0
    %97 = vmatpush1.msra.mxu0 0.0
    %98 = vmatprep.subr.mxu0 0.0
    %99 = vmatpush1.msra.mxu0 0.0
    %100 = vmatprep.subr.mxu0 0.0
    %101 = vmatpush1.msra.mxu0 0.0
    %102 = vmatprep.subr.mxu0 0.0
    %103 = vmatpush1.msra.mxu0 0.0
    %104 = vmatprep.subr.mxu0 0.0
    %105 = vmatpush1.msra.mxu0 0.0
    %106 = vmatprep.subr.mxu0 0.0
    %107 = vmatpush1.msra.mxu0 0.0
    %108 = vmatprep.subr.mxu0 0.0
    %109 = vmatpush1.msra.mxu0 0.0
    %110 = vmatprep.subr.mxu0 0.0
    %111 = vmatpush1.msra.mxu0 0.0
    %112 = vmatprep.subr.mxu0 0.0
    %113 = vmatpush1.msra.mxu0 0.0
    %114 = vmatprep.subr.mxu0 0.0
    %115 = vmatpush1.msra.mxu0 0.0
    %116 = vmatprep.subr.mxu0 0.0
    %117 = vmatpush1.msra.mxu0 0.0
    %118 = vmatprep.subr.mxu0 0.0
    %119 = vmatpush1.msra.mxu0 0.0
    %120 = vmatprep.subr.mxu0 0.0
    %121 = vmatpush1.msra.mxu0 0.0
    %122 = vmatprep.subr.mxu0 0.0
    %123 = vmatpush1.msra.mxu0 0.0
    %124 = vmatprep.subr.mxu0 0.0
    %125 = vmatpush1.msra.mxu0 0.0
    %126 = vmatprep.subr.mxu0 0.0
    %127 = vmatpush1.msra.mxu0 0.0
    %128 = vmatprep.subr.mxu0 0.0
    %129 = vmatpush1.msra.mxu0 0.0
    %130 = vmatprep.subr.mxu0 0.0
    %131 = vmatpush1.msra.mxu0 0.0
    %132 = vmatprep.subr.mxu0 0.0
    %133 = vmatpush1.msra.mxu0 0.0
    %134 = vmatprep.subr.mxu0 0.0
    %135 = vmatpush1.msra.mxu0 0.0
    %136 = vmatprep.subr.mxu0 0.0
    %137 = vmatpush1.msra.mxu0 0.0
    %138 = vmatprep.subr.mxu0 0.0
    %139 = vmatpush1.msra.mxu0 0.0
    %140 = vmatprep.subr.mxu0 0.0
    %141 = vmatpush1.msra.mxu0 0.0
    %142 = vmatprep.subr.mxu0 0.0
    %143 = vmatpush1.msra.mxu0 0.0
    %144 = vmatprep.subr.mxu0 0.0
    %145 = vmatpush1.msra.mxu0 0.0
    %146 = vmatprep.subr.mxu0 0.0
    %147 = vmatpush1.msra.mxu0 0.0
    %148 = vmatprep.subr.mxu0 0.0
    %149 = vmatpush1.msra.mxu0 0.0
    %150 = vmatprep.mubr.f32.mxu0 0.0
    %151 = vmatmul.mubr.f32.gmra.mrb[0].mxu0 %v63
    %v152 = vpop.f32.mrb[0].mxu0
    %v153 = vadd.f32 %v60, %v152
    %v154 = vpop.f32.mrb[0].mxu0
    %155 = vmatprep.mubr.f32.mxu0 0.0
    %156 = vmatmul.mubr.f32.gmra.mrb[0].mxu0 %v66
    %v157 = vpop.f32.mrb[0].mxu0
    %v158 = vadd.f32 %v60, %v157
    %v159 = vpop.f32.mrb[0].mxu0
    %160 = vmatprep.mubr.f32.mxu0 0.0
    %161 = vmatmul.mubr.f32.gmra.mrb[0].mxu0 %v69
    %v162 = vpop.f32.mrb[0].mxu0
    %v163 = vadd.f32 %v60, %v162
    %v164 = vpop.f32.mrb[0].mxu0
    %165 = vmatprep.mubr.f32.mxu0 0.0
    %166 = vmatmul.mubr.f32.gmra.mrb[0].mxu0 %v72
    %v167 = vpop.f32.mrb[0].mxu0
    %v168 = vadd.f32 %v60, %v167
    %v169 = vpop.f32.mrb[0].mxu0
    %170 = vmatprep.mubr.f32.mxu0 0.0
    %171 = vmatmul.mubr.f32.gmra.mrb[0].mxu0 %v75
    %v172 = vpop.f32.mrb[0].mxu0
    %v173 = vadd.f32 %v60, %v172
    %v174 = vpop.f32.mrb[0].mxu0
    %175 = vmatprep.mubr.f32.mxu0 0.0
    %176 = vmatmul.mubr.f32.gmra.mrb[0].mxu0 %v78
    %v177 = vpop.f32.mrb[0].mxu0
    %v178 = vadd.f32 %v60, %v177
    %v179 = vpop.f32.mrb[0].mxu0
    %180 = vmatprep.mubr.f32.mxu0 0.0
    %181 = vmatmul.mubr.f32.gmra.mrb[0].mxu0 %v81
    %v182 = vpop.f32.mrb[0].mxu0
    %v183 = vadd.f32 %v60, %v182
    %v184 = vpop.f32.mrb[0].mxu0
    %185 = vmatprep.mubr.f32.mxu0 0.0
    %186 = vmatmul.mubr.f32.gmra.mrb[0].mxu0 %v84
    %v187 = vpop.f32.mrb[0].mxu0
    %v188 = vadd.f32 %v60, %v187
    %v189 = vpop.f32.mrb[0].mxu0
    %190 = vdwg.mxu0
    %191 = vst.msk [vmem:[#allocation2] sm:$0xff] %vm61, %v153
    %192 = vst.msk [vmem:[#allocation2 + $0x8] sm:$0xff] %vm61, %v158
    %193 = vst.msk [vmem:[#allocation2 + $0x10] sm:$0xff] %vm61, %v163
    %194 = vst.msk [vmem:[#allocation2 + $0x18] sm:$0xff] %vm61, %v168
    %195 = vst.msk [vmem:[#allocation2 + $0x20] sm:$0xff] %vm61, %v173
    %196 = vst.msk [vmem:[#allocation2 + $0x28] sm:$0xff] %vm61, %v178
    %197 = vst.msk [vmem:[#allocation2 + $0x30] sm:$0xff] %vm61, %v183
    %198 = vst.msk [vmem:[#allocation2 + $0x38] sm:$0xff] %vm61, %v188
    %200 = vset.pattern.permute.xlu0 0
    %201 = vperm.xlu0 %200, %v31
    %v202 = vpop.permute.xlu0 %201
    %205 = vset.pattern.permute.xlu0 0
    %206 = vperm.xlu0 %205, %v32
    %v207 = vpop.permute.xlu0 %206
    %v209 = vld [vmem:[%s0] sm:$0xff]
    %v210 = vld [vmem:[%s0 + $0x8] sm:$0xff]
    %v213 = vcombine.low %v209, %v210
    %v214 = vcombine.high %v209, %v210
    %v216 = vunpack.c.l.s4 1966171168
    %v217 = vunpack.c.0.s8 %v216
    %v218 = vlaneseq
    %v219 = vshrl.u32 %v218, 7
    %v220 = vsub.s32 %v217, %v219
    %v221 = vrot.slane %v213, %v220
    %v223 = vunpack.c.l.s4 1966171168
    %v224 = vunpack.c.0.s8 %v223
    %v225 = vlaneseq
    %v226 = vshrl.u32 %v225, 7
    %v227 = vsub.s32 %v224, %v226
    %v228 = vrot.slane %v214, %v227
    %v229 = vcombine.high %v221, %v221
    %v230 = vcombine.high %v228, %v228
    %v232 = vunpack.c.l.s4 1966171168
    %v233 = vunpack.c.0.s8 %v232
    %v234 = vlaneseq
    %v235 = vshrl.u32 %v234, 7
    %v236 = vsub.s32 %v233, %v235
    %v237 = vrot.slane %v221, %v236
    %v239 = vunpack.c.l.s4 1966171168
    %v240 = vunpack.c.0.s8 %v239
    %v241 = vlaneseq
    %v242 = vshrl.u32 %v241, 7
    %v243 = vsub.s32 %v240, %v242
    %v244 = vrot.slane %v228, %v243
    %v246 = vunpack.c.l.s4 1966171168
    %v247 = vunpack.c.0.s8 %v246
    %v248 = vlaneseq
    %v249 = vshrl.u32 %v248, 7
    %v250 = vsub.s32 %v247, %v249
    %v251 = vrot.slane %v229, %v250
    %v253 = vunpack.c.l.s4 1966171168
    %v254 = vunpack.c.0.s8 %v253
    %v255 = vlaneseq
    %v256 = vshrl.u32 %v255, 7
    %v257 = vsub.s32 %v254, %v256
    %v258 = vrot.slane %v230, %v257
    %v259 = vcombine.high %v237, %v237
    %v260 = vcombine.high %v244, %v244
    %v261 = vcombine.high %v251, %v251
    %v262 = vcombine.high %v258, %v258
    %v263 = vlaneseq
    %v264 = vshrl.u32 %v263, 7
    %v265 = vsub.s32 0, %v264
    %v266 = vrot.slane %v237, %v265
    %v267 = vlaneseq
    %v268 = vshrl.u32 %v267, 7
    %v269 = vsub.s32 1, %v268
    %v270 = vrot.slane %v237, %v269
    %v271 = vlaneseq
    %v272 = vshrl.u32 %v271, 7
    %v273 = vsub.s32 0, %v272
    %v274 = vrot.slane %v251, %v273
    %v275 = vlaneseq
    %v276 = vshrl.u32 %v275, 7
    %v277 = vsub.s32 1, %v276
    %v278 = vrot.slane %v251, %v277
    %v279 = vlaneseq
    %v280 = vshrl.u32 %v279, 7
    %v281 = vsub.s32 0, %v280
    %v282 = vrot.slane %v259, %v281
    %v283 = vlaneseq
    %v284 = vshrl.u32 %v283, 7
    %v285 = vsub.s32 1, %v284
    %v286 = vrot.slane %v259, %v285
    %v287 = vlaneseq
    %v288 = vshrl.u32 %v287, 7
    %v289 = vsub.s32 0, %v288
    %v290 = vrot.slane %v261, %v289
    %v291 = vlaneseq
    %v292 = vshrl.u32 %v291, 7
    %v293 = vsub.s32 1, %v292
    %v294 = vrot.slane %v261, %v293
    %v295 = vlaneseq
    %v296 = vshrl.u32 %v295, 7
    %v297 = vsub.s32 0, %v296
    %v298 = vrot.slane %v244, %v297
    %v299 = vlaneseq
    %v300 = vshrl.u32 %v299, 7
    %v301 = vsub.s32 1, %v300
    %v302 = vrot.slane %v244, %v301
    %v303 = vlaneseq
    %v304 = vshrl.u32 %v303, 7
    %v305 = vsub.s32 0, %v304
    %v306 = vrot.slane %v258, %v305
    %v307 = vlaneseq
    %v308 = vshrl.u32 %v307, 7
    %v309 = vsub.s32 1, %v308
    %v310 = vrot.slane %v258, %v309
    %v311 = vlaneseq
    %v312 = vshrl.u32 %v311, 7
    %v313 = vsub.s32 0, %v312
    %v314 = vrot.slane %v260, %v313
    %v315 = vlaneseq
    %v316 = vshrl.u32 %v315, 7
    %v317 = vsub.s32 1, %v316
    %v318 = vrot.slane %v260, %v317
    %v319 = vlaneseq
    %v320 = vshrl.u32 %v319, 7
    %v321 = vsub.s32 0, %v320
    %v322 = vrot.slane %v262, %v321
    %v323 = vlaneseq
    %v324 = vshrl.u32 %v323, 7
    %v325 = vsub.s32 1, %v324
    %v326 = vrot.slane %v262, %v325
    %344 = vset.pattern.permute.xlu0 0
    %345 = vperm.xlu0 %344, %v29
    %v346 = vpop.permute.xlu0 %345
    %349 = vset.pattern.permute.xlu0 0
    %350 = vperm.xlu0 %349, %v30
    %v351 = vpop.permute.xlu0 %350
    %v353 = vmul.f32 %v266, %v346
    %v354 = vmul.f32 %v270, %v346
    %v355 = vmul.f32 %v266, %v351
    %v356 = vmul.f32 %v270, %v351
    %v357 = vmul.f32 %v274, %v346
    %v358 = vmul.f32 %v278, %v346
    %v359 = vmul.f32 %v274, %v351
    %v360 = vmul.f32 %v278, %v351
    %v361 = vmul.f32 %v282, %v346
    %v362 = vmul.f32 %v286, %v346
    %v363 = vmul.f32 %v282, %v351
    %v364 = vmul.f32 %v286, %v351
    %v365 = vmul.f32 %v290, %v346
    %v366 = vmul.f32 %v294, %v346
    %v367 = vmul.f32 %v290, %v351
    %v368 = vmul.f32 %v294, %v351
    %v369 = vmul.f32 %v298, %v346
    %v370 = vmul.f32 %v302, %v346
    %v371 = vmul.f32 %v298, %v351
    %v372 = vmul.f32 %v302, %v351
    %v373 = vmul.f32 %v306, %v346
    %v374 = vmul.f32 %v310, %v346
    %v375 = vmul.f32 %v306, %v351
    %v376 = vmul.f32 %v310, %v351
    %v377 = vmul.f32 %v314, %v346
    %v378 = vmul.f32 %v318, %v346
    %v379 = vmul.f32 %v314, %v351
    %v380 = vmul.f32 %v318, %v351
    %v381 = vmul.f32 %v322, %v346
    %v382 = vmul.f32 %v326, %v346
    %v383 = vmul.f32 %v322, %v351
    %v384 = vmul.f32 %v326, %v351
    %v385 = vadd.f32 %v202, %v353
    %v386 = vadd.f32 %v202, %v354
    %v387 = vadd.f32 %v207, %v355
    %v388 = vadd.f32 %v207, %v356
    %v389 = vadd.f32 %v202, %v357
    %v390 = vadd.f32 %v202, %v358
    %v391 = vadd.f32 %v207, %v359
    %v392 = vadd.f32 %v207, %v360
    %v393 = vadd.f32 %v202, %v361
    %v394 = vadd.f32 %v202, %v362
    %v395 = vadd.f32 %v207, %v363
    %v396 = vadd.f32 %v207, %v364
    %v397 = vadd.f32 %v202, %v365
    %v398 = vadd.f32 %v202, %v366
    %v399 = vadd.f32 %v207, %v367
    %v400 = vadd.f32 %v207, %v368
    %v401 = vadd.f32 %v202, %v369
    %v402 = vadd.f32 %v202, %v370
    %v403 = vadd.f32 %v207, %v371
    %v404 = vadd.f32 %v207, %v372
    %v405 = vadd.f32 %v202, %v373
    %v406 = vadd.f32 %v202, %v374
    %v407 = vadd.f32 %v207, %v375
    %v408 = vadd.f32 %v207, %v376
    %v409 = vadd.f32 %v202, %v377
    %v410 = vadd.f32 %v202, %v378
    %v411 = vadd.f32 %v207, %v379
    %v412 = vadd.f32 %v207, %v380
    %v413 = vadd.f32 %v202, %v381
    %v414 = vadd.f32 %v202, %v382
    %v415 = vadd.f32 %v207, %v383
    %v416 = vadd.f32 %v207, %v384
    %s417 = scalar_lea.vmem %s0, 16
    %v418 = vld [vmem:[%s417] sm:$0xff]
    %v419 = vld [vmem:[%s417 + $0x8] sm:$0xff]
    %v422 = vcombine.low %v418, %v419
    %v423 = vcombine.high %v418, %v419
    %v425 = vunpack.c.l.s4 1966171168
    %v426 = vunpack.c.0.s8 %v425
    %v427 = vlaneseq
    %v428 = vshrl.u32 %v427, 7
    %v429 = vsub.s32 %v426, %v428
    %v430 = vrot.slane %v422, %v429
    %v432 = vunpack.c.l.s4 1966171168
    %v433 = vunpack.c.0.s8 %v432
    %v434 = vlaneseq
    %v435 = vshrl.u32 %v434, 7
    %v436 = vsub.s32 %v433, %v435
    %v437 = vrot.slane %v423, %v436
    %v438 = vcombine.high %v430, %v430
    %v439 = vcombine.high %v437, %v437
    %v441 = vunpack.c.l.s4 1966171168
    %v442 = vunpack.c.0.s8 %v441
    %v443 = vlaneseq
    %v444 = vshrl.u32 %v443, 7
    %v445 = vsub.s32 %v442, %v444
    %v446 = vrot.slane %v430, %v445
    %v448 = vunpack.c.l.s4 1966171168
    %v449 = vunpack.c.0.s8 %v448
    %v450 = vlaneseq
    %v451 = vshrl.u32 %v450, 7
    %v452 = vsub.s32 %v449, %v451
    %v453 = vrot.slane %v437, %v452
    %v455 = vunpack.c.l.s4 1966171168
    %v456 = vunpack.c.0.s8 %v455
    %v457 = vlaneseq
    %v458 = vshrl.u32 %v457, 7
    %v459 = vsub.s32 %v456, %v458
    %v460 = vrot.slane %v438, %v459
    %v462 = vunpack.c.l.s4 1966171168
    %v463 = vunpack.c.0.s8 %v462
    %v464 = vlaneseq
    %v465 = vshrl.u32 %v464, 7
    %v466 = vsub.s32 %v463, %v465
    %v467 = vrot.slane %v439, %v466
    %v468 = vcombine.high %v446, %v446
    %v469 = vcombine.high %v453, %v453
    %v470 = vcombine.high %v460, %v460
    %v471 = vcombine.high %v467, %v467
    %v472 = vlaneseq
    %v473 = vshrl.u32 %v472, 7
    %v474 = vsub.s32 0, %v473
    %v475 = vrot.slane %v446, %v474
    %v476 = vlaneseq
    %v477 = vshrl.u32 %v476, 7
    %v478 = vsub.s32 1, %v477
    %v479 = vrot.slane %v446, %v478
    %v480 = vlaneseq
    %v481 = vshrl.u32 %v480, 7
    %v482 = vsub.s32 0, %v481
    %v483 = vrot.slane %v460, %v482
    %v484 = vlaneseq
    %v485 = vshrl.u32 %v484, 7
    %v486 = vsub.s32 1, %v485
    %v487 = vrot.slane %v460, %v486
    %v488 = vlaneseq
    %v489 = vshrl.u32 %v488, 7
    %v490 = vsub.s32 0, %v489
    %v491 = vrot.slane %v468, %v490
    %v492 = vlaneseq
    %v493 = vshrl.u32 %v492, 7
    %v494 = vsub.s32 1, %v493
    %v495 = vrot.slane %v468, %v494
    %v496 = vlaneseq
    %v497 = vshrl.u32 %v496, 7
    %v498 = vsub.s32 0, %v497
    %v499 = vrot.slane %v470, %v498
    %v500 = vlaneseq
    %v501 = vshrl.u32 %v500, 7
    %v502 = vsub.s32 1, %v501
    %v503 = vrot.slane %v470, %v502
    %v504 = vlaneseq
    %v505 = vshrl.u32 %v504, 7
    %v506 = vsub.s32 0, %v505
    %v507 = vrot.slane %v453, %v506
    %v508 = vlaneseq
    %v509 = vshrl.u32 %v508, 7
    %v510 = vsub.s32 1, %v509
    %v511 = vrot.slane %v453, %v510
    %v512 = vlaneseq
    %v513 = vshrl.u32 %v512, 7
    %v514 = vsub.s32 0, %v513
    %v515 = vrot.slane %v467, %v514
    %v516 = vlaneseq
    %v517 = vshrl.u32 %v516, 7
    %v518 = vsub.s32 1, %v517
    %v519 = vrot.slane %v467, %v518
    %v520 = vlaneseq
    %v521 = vshrl.u32 %v520, 7
    %v522 = vsub.s32 0, %v521
    %v523 = vrot.slane %v469, %v522
    %v524 = vlaneseq
    %v525 = vshrl.u32 %v524, 7
    %v526 = vsub.s32 1, %v525
    %v527 = vrot.slane %v469, %v526
    %v528 = vlaneseq
    %v529 = vshrl.u32 %v528, 7
    %v530 = vsub.s32 0, %v529
    %v531 = vrot.slane %v471, %v530
    %v532 = vlaneseq
    %v533 = vshrl.u32 %v532, 7
    %v534 = vsub.s32 1, %v533
    %v535 = vrot.slane %v471, %v534
    %552 = vset.pattern.permute.xlu0 1
    %553 = vperm.xlu0 %552, %v29
    %v554 = vpop.permute.xlu0 %553
    %556 = vset.pattern.permute.xlu0 1
    %557 = vperm.xlu0 %556, %v30
    %v558 = vpop.permute.xlu0 %557
    %v560 = vmul.f32 %v475, %v554
    %v561 = vmul.f32 %v479, %v554
    %v562 = vmul.f32 %v475, %v558
    %v563 = vmul.f32 %v479, %v558
    %v564 = vmul.f32 %v483, %v554
    %v565 = vmul.f32 %v487, %v554
    %v566 = vmul.f32 %v483, %v558
    %v567 = vmul.f32 %v487, %v558
    %v568 = vmul.f32 %v491, %v554
    %v569 = vmul.f32 %v495, %v554
    %v570 = vmul.f32 %v491, %v558
    %v571 = vmul.f32 %v495, %v558
    %v572 = vmul.f32 %v499, %v554
    %v573 = vmul.f32 %v503, %v554
    %v574 = vmul.f32 %v499, %v558
    %v575 = vmul.f32 %v503, %v558
    %v576 = vmul.f32 %v507, %v554
    %v577 = vmul.f32 %v511, %v554
    %v578 = vmul.f32 %v507, %v558
    %v579 = vmul.f32 %v511, %v558
    %v580 = vmul.f32 %v515, %v554
    %v581 = vmul.f32 %v519, %v554
    %v582 = vmul.f32 %v515, %v558
    %v583 = vmul.f32 %v519, %v558
    %v584 = vmul.f32 %v523, %v554
    %v585 = vmul.f32 %v527, %v554
    %v586 = vmul.f32 %v523, %v558
    %v587 = vmul.f32 %v527, %v558
    %v588 = vmul.f32 %v531, %v554
    %v589 = vmul.f32 %v535, %v554
    %v590 = vmul.f32 %v531, %v558
    %v591 = vmul.f32 %v535, %v558
    %v592 = vadd.f32 %v385, %v560
    %v593 = vadd.f32 %v386, %v561
    %v594 = vadd.f32 %v387, %v562
    %v595 = vadd.f32 %v388, %v563
    %v596 = vadd.f32 %v389, %v564
    %v597 = vadd.f32 %v390, %v565
    %v598 = vadd.f32 %v391, %v566
    %v599 = vadd.f32 %v392, %v567
    %v600 = vadd.f32 %v393, %v568
    %v601 = vadd.f32 %v394, %v569
    %v602 = vadd.f32 %v395, %v570
    %v603 = vadd.f32 %v396, %v571
    %v604 = vadd.f32 %v397, %v572
    %v605 = vadd.f32 %v398, %v573
    %v606 = vadd.f32 %v399, %v574
    %v607 = vadd.f32 %v400, %v575
    %v608 = vadd.f32 %v401, %v576
    %v609 = vadd.f32 %v402, %v577
    %v610 = vadd.f32 %v403, %v578
    %v611 = vadd.f32 %v404, %v579
    %v612 = vadd.f32 %v405, %v580
    %v613 = vadd.f32 %v406, %v581
    %v614 = vadd.f32 %v407, %v582
    %v615 = vadd.f32 %v408, %v583
    %v616 = vadd.f32 %v409, %v584
    %v617 = vadd.f32 %v410, %v585
    %v618 = vadd.f32 %v411, %v586
    %v619 = vadd.f32 %v412, %v587
    %v620 = vadd.f32 %v413, %v588
    %v621 = vadd.f32 %v414, %v589
    %v622 = vadd.f32 %v415, %v590
    %v623 = vadd.f32 %v416, %v591
    %s624 = scalar_lea.vmem %s0, 32
    %v625 = vld [vmem:[%s624] sm:$0xff]
    %v626 = vld [vmem:[%s624 + $0x8] sm:$0xff]
    %v629 = vcombine.low %v625, %v626
    %v630 = vcombine.high %v625, %v626
    %v632 = vunpack.c.l.s4 1966171168
    %v633 = vunpack.c.0.s8 %v632
    %v634 = vlaneseq
    %v635 = vshrl.u32 %v634, 7
    %v636 = vsub.s32 %v633, %v635
    %v637 = vrot.slane %v629, %v636
    %v639 = vunpack.c.l.s4 1966171168
    %v640 = vunpack.c.0.s8 %v639
    %v641 = vlaneseq
    %v642 = vshrl.u32 %v641, 7
    %v643 = vsub.s32 %v640, %v642
    %v644 = vrot.slane %v630, %v643
    %v645 = vcombine.high %v637, %v637
    %v646 = vcombine.high %v644, %v644
    %v648 = vunpack.c.l.s4 1966171168
    %v649 = vunpack.c.0.s8 %v648
    %v650 = vlaneseq
    %v651 = vshrl.u32 %v650, 7
    %v652 = vsub.s32 %v649, %v651
    %v653 = vrot.slane %v637, %v652
    %v655 = vunpack.c.l.s4 1966171168
    %v656 = vunpack.c.0.s8 %v655
    %v657 = vlaneseq
    %v658 = vshrl.u32 %v657, 7
    %v659 = vsub.s32 %v656, %v658
    %v660 = vrot.slane %v644, %v659
    %v662 = vunpack.c.l.s4 1966171168
    %v663 = vunpack.c.0.s8 %v662
    %v664 = vlaneseq
    %v665 = vshrl.u32 %v664, 7
    %v666 = vsub.s32 %v663, %v665
    %v667 = vrot.slane %v645, %v666
    %v669 = vunpack.c.l.s4 1966171168
    %v670 = vunpack.c.0.s8 %v669
    %v671 = vlaneseq
    %v672 = vshrl.u32 %v671, 7
    %v673 = vsub.s32 %v670, %v672
    %v674 = vrot.slane %v646, %v673
    %v675 = vcombine.high %v653, %v653
    %v676 = vcombine.high %v660, %v660
    %v677 = vcombine.high %v667, %v667
    %v678 = vcombine.high %v674, %v674
    %v679 = vlaneseq
    %v680 = vshrl.u32 %v679, 7
    %v681 = vsub.s32 0, %v680
    %v682 = vrot.slane %v653, %v681
    %v683 = vlaneseq
    %v684 = vshrl.u32 %v683, 7
    %v685 = vsub.s32 1, %v684
    %v686 = vrot.slane %v653, %v685
    %v687 = vlaneseq
    %v688 = vshrl.u32 %v687, 7
    %v689 = vsub.s32 0, %v688
    %v690 = vrot.slane %v667, %v689
    %v691 = vlaneseq
    %v692 = vshrl.u32 %v691, 7
    %v693 = vsub.s32 1, %v692
    %v694 = vrot.slane %v667, %v693
    %v695 = vlaneseq
    %v696 = vshrl.u32 %v695, 7
    %v697 = vsub.s32 0, %v696
    %v698 = vrot.slane %v675, %v697
    %v699 = vlaneseq
    %v700 = vshrl.u32 %v699, 7
    %v701 = vsub.s32 1, %v700
    %v702 = vrot.slane %v675, %v701
    %v703 = vlaneseq
    %v704 = vshrl.u32 %v703, 7
    %v705 = vsub.s32 0, %v704
    %v706 = vrot.slane %v677, %v705
    %v707 = vlaneseq
    %v708 = vshrl.u32 %v707, 7
    %v709 = vsub.s32 1, %v708
    %v710 = vrot.slane %v677, %v709
    %v711 = vlaneseq
    %v712 = vshrl.u32 %v711, 7
    %v713 = vsub.s32 0, %v712
    %v714 = vrot.slane %v660, %v713
    %v715 = vlaneseq
    %v716 = vshrl.u32 %v715, 7
    %v717 = vsub.s32 1, %v716
    %v718 = vrot.slane %v660, %v717
    %v719 = vlaneseq
    %v720 = vshrl.u32 %v719, 7
    %v721 = vsub.s32 0, %v720
    %v722 = vrot.slane %v674, %v721
    %v723 = vlaneseq
    %v724 = vshrl.u32 %v723, 7
    %v725 = vsub.s32 1, %v724
    %v726 = vrot.slane %v674, %v725
    %v727 = vlaneseq
    %v728 = vshrl.u32 %v727, 7
    %v729 = vsub.s32 0, %v728
    %v730 = vrot.slane %v676, %v729
    %v731 = vlaneseq
    %v732 = vshrl.u32 %v731, 7
    %v733 = vsub.s32 1, %v732
    %v734 = vrot.slane %v676, %v733
    %v735 = vlaneseq
    %v736 = vshrl.u32 %v735, 7
    %v737 = vsub.s32 0, %v736
    %v738 = vrot.slane %v678, %v737
    %v739 = vlaneseq
    %v740 = vshrl.u32 %v739, 7
    %v741 = vsub.s32 1, %v740
    %v742 = vrot.slane %v678, %v741
    %759 = vset.pattern.permute.xlu0 2
    %760 = vperm.xlu0 %759, %v29
    %v761 = vpop.permute.xlu0 %760
    %763 = vset.pattern.permute.xlu0 2
    %764 = vperm.xlu0 %763, %v30
    %v765 = vpop.permute.xlu0 %764
    %v767 = vmul.f32 %v682, %v761
    %v768 = vmul.f32 %v686, %v761
    %v769 = vmul.f32 %v682, %v765
    %v770 = vmul.f32 %v686, %v765
    %v771 = vmul.f32 %v690, %v761
    %v772 = vmul.f32 %v694, %v761
    %v773 = vmul.f32 %v690, %v765
    %v774 = vmul.f32 %v694, %v765
    %v775 = vmul.f32 %v698, %v761
    %v776 = vmul.f32 %v702, %v761
    %v777 = vmul.f32 %v698, %v765
    %v778 = vmul.f32 %v702, %v765
    %v779 = vmul.f32 %v706, %v761
    %v780 = vmul.f32 %v710, %v761
    %v781 = vmul.f32 %v706, %v765
    %v782 = vmul.f32 %v710, %v765
    %v783 = vmul.f32 %v714, %v761
    %v784 = vmul.f32 %v718, %v761
    %v785 = vmul.f32 %v714, %v765
    %v786 = vmul.f32 %v718, %v765
    %v787 = vmul.f32 %v722, %v761
    %v788 = vmul.f32 %v726, %v761
    %v789 = vmul.f32 %v722, %v765
    %v790 = vmul.f32 %v726, %v765
    %v791 = vmul.f32 %v730, %v761
    %v792 = vmul.f32 %v734, %v761
    %v793 = vmul.f32 %v730, %v765
    %v794 = vmul.f32 %v734, %v765
    %v795 = vmul.f32 %v738, %v761
    %v796 = vmul.f32 %v742, %v761
    %v797 = vmul.f32 %v738, %v765
    %v798 = vmul.f32 %v742, %v765
    %v799 = vadd.f32 %v592, %v767
    %v800 = vadd.f32 %v593, %v768
    %v801 = vadd.f32 %v594, %v769
    %v802 = vadd.f32 %v595, %v770
    %v803 = vadd.f32 %v596, %v771
    %v804 = vadd.f32 %v597, %v772
    %v805 = vadd.f32 %v598, %v773
    %v806 = vadd.f32 %v599, %v774
    %v807 = vadd.f32 %v600, %v775
    %v808 = vadd.f32 %v601, %v776
    %v809 = vadd.f32 %v602, %v777
    %v810 = vadd.f32 %v603, %v778
    %v811 = vadd.f32 %v604, %v779
    %v812 = vadd.f32 %v605, %v780
    %v813 = vadd.f32 %v606, %v781
    %v814 = vadd.f32 %v607, %v782
    %v815 = vadd.f32 %v608, %v783
    %v816 = vadd.f32 %v609, %v784
    %v817 = vadd.f32 %v610, %v785
    %v818 = vadd.f32 %v611, %v786
    %v819 = vadd.f32 %v612, %v787
    %v820 = vadd.f32 %v613, %v788
    %v821 = vadd.f32 %v614, %v789
    %v822 = vadd.f32 %v615, %v790
    %v823 = vadd.f32 %v616, %v791
    %v824 = vadd.f32 %v617, %v792
    %v825 = vadd.f32 %v618, %v793
    %v826 = vadd.f32 %v619, %v794
    %v827 = vadd.f32 %v620, %v795
    %v828 = vadd.f32 %v621, %v796
    %v829 = vadd.f32 %v622, %v797
    %v830 = vadd.f32 %v623, %v798
    %s831 = scalar_lea.vmem %s0, 48
    %v832 = vld [vmem:[%s831] sm:$0xff]
    %v833 = vld [vmem:[%s831 + $0x8] sm:$0xff]
    %v836 = vcombine.low %v832, %v833
    %v837 = vcombine.high %v832, %v833
    %v839 = vunpack.c.l.s4 1966171168
    %v840 = vunpack.c.0.s8 %v839
    %v841 = vlaneseq
    %v842 = vshrl.u32 %v841, 7
    %v843 = vsub.s32 %v840, %v842
    %v844 = vrot.slane %v836, %v843
    %v846 = vunpack.c.l.s4 1966171168
    %v847 = vunpack.c.0.s8 %v846
    %v848 = vlaneseq
    %v849 = vshrl.u32 %v848, 7
    %v850 = vsub.s32 %v847, %v849
    %v851 = vrot.slane %v837, %v850
    %v852 = vcombine.high %v844, %v844
    %v853 = vcombine.high %v851, %v851
    %v855 = vunpack.c.l.s4 1966171168
    %v856 = vunpack.c.0.s8 %v855
    %v857 = vlaneseq
    %v858 = vshrl.u32 %v857, 7
    %v859 = vsub.s32 %v856, %v858
    %v860 = vrot.slane %v844, %v859
    %v862 = vunpack.c.l.s4 1966171168
    %v863 = vunpack.c.0.s8 %v862
    %v864 = vlaneseq
    %v865 = vshrl.u32 %v864, 7
    %v866 = vsub.s32 %v863, %v865
    %v867 = vrot.slane %v851, %v866
    %v869 = vunpack.c.l.s4 1966171168
    %v870 = vunpack.c.0.s8 %v869
    %v871 = vlaneseq
    %v872 = vshrl.u32 %v871, 7
    %v873 = vsub.s32 %v870, %v872
    %v874 = vrot.slane %v852, %v873
    %v876 = vunpack.c.l.s4 1966171168
    %v877 = vunpack.c.0.s8 %v876
    %v878 = vlaneseq
    %v879 = vshrl.u32 %v878, 7
    %v880 = vsub.s32 %v877, %v879
    %v881 = vrot.slane %v853, %v880
    %v882 = vcombine.high %v860, %v860
    %v883 = vcombine.high %v867, %v867
    %v884 = vcombine.high %v874, %v874
    %v885 = vcombine.high %v881, %v881
    %v886 = vlaneseq
    %v887 = vshrl.u32 %v886, 7
    %v888 = vsub.s32 0, %v887
    %v889 = vrot.slane %v860, %v888
    %v890 = vlaneseq
    %v891 = vshrl.u32 %v890, 7
    %v892 = vsub.s32 1, %v891
    %v893 = vrot.slane %v860, %v892
    %v894 = vlaneseq
    %v895 = vshrl.u32 %v894, 7
    %v896 = vsub.s32 0, %v895
    %v897 = vrot.slane %v874, %v896
    %v898 = vlaneseq
    %v899 = vshrl.u32 %v898, 7
    %v900 = vsub.s32 1, %v899
    %v901 = vrot.slane %v874, %v900
    %v902 = vlaneseq
    %v903 = vshrl.u32 %v902, 7
    %v904 = vsub.s32 0, %v903
    %v905 = vrot.slane %v882, %v904
    %v906 = vlaneseq
    %v907 = vshrl.u32 %v906, 7
    %v908 = vsub.s32 1, %v907
    %v909 = vrot.slane %v882, %v908
    %v910 = vlaneseq
    %v911 = vshrl.u32 %v910, 7
    %v912 = vsub.s32 0, %v911
    %v913 = vrot.slane %v884, %v912
    %v914 = vlaneseq
    %v915 = vshrl.u32 %v914, 7
    %v916 = vsub.s32 1, %v915
    %v917 = vrot.slane %v884, %v916
    %v918 = vlaneseq
    %v919 = vshrl.u32 %v918, 7
    %v920 = vsub.s32 0, %v919
    %v921 = vrot.slane %v867, %v920
    %v922 = vlaneseq
    %v923 = vshrl.u32 %v922, 7
    %v924 = vsub.s32 1, %v923
    %v925 = vrot.slane %v867, %v924
    %v926 = vlaneseq
    %v927 = vshrl.u32 %v926, 7
    %v928 = vsub.s32 0, %v927
    %v929 = vrot.slane %v881, %v928
    %v930 = vlaneseq
    %v931 = vshrl.u32 %v930, 7
    %v932 = vsub.s32 1, %v931
    %v933 = vrot.slane %v881, %v932
    %v934 = vlaneseq
    %v935 = vshrl.u32 %v934, 7
    %v936 = vsub.s32 0, %v935
    %v937 = vrot.slane %v883, %v936
    %v938 = vlaneseq
    %v939 = vshrl.u32 %v938, 7
    %v940 = vsub.s32 1, %v939
    %v941 = vrot.slane %v883, %v940
    %v942 = vlaneseq
    %v943 = vshrl.u32 %v942, 7
    %v944 = vsub.s32 0, %v943
    %v945 = vrot.slane %v885, %v944
    %v946 = vlaneseq
    %v947 = vshrl.u32 %v946, 7
    %v948 = vsub.s32 1, %v947
    %v949 = vrot.slane %v885, %v948
    %966 = vset.pattern.permute.xlu0 3
    %967 = vperm.xlu0 %966, %v29
    %v968 = vpop.permute.xlu0 %967
    %970 = vset.pattern.permute.xlu0 3
    %971 = vperm.xlu0 %970, %v30
    %v972 = vpop.permute.xlu0 %971
    %v974 = vmul.f32 %v889, %v968
    %v975 = vmul.f32 %v893, %v968
    %v976 = vmul.f32 %v889, %v972
    %v977 = vmul.f32 %v893, %v972
    %v978 = vmul.f32 %v897, %v968
    %v979 = vmul.f32 %v901, %v968
    %v980 = vmul.f32 %v897, %v972
    %v981 = vmul.f32 %v901, %v972
    %v982 = vmul.f32 %v905, %v968
    %v983 = vmul.f32 %v909, %v968
    %v984 = vmul.f32 %v905, %v972
    %v985 = vmul.f32 %v909, %v972
    %v986 = vmul.f32 %v913, %v968
    %v987 = vmul.f32 %v917, %v968
    %v988 = vmul.f32 %v913, %v972
    %v989 = vmul.f32 %v917, %v972
    %v990 = vmul.f32 %v921, %v968
    %v991 = vmul.f32 %v925, %v968
    %v992 = vmul.f32 %v921, %v972
    %v993 = vmul.f32 %v925, %v972
    %v994 = vmul.f32 %v929, %v968
    %v995 = vmul.f32 %v933, %v968
    %v996 = vmul.f32 %v929, %v972
    %v997 = vmul.f32 %v933, %v972
    %v998 = vmul.f32 %v937, %v968
    %v999 = vmul.f32 %v941, %v968
    %v1000 = vmul.f32 %v937, %v972
    %v1001 = vmul.f32 %v941, %v972
    %v1002 = vmul.f32 %v945, %v968
    %v1003 = vmul.f32 %v949, %v968
    %v1004 = vmul.f32 %v945, %v972
    %v1005 = vmul.f32 %v949, %v972
    %v1006 = vadd.f32 %v799, %v974
    %v1007 = vadd.f32 %v800, %v975
    %v1008 = vadd.f32 %v801, %v976
    %v1009 = vadd.f32 %v802, %v977
    %v1010 = vadd.f32 %v803, %v978
    %v1011 = vadd.f32 %v804, %v979
    %v1012 = vadd.f32 %v805, %v980
    %v1013 = vadd.f32 %v806, %v981
    %v1014 = vadd.f32 %v807, %v982
    %v1015 = vadd.f32 %v808, %v983
    %v1016 = vadd.f32 %v809, %v984
    %v1017 = vadd.f32 %v810, %v985
    %v1018 = vadd.f32 %v811, %v986
    %v1019 = vadd.f32 %v812, %v987
    %v1020 = vadd.f32 %v813, %v988
    %v1021 = vadd.f32 %v814, %v989
    %v1022 = vadd.f32 %v815, %v990
    %v1023 = vadd.f32 %v816, %v991
    %v1024 = vadd.f32 %v817, %v992
    %v1025 = vadd.f32 %v818, %v993
    %v1026 = vadd.f32 %v819, %v994
    %v1027 = vadd.f32 %v820, %v995
    %v1028 = vadd.f32 %v821, %v996
    %v1029 = vadd.f32 %v822, %v997
    %v1030 = vadd.f32 %v823, %v998
    %v1031 = vadd.f32 %v824, %v999
    %v1032 = vadd.f32 %v825, %v1000
    %v1033 = vadd.f32 %v826, %v1001
    %v1034 = vadd.f32 %v827, %v1002
    %v1035 = vadd.f32 %v828, %v1003
    %v1036 = vadd.f32 %v829, %v1004
    %v1037 = vadd.f32 %v830, %v1005
    %v1038 = vmax.f32 %v1006, 0.0
    %v1039 = vmax.f32 %v1007, 0.0
    %v1040 = vmax.f32 %v1008, 0.0
    %v1041 = vmax.f32 %v1009, 0.0
    %v1042 = vmax.f32 %v1010, 0.0
    %v1043 = vmax.f32 %v1011, 0.0
    %v1044 = vmax.f32 %v1012, 0.0
    %v1045 = vmax.f32 %v1013, 0.0
    %v1046 = vmax.f32 %v1014, 0.0
    %v1047 = vmax.f32 %v1015, 0.0
    %v1048 = vmax.f32 %v1016, 0.0
    %v1049 = vmax.f32 %v1017, 0.0
    %v1050 = vmax.f32 %v1018, 0.0
    %v1051 = vmax.f32 %v1019, 0.0
    %v1052 = vmax.f32 %v1020, 0.0
    %v1053 = vmax.f32 %v1021, 0.0
    %v1054 = vmax.f32 %v1022, 0.0
    %v1055 = vmax.f32 %v1023, 0.0
    %v1056 = vmax.f32 %v1024, 0.0
    %v1057 = vmax.f32 %v1025, 0.0
    %v1058 = vmax.f32 %v1026, 0.0
    %v1059 = vmax.f32 %v1027, 0.0
    %v1060 = vmax.f32 %v1028, 0.0
    %v1061 = vmax.f32 %v1029, 0.0
    %v1062 = vmax.f32 %v1030, 0.0
    %v1063 = vmax.f32 %v1031, 0.0
    %v1064 = vmax.f32 %v1032, 0.0
    %v1065 = vmax.f32 %v1033, 0.0
    %v1066 = vmax.f32 %v1034, 0.0
    %v1067 = vmax.f32 %v1035, 0.0
    %v1068 = vmax.f32 %v1036, 0.0
    %v1069 = vmax.f32 %v1037, 0.0
    %v1070 = vadd.f32 %v1038, %v1039
    %1071 = vadd.xlane.f32.xlu0 %v1070
    %v1072 = vpop.xlane.xlu0 %1071
    %v1073 = vadd.f32 %v1040, %v1041
    %1074 = vadd.xlane.f32.xlu0 %v1073
    %v1075 = vpop.xlane.xlu0 %1074
    %v1076 = vadd.f32 %v1042, %v1043
    %1077 = vadd.xlane.f32.xlu0 %v1076
    %v1078 = vpop.xlane.xlu0 %1077
    %v1079 = vadd.f32 %v1044, %v1045
    %1080 = vadd.xlane.f32.xlu0 %v1079
    %v1081 = vpop.xlane.xlu0 %1080
    %v1082 = vadd.f32 %v1046, %v1047
    %1083 = vadd.xlane.f32.xlu0 %v1082
    %v1084 = vpop.xlane.xlu0 %1083
    %v1085 = vadd.f32 %v1048, %v1049
    %1086 = vadd.xlane.f32.xlu0 %v1085
    %v1087 = vpop.xlane.xlu0 %1086
    %v1088 = vadd.f32 %v1050, %v1051
    %1089 = vadd.xlane.f32.xlu0 %v1088
    %v1090 = vpop.xlane.xlu0 %1089
    %v1091 = vadd.f32 %v1052, %v1053
    %1092 = vadd.xlane.f32.xlu0 %v1091
    %v1093 = vpop.xlane.xlu0 %1092
    %v1094 = vadd.f32 %v1054, %v1055
    %1095 = vadd.xlane.f32.xlu0 %v1094
    %v1096 = vpop.xlane.xlu0 %1095
    %v1097 = vadd.f32 %v1056, %v1057
    %1098 = vadd.xlane.f32.xlu0 %v1097
    %v1099 = vpop.xlane.xlu0 %1098
    %v1100 = vadd.f32 %v1058, %v1059
    %1101 = vadd.xlane.f32.xlu0 %v1100
    %v1102 = vpop.xlane.xlu0 %1101
    %v1103 = vadd.f32 %v1060, %v1061
    %1104 = vadd.xlane.f32.xlu0 %v1103
    %v1105 = vpop.xlane.xlu0 %1104
    %v1106 = vadd.f32 %v1062, %v1063
    %1107 = vadd.xlane.f32.xlu0 %v1106
    %v1108 = vpop.xlane.xlu0 %1107
    %v1109 = vadd.f32 %v1064, %v1065
    %1110 = vadd.xlane.f32.xlu0 %v1109
    %v1111 = vpop.xlane.xlu0 %1110
    %v1112 = vadd.f32 %v1066, %v1067
    %1113 = vadd.xlane.f32.xlu0 %v1112
    %v1114 = vpop.xlane.xlu0 %1113
    %v1115 = vadd.f32 %v1068, %v1069
    %1116 = vadd.xlane.f32.xlu0 %v1115
    %v1117 = vpop.xlane.xlu0 %1116
    %v1118 = vmul.f32 %v1072, 0.00390625
    %v1119 = vmul.f32 %v1075, 0.00390625
    %v1120 = vmul.f32 %v1078, 0.00390625
    %v1121 = vmul.f32 %v1081, 0.00390625
    %v1122 = vmul.f32 %v1084, 0.00390625
    %v1123 = vmul.f32 %v1087, 0.00390625
    %v1124 = vmul.f32 %v1090, 0.00390625
    %v1125 = vmul.f32 %v1093, 0.00390625
    %v1126 = vmul.f32 %v1096, 0.00390625
    %v1127 = vmul.f32 %v1099, 0.00390625
    %v1128 = vmul.f32 %v1102, 0.00390625
    %v1129 = vmul.f32 %v1105, 0.00390625
    %v1130 = vmul.f32 %v1108, 0.00390625
    %v1131 = vmul.f32 %v1111, 0.00390625
    %v1132 = vmul.f32 %v1114, 0.00390625
    %v1133 = vmul.f32 %v1117, 0.00390625
    %v1134 = vld [vmem:[#allocation2] sm:$0xff]
    %v1135 = vmul.f32 %v37, 0.0
    %v1136 = vmul.f32 %v38, 0.0
    %v1137 = vmul.f32 %v39, 0.0
    %v1138 = vmul.f32 %v40, 0.0
    %v1139 = vsel %vm61, %v1135, 0.0
    %1140 = vadd.xlane.f32.xlu0 %v1139
    %v1141 = vpop.xlane.xlu0 %1140
    %v1142 = vsel %vm61, %v1136, 0.0
    %1143 = vadd.xlane.f32.xlu0 %v1142
    %v1144 = vpop.xlane.xlu0 %1143
    %v1145 = vsel %vm61, %v1137, 0.0
    %1146 = vadd.xlane.f32.xlu0 %v1145
    %v1147 = vpop.xlane.xlu0 %1146
    %v1148 = vsel %vm61, %v1138, 0.0
    %1149 = vadd.xlane.f32.xlu0 %v1148
    %v1150 = vpop.xlane.xlu0 %1149
    %v1155 = vlaneseq
    %v1156 = vand.u32 %v1155, 127
    %v1157 = vlaneseq
    %v1158 = vshrl.u32 %v1157, 7
    %v1159 = vsub.s32 %v1156, %v1158
    %v1160 = vrot.slane %v1141, %v1159
    %v1161 = vadd.s32 %v1156, 4294967288
    %v1162 = vlaneseq
    %v1163 = vshrl.u32 %v1162, 7
    %v1164 = vsub.s32 %v1161, %v1163
    %v1165 = vrot.slane %v1144, %v1164
    %vm1166 = vcmask 130112
    %v1167 = vsel %vm1166, %v1165, %v1160
    %v1168 = vadd.s32 %v1156, 4294967280
    %v1169 = vlaneseq
    %v1170 = vshrl.u32 %v1169, 7
    %v1171 = vsub.s32 %v1168, %v1170
    %v1172 = vrot.slane %v1147, %v1171
    %vm1173 = vcmask 195712
    %v1174 = vsel %vm1173, %v1172, %v1167
    %v1175 = vadd.s32 %v1156, 4294967272
    %v1176 = vlaneseq
    %v1177 = vshrl.u32 %v1176, 7
    %v1178 = vsub.s32 %v1175, %v1177
    %v1179 = vrot.slane %v1150, %v1178
    %vm1180 = vcmask 261312
    %v1181 = vsel %vm1180, %v1179, %v1174
    %vm1182 = vcmask 1041409
    %vm1183 = vcmask 1042434
    %v1184 = vsel %vm1183, %v1181, %v1181
    %vm1185 = vcmask 1043459
    %v1186 = vsel %vm1185, %v1181, %v1184
    %vm1187 = vcmask 1044484
    %v1188 = vsel %vm1187, %v1181, %v1186
    %vm1189 = vcmask 1045509
    %v1190 = vsel %vm1189, %v1181, %v1188
    %vm1191 = vcmask 1046534
    %v1192 = vsel %vm1191, %v1181, %v1190
    %vm1193 = vcmask 1047559
    %v1194 = vsel %vm1193, %v1181, %v1192
    %v1196 = vadd.f32 %v1134, %v1194
    %v1197 = vtanh.pop %v1196
    %s1198 = scalar_lea.vmem [#allocation2], 8
    %v1199 = vld [vmem:[%s1198] sm:$0xff]
    %v1201 = vcombine.high %v1197, %v1197
    %v1203 = vunpack.c.l.s4 1966171168
    %v1204 = vunpack.c.0.s8 %v1203
    %v1205 = vlaneseq
    %v1206 = vshrl.u32 %v1205, 7
    %v1207 = vsub.s32 %v1204, %v1206
    %v1208 = vrot.slane %v1197, %v1207
    %v1210 = vunpack.c.l.s4 1966171168
    %v1211 = vunpack.c.0.s8 %v1210
    %v1212 = vlaneseq
    %v1213 = vshrl.u32 %v1212, 7
    %v1214 = vsub.s32 %v1211, %v1213
    %v1215 = vrot.slane %v1201, %v1214
    %v1216 = vcombine.high %v1208, %v1208
    %v1217 = vcombine.high %v1215, %v1215
    %v1219 = vunpack.c.l.s4 1966171168
    %v1220 = vunpack.c.0.s8 %v1219
    %v1221 = vlaneseq
    %v1222 = vshrl.u32 %v1221, 7
    %v1223 = vsub.s32 %v1220, %v1222
    %v1224 = vrot.slane %v1208, %v1223
    %v1226 = vunpack.c.l.s4 1966171168
    %v1227 = vunpack.c.0.s8 %v1226
    %v1228 = vlaneseq
    %v1229 = vshrl.u32 %v1228, 7
    %v1230 = vsub.s32 %v1227, %v1229
    %v1231 = vrot.slane %v1215, %v1230
    %v1233 = vunpack.c.l.s4 1966171168
    %v1234 = vunpack.c.0.s8 %v1233
    %v1235 = vlaneseq
    %v1236 = vshrl.u32 %v1235, 7
    %v1237 = vsub.s32 %v1234, %v1236
    %v1238 = vrot.slane %v1216, %v1237
    %v1240 = vunpack.c.l.s4 1966171168
    %v1241 = vunpack.c.0.s8 %v1240
    %v1242 = vlaneseq
    %v1243 = vshrl.u32 %v1242, 7
    %v1244 = vsub.s32 %v1241, %v1243
    %v1245 = vrot.slane %v1217, %v1244
    %v1246 = vcombine.high %v1224, %v1224
    %v1247 = vcombine.high %v1231, %v1231
    %v1248 = vcombine.high %v1238, %v1238
    %v1249 = vcombine.high %v1245, %v1245
    %v1250 = vlaneseq
    %v1251 = vshrl.u32 %v1250, 7
    %v1252 = vsub.s32 0, %v1251
    %v1253 = vrot.slane %v1224, %v1252
    %v1254 = vlaneseq
    %v1255 = vshrl.u32 %v1254, 7
    %v1256 = vsub.s32 0, %v1255
    %v1257 = vrot.slane %v1238, %v1256
    %v1258 = vlaneseq
    %v1259 = vshrl.u32 %v1258, 7
    %v1260 = vsub.s32 0, %v1259
    %v1261 = vrot.slane %v1246, %v1260
    %v1262 = vlaneseq
    %v1263 = vshrl.u32 %v1262, 7
    %v1264 = vsub.s32 0, %v1263
    %v1265 = vrot.slane %v1248, %v1264
    %v1266 = vlaneseq
    %v1267 = vshrl.u32 %v1266, 7
    %v1268 = vsub.s32 0, %v1267
    %v1269 = vrot.slane %v1231, %v1268
    %v1270 = vlaneseq
    %v1271 = vshrl.u32 %v1270, 7
    %v1272 = vsub.s32 0, %v1271
    %v1273 = vrot.slane %v1245, %v1272
    %v1274 = vlaneseq
    %v1275 = vshrl.u32 %v1274, 7
    %v1276 = vsub.s32 0, %v1275
    %v1277 = vrot.slane %v1247, %v1276
    %v1278 = vlaneseq
    %v1279 = vshrl.u32 %v1278, 7
    %v1280 = vsub.s32 0, %v1279
    %v1281 = vrot.slane %v1249, %v1280
    %v1290 = vmul.f32 %v1253, %v37
    %v1291 = vmul.f32 %v1253, %v38
    %v1292 = vmul.f32 %v1253, %v39
    %v1293 = vmul.f32 %v1253, %v40
    %v1294 = vmul.f32 %v1257, %v37
    %v1295 = vmul.f32 %v1257, %v38
    %v1296 = vmul.f32 %v1257, %v39
    %v1297 = vmul.f32 %v1257, %v40
    %v1298 = vmul.f32 %v1261, %v37
    %v1299 = vmul.f32 %v1261, %v38
    %v1300 = vmul.f32 %v1261, %v39
    %v1301 = vmul.f32 %v1261, %v40
    %v1302 = vmul.f32 %v1265, %v37
    %v1303 = vmul.f32 %v1265, %v38
    %v1304 = vmul.f32 %v1265, %v39
    %v1305 = vmul.f32 %v1265, %v40
    %v1306 = vmul.f32 %v1269, %v37
    %v1307 = vmul.f32 %v1269, %v38
    %v1308 = vmul.f32 %v1269, %v39
    %v1309 = vmul.f32 %v1269, %v40
    %v1310 = vmul.f32 %v1273, %v37
    %v1311 = vmul.f32 %v1273, %v38
    %v1312 = vmul.f32 %v1273, %v39
    %v1313 = vmul.f32 %v1273, %v40
    %v1314 = vmul.f32 %v1277, %v37
    %v1315 = vmul.f32 %v1277, %v38
    %v1316 = vmul.f32 %v1277, %v39
    %v1317 = vmul.f32 %v1277, %v40
    %v1318 = vmul.f32 %v1281, %v37
    %v1319 = vmul.f32 %v1281, %v38
    %v1320 = vmul.f32 %v1281, %v39
    %v1321 = vmul.f32 %v1281, %v40
    %v1322 = vsel %vm61, %v1290, 0.0
    %1323 = vadd.xlane.f32.xlu0 %v1322
    %v1324 = vpop.xlane.xlu0 %1323
    %v1325 = vsel %vm61, %v1291, 0.0
    %1326 = vadd.xlane.f32.xlu0 %v1325
    %v1327 = vpop.xlane.xlu0 %1326
    %v1328 = vsel %vm61, %v1292, 0.0
    %1329 = vadd.xlane.f32.xlu0 %v1328
    %v1330 = vpop.xlane.xlu0 %1329
    %v1331 = vsel %vm61, %v1293, 0.0
    %1332 = vadd.xlane.f32.xlu0 %v1331
    %v1333 = vpop.xlane.xlu0 %1332
    %v1334 = vsel %vm61, %v1294, 0.0
    %1335 = vadd.xlane.f32.xlu0 %v1334
    %v1336 = vpop.xlane.xlu0 %1335
    %v1337 = vsel %vm61, %v1295, 0.0
    %1338 = vadd.xlane.f32.xlu0 %v1337
    %v1339 = vpop.xlane.xlu0 %1338
    %v1340 = vsel %vm61, %v1296, 0.0
    %1341 = vadd.xlane.f32.xlu0 %v1340
    %v1342 = vpop.xlane.xlu0 %1341
    %v1343 = vsel %vm61, %v1297, 0.0
    %1344 = vadd.xlane.f32.xlu0 %v1343
    %v1345 = vpop.xlane.xlu0 %1344
    %v1346 = vsel %vm61, %v1298, 0.0
    %1347 = vadd.xlane.f32.xlu0 %v1346
    %v1348 = vpop.xlane.xlu0 %1347
    %v1349 = vsel %vm61, %v1299, 0.0
    %1350 = vadd.xlane.f32.xlu0 %v1349
    %v1351 = vpop.xlane.xlu0 %1350
    %v1352 = vsel %vm61, %v1300, 0.0
    %1353 = vadd.xlane.f32.xlu0 %v1352
    %v1354 = vpop.xlane.xlu0 %1353
    %v1355 = vsel %vm61, %v1301, 0.0
    %1356 = vadd.xlane.f32.xlu0 %v1355
    %v1357 = vpop.xlane.xlu0 %1356
    %v1358 = vsel %vm61, %v1302, 0.0
    %1359 = vadd.xlane.f32.xlu0 %v1358
    %v1360 = vpop.xlane.xlu0 %1359
    %v1361 = vsel %vm61, %v1303, 0.0
    %1362 = vadd.xlane.f32.xlu0 %v1361
    %v1363 = vpop.xlane.xlu0 %1362
    %v1364 = vsel %vm61, %v1304, 0.0
    %1365 = vadd.xlane.f32.xlu0 %v1364
    %v1366 = vpop.xlane.xlu0 %1365
    %v1367 = vsel %vm61, %v1305, 0.0
    %1368 = vadd.xlane.f32.xlu0 %v1367
    %v1369 = vpop.xlane.xlu0 %1368
    %v1370 = vsel %vm61, %v1306, 0.0
    %1371 = vadd.xlane.f32.xlu0 %v1370
    %v1372 = vpop.xlane.xlu0 %1371
    %v1373 = vsel %vm61, %v1307, 0.0
    %1374 = vadd.xlane.f32.xlu0 %v1373
    %v1375 = vpop.xlane.xlu0 %1374
    %v1376 = vsel %vm61, %v1308, 0.0
    %1377 = vadd.xlane.f32.xlu0 %v1376
    %v1378 = vpop.xlane.xlu0 %1377
    %v1379 = vsel %vm61, %v1309, 0.0
    %1380 = vadd.xlane.f32.xlu0 %v1379
    %v1381 = vpop.xlane.xlu0 %1380
    %v1382 = vsel %vm61, %v1310, 0.0
    %1383 = vadd.xlane.f32.xlu0 %v1382
    %v1384 = vpop.xlane.xlu0 %1383
    %v1385 = vsel %vm61, %v1311, 0.0
    %1386 = vadd.xlane.f32.xlu0 %v1385
    %v1387 = vpop.xlane.xlu0 %1386
    %v1388 = vsel %vm61, %v1312, 0.0
    %1389 = vadd.xlane.f32.xlu0 %v1388
    %v1390 = vpop.xlane.xlu0 %1389
    %v1391 = vsel %vm61, %v1313, 0.0
    %1392 = vadd.xlane.f32.xlu0 %v1391
    %v1393 = vpop.xlane.xlu0 %1392
    %v1394 = vsel %vm61, %v1314, 0.0
    %1395 = vadd.xlane.f32.xlu0 %v1394
    %v1396 = vpop.xlane.xlu0 %1395
    %v1397 = vsel %vm61, %v1315, 0.0
    %1398 = vadd.xlane.f32.xlu0 %v1397
    %v1399 = vpop.xlane.xlu0 %1398
    %v1400 = vsel %vm61, %v1316, 0.0
    %1401 = vadd.xlane.f32.xlu0 %v1400
    %v1402 = vpop.xlane.xlu0 %1401
    %v1403 = vsel %vm61, %v1317, 0.0
    %1404 = vadd.xlane.f32.xlu0 %v1403
    %v1405 = vpop.xlane.xlu0 %1404
    %v1406 = vsel %vm61, %v1318, 0.0
    %1407 = vadd.xlane.f32.xlu0 %v1406
    %v1408 = vpop.xlane.xlu0 %1407
    %v1409 = vsel %vm61, %v1319, 0.0
    %1410 = vadd.xlane.f32.xlu0 %v1409
    %v1411 = vpop.xlane.xlu0 %1410
    %v1412 = vsel %vm61, %v1320, 0.0
    %1413 = vadd.xlane.f32.xlu0 %v1412
    %v1414 = vpop.xlane.xlu0 %1413
    %v1415 = vsel %vm61, %v1321, 0.0
    %1416 = vadd.xlane.f32.xlu0 %v1415
    %v1417 = vpop.xlane.xlu0 %1416
    %v1450 = vlaneseq
    %v1451 = vshrl.u32 %v1450, 7
    %v1452 = vsub.s32 %v1156, %v1451
    %v1453 = vrot.slane %v1324, %v1452
    %v1454 = vlaneseq
    %v1455 = vshrl.u32 %v1454, 7
    %v1456 = vsub.s32 %v1161, %v1455
    %v1457 = vrot.slane %v1327, %v1456
    %v1458 = vsel %vm1166, %v1457, %v1453
    %v1459 = vlaneseq
    %v1460 = vshrl.u32 %v1459, 7
    %v1461 = vsub.s32 %v1168, %v1460
    %v1462 = vrot.slane %v1330, %v1461
    %v1463 = vsel %vm1173, %v1462, %v1458
    %v1464 = vlaneseq
    %v1465 = vshrl.u32 %v1464, 7
    %v1466 = vsub.s32 %v1175, %v1465
    %v1467 = vrot.slane %v1333, %v1466
    %v1468 = vsel %vm1180, %v1467, %v1463
    %v1469 = vlaneseq
    %v1470 = vshrl.u32 %v1469, 7
    %v1471 = vsub.s32 %v1156, %v1470
    %v1472 = vrot.slane %v1336, %v1471
    %v1473 = vlaneseq
    %v1474 = vshrl.u32 %v1473, 7
    %v1475 = vsub.s32 %v1161, %v1474
    %v1476 = vrot.slane %v1339, %v1475
    %v1477 = vsel %vm1166, %v1476, %v1472
    %v1478 = vlaneseq
    %v1479 = vshrl.u32 %v1478, 7
    %v1480 = vsub.s32 %v1168, %v1479
    %v1481 = vrot.slane %v1342, %v1480
    %v1482 = vsel %vm1173, %v1481, %v1477
    %v1483 = vlaneseq
    %v1484 = vshrl.u32 %v1483, 7
    %v1485 = vsub.s32 %v1175, %v1484
    %v1486 = vrot.slane %v1345, %v1485
    %v1487 = vsel %vm1180, %v1486, %v1482
    %v1488 = vlaneseq
    %v1489 = vshrl.u32 %v1488, 7
    %v1490 = vsub.s32 %v1156, %v1489
    %v1491 = vrot.slane %v1348, %v1490
    %v1492 = vlaneseq
    %v1493 = vshrl.u32 %v1492, 7
    %v1494 = vsub.s32 %v1161, %v1493
    %v1495 = vrot.slane %v1351, %v1494
    %v1496 = vsel %vm1166, %v1495, %v1491
    %v1497 = vlaneseq
    %v1498 = vshrl.u32 %v1497, 7
    %v1499 = vsub.s32 %v1168, %v1498
    %v1500 = vrot.slane %v1354, %v1499
    %v1501 = vsel %vm1173, %v1500, %v1496
    %v1502 = vlaneseq
    %v1503 = vshrl.u32 %v1502, 7
    %v1504 = vsub.s32 %v1175, %v1503
    %v1505 = vrot.slane %v1357, %v1504
    %v1506 = vsel %vm1180, %v1505, %v1501
    %v1507 = vlaneseq
    %v1508 = vshrl.u32 %v1507, 7
    %v1509 = vsub.s32 %v1156, %v1508
    %v1510 = vrot.slane %v1360, %v1509
    %v1511 = vlaneseq
    %v1512 = vshrl.u32 %v1511, 7
    %v1513 = vsub.s32 %v1161, %v1512
    %v1514 = vrot.slane %v1363, %v1513
    %v1515 = vsel %vm1166, %v1514, %v1510
    %v1516 = vlaneseq
    %v1517 = vshrl.u32 %v1516, 7
    %v1518 = vsub.s32 %v1168, %v1517
    %v1519 = vrot.slane %v1366, %v1518
    %v1520 = vsel %vm1173, %v1519, %v1515
    %v1521 = vlaneseq
    %v1522 = vshrl.u32 %v1521, 7
    %v1523 = vsub.s32 %v1175, %v1522
    %v1524 = vrot.slane %v1369, %v1523
    %v1525 = vsel %vm1180, %v1524, %v1520
    %v1526 = vlaneseq
    %v1527 = vshrl.u32 %v1526, 7
    %v1528 = vsub.s32 %v1156, %v1527
    %v1529 = vrot.slane %v1372, %v1528
    %v1530 = vlaneseq
    %v1531 = vshrl.u32 %v1530, 7
    %v1532 = vsub.s32 %v1161, %v1531
    %v1533 = vrot.slane %v1375, %v1532
    %v1534 = vsel %vm1166, %v1533, %v1529
    %v1535 = vlaneseq
    %v1536 = vshrl.u32 %v1535, 7
    %v1537 = vsub.s32 %v1168, %v1536
    %v1538 = vrot.slane %v1378, %v1537
    %v1539 = vsel %vm1173, %v1538, %v1534
    %v1540 = vlaneseq
    %v1541 = vshrl.u32 %v1540, 7
    %v1542 = vsub.s32 %v1175, %v1541
    %v1543 = vrot.slane %v1381, %v1542
    %v1544 = vsel %vm1180, %v1543, %v1539
    %v1545 = vlaneseq
    %v1546 = vshrl.u32 %v1545, 7
    %v1547 = vsub.s32 %v1156, %v1546
    %v1548 = vrot.slane %v1384, %v1547
    %v1549 = vlaneseq
    %v1550 = vshrl.u32 %v1549, 7
    %v1551 = vsub.s32 %v1161, %v1550
    %v1552 = vrot.slane %v1387, %v1551
    %v1553 = vsel %vm1166, %v1552, %v1548
    %v1554 = vlaneseq
    %v1555 = vshrl.u32 %v1554, 7
    %v1556 = vsub.s32 %v1168, %v1555
    %v1557 = vrot.slane %v1390, %v1556
    %v1558 = vsel %vm1173, %v1557, %v1553
    %v1559 = vlaneseq
    %v1560 = vshrl.u32 %v1559, 7
    %v1561 = vsub.s32 %v1175, %v1560
    %v1562 = vrot.slane %v1393, %v1561
    %v1563 = vsel %vm1180, %v1562, %v1558
    %v1564 = vlaneseq
    %v1565 = vshrl.u32 %v1564, 7
    %v1566 = vsub.s32 %v1156, %v1565
    %v1567 = vrot.slane %v1396, %v1566
    %v1568 = vlaneseq
    %v1569 = vshrl.u32 %v1568, 7
    %v1570 = vsub.s32 %v1161, %v1569
    %v1571 = vrot.slane %v1399, %v1570
    %v1572 = vsel %vm1166, %v1571, %v1567
    %v1573 = vlaneseq
    %v1574 = vshrl.u32 %v1573, 7
    %v1575 = vsub.s32 %v1168, %v1574
    %v1576 = vrot.slane %v1402, %v1575
    %v1577 = vsel %vm1173, %v1576, %v1572
    %v1578 = vlaneseq
    %v1579 = vshrl.u32 %v1578, 7
    %v1580 = vsub.s32 %v1175, %v1579
    %v1581 = vrot.slane %v1405, %v1580
    %v1582 = vsel %vm1180, %v1581, %v1577
    %v1583 = vlaneseq
    %v1584 = vshrl.u32 %v1583, 7
    %v1585 = vsub.s32 %v1156, %v1584
    %v1586 = vrot.slane %v1408, %v1585
    %v1587 = vlaneseq
    %v1588 = vshrl.u32 %v1587, 7
    %v1589 = vsub.s32 %v1161, %v1588
    %v1590 = vrot.slane %v1411, %v1589
    %v1591 = vsel %vm1166, %v1590, %v1586
    %v1592 = vlaneseq
    %v1593 = vshrl.u32 %v1592, 7
    %v1594 = vsub.s32 %v1168, %v1593
    %v1595 = vrot.slane %v1414, %v1594
    %v1596 = vsel %vm1173, %v1595, %v1591
    %v1597 = vlaneseq
    %v1598 = vshrl.u32 %v1597, 7
    %v1599 = vsub.s32 %v1175, %v1598
    %v1600 = vrot.slane %v1417, %v1599
    %v1601 = vsel %vm1180, %v1600, %v1596
    %v1602 = vsel %vm1182, %v1487, %v1468
    %v1603 = vsel %vm1183, %v1506, %v1602
    %v1604 = vsel %vm1185, %v1525, %v1603
    %v1605 = vsel %vm1187, %v1544, %v1604
    %v1606 = vsel %vm1189, %v1563, %v1605
    %v1607 = vsel %vm1191, %v1582, %v1606
    %v1608 = vsel %vm1193, %v1601, %v1607
    %v1610 = vadd.f32 %v1199, %v1608
    %v1611 = vtanh.pop %v1610
    %s1612 = scalar_lea.vmem [#allocation2], 16
    %v1613 = vld [vmem:[%s1612] sm:$0xff]
    %v1615 = vcombine.high %v1611, %v1611
    %v1617 = vunpack.c.l.s4 1966171168
    %v1618 = vunpack.c.0.s8 %v1617
    %v1619 = vlaneseq
    %v1620 = vshrl.u32 %v1619, 7
    %v1621 = vsub.s32 %v1618, %v1620
    %v1622 = vrot.slane %v1611, %v1621
    %v1624 = vunpack.c.l.s4 1966171168
    %v1625 = vunpack.c.0.s8 %v1624
    %v1626 = vlaneseq
    %v1627 = vshrl.u32 %v1626, 7
    %v1628 = vsub.s32 %v1625, %v1627
    %v1629 = vrot.slane %v1615, %v1628
    %v1630 = vcombine.high %v1622, %v1622
    %v1631 = vcombine.high %v1629, %v1629
    %v1633 = vunpack.c.l.s4 1966171168
    %v1634 = vunpack.c.0.s8 %v1633
    %v1635 = vlaneseq
    %v1636 = vshrl.u32 %v1635, 7
    %v1637 = vsub.s32 %v1634, %v1636
    %v1638 = vrot.slane %v1622, %v1637
    %v1640 = vunpack.c.l.s4 1966171168
    %v1641 = vunpack.c.0.s8 %v1640
    %v1642 = vlaneseq
    %v1643 = vshrl.u32 %v1642, 7
    %v1644 = vsub.s32 %v1641, %v1643
    %v1645 = vrot.slane %v1629, %v1644
    %v1647 = vunpack.c.l.s4 1966171168
    %v1648 = vunpack.c.0.s8 %v1647
    %v1649 = vlaneseq
    %v1650 = vshrl.u32 %v1649, 7
    %v1651 = vsub.s32 %v1648, %v1650
    %v1652 = vrot.slane %v1630, %v1651
    %v1654 = vunpack.c.l.s4 1966171168
    %v1655 = vunpack.c.0.s8 %v1654
    %v1656 = vlaneseq
    %v1657 = vshrl.u32 %v1656, 7
    %v1658 = vsub.s32 %v1655, %v1657
    %v1659 = vrot.slane %v1631, %v1658
    %v1660 = vcombine.high %v1638, %v1638
    %v1661 = vcombine.high %v1645, %v1645
    %v1662 = vcombine.high %v1652, %v1652
    %v1663 = vcombine.high %v1659, %v1659
    %v1664 = vlaneseq
    %v1665 = vshrl.u32 %v1664, 7
    %v1666 = vsub.s32 0, %v1665
    %v1667 = vrot.slane %v1638, %v1666
    %v1668 = vlaneseq
    %v1669 = vshrl.u32 %v1668, 7
    %v1670 = vsub.s32 0, %v1669
    %v1671 = vrot.slane %v1652, %v1670
    %v1672 = vlaneseq
    %v1673 = vshrl.u32 %v1672, 7
    %v1674 = vsub.s32 0, %v1673
    %v1675 = vrot.slane %v1660, %v1674
    %v1676 = vlaneseq
    %v1677 = vshrl.u32 %v1676, 7
    %v1678 = vsub.s32 0, %v1677
    %v1679 = vrot.slane %v1662, %v1678
    %v1680 = vlaneseq
    %v1681 = vshrl.u32 %v1680, 7
    %v1682 = vsub.s32 0, %v1681
    %v1683 = vrot.slane %v1645, %v1682
    %v1684 = vlaneseq
    %v1685 = vshrl.u32 %v1684, 7
    %v1686 = vsub.s32 0, %v1685
    %v1687 = vrot.slane %v1659, %v1686
    %v1688 = vlaneseq
    %v1689 = vshrl.u32 %v1688, 7
    %v1690 = vsub.s32 0, %v1689
    %v1691 = vrot.slane %v1661, %v1690
    %v1692 = vlaneseq
    %v1693 = vshrl.u32 %v1692, 7
    %v1694 = vsub.s32 0, %v1693
    %v1695 = vrot.slane %v1663, %v1694
    %v1704 = vmul.f32 %v1667, %v37
    %v1705 = vmul.f32 %v1667, %v38
    %v1706 = vmul.f32 %v1667, %v39
    %v1707 = vmul.f32 %v1667, %v40
    %v1708 = vmul.f32 %v1671, %v37
    %v1709 = vmul.f32 %v1671, %v38
    %v1710 = vmul.f32 %v1671, %v39
    %v1711 = vmul.f32 %v1671, %v40
    %v1712 = vmul.f32 %v1675, %v37
    %v1713 = vmul.f32 %v1675, %v38
    %v1714 = vmul.f32 %v1675, %v39
    %v1715 = vmul.f32 %v1675, %v40
    %v1716 = vmul.f32 %v1679, %v37
    %v1717 = vmul.f32 %v1679, %v38
    %v1718 = vmul.f32 %v1679, %v39
    %v1719 = vmul.f32 %v1679, %v40
    %v1720 = vmul.f32 %v1683, %v37
    %v1721 = vmul.f32 %v1683, %v38
    %v1722 = vmul.f32 %v1683, %v39
    %v1723 = vmul.f32 %v1683, %v40
    %v1724 = vmul.f32 %v1687, %v37
    %v1725 = vmul.f32 %v1687, %v38
    %v1726 = vmul.f32 %v1687, %v39
    %v1727 = vmul.f32 %v1687, %v40
    %v1728 = vmul.f32 %v1691, %v37
    %v1729 = vmul.f32 %v1691, %v38
    %v1730 = vmul.f32 %v1691, %v39
    %v1731 = vmul.f32 %v1691, %v40
    %v1732 = vmul.f32 %v1695, %v37
    %v1733 = vmul.f32 %v1695, %v38
    %v1734 = vmul.f32 %v1695, %v39
    %v1735 = vmul.f32 %v1695, %v40
    %v1736 = vsel %vm61, %v1704, 0.0
    %1737 = vadd.xlane.f32.xlu0 %v1736
    %v1738 = vpop.xlane.xlu0 %1737
    %v1739 = vsel %vm61, %v1705, 0.0
    %1740 = vadd.xlane.f32.xlu0 %v1739
    %v1741 = vpop.xlane.xlu0 %1740
    %v1742 = vsel %vm61, %v1706, 0.0
    %1743 = vadd.xlane.f32.xlu0 %v1742
    %v1744 = vpop.xlane.xlu0 %1743
    %v1745 = vsel %vm61, %v1707, 0.0
    %1746 = vadd.xlane.f32.xlu0 %v1745
    %v1747 = vpop.xlane.xlu0 %1746
    %v1748 = vsel %vm61, %v1708, 0.0
    %1749 = vadd.xlane.f32.xlu0 %v1748
    %v1750 = vpop.xlane.xlu0 %1749
    %v1751 = vsel %vm61, %v1709, 0.0
    %1752 = vadd.xlane.f32.xlu0 %v1751
    %v1753 = vpop.xlane.xlu0 %1752
    %v1754 = vsel %vm61, %v1710, 0.0
    %1755 = vadd.xlane.f32.xlu0 %v1754
    %v1756 = vpop.xlane.xlu0 %1755
    %v1757 = vsel %vm61, %v1711, 0.0
    %1758 = vadd.xlane.f32.xlu0 %v1757
    %v1759 = vpop.xlane.xlu0 %1758
    %v1760 = vsel %vm61, %v1712, 0.0
    %1761 = vadd.xlane.f32.xlu0 %v1760
    %v1762 = vpop.xlane.xlu0 %1761
    %v1763 = vsel %vm61, %v1713, 0.0
    %1764 = vadd.xlane.f32.xlu0 %v1763
    %v1765 = vpop.xlane.xlu0 %1764
    %v1766 = vsel %vm61, %v1714, 0.0
    %1767 = vadd.xlane.f32.xlu0 %v1766
    %v1768 = vpop.xlane.xlu0 %1767
    %v1769 = vsel %vm61, %v1715, 0.0
    %1770 = vadd.xlane.f32.xlu0 %v1769
    %v1771 = vpop.xlane.xlu0 %1770
    %v1772 = vsel %vm61, %v1716, 0.0
    %1773 = vadd.xlane.f32.xlu0 %v1772
    %v1774 = vpop.xlane.xlu0 %1773
    %v1775 = vsel %vm61, %v1717, 0.0
    %1776 = vadd.xlane.f32.xlu0 %v1775
    %v1777 = vpop.xlane.xlu0 %1776
    %v1778 = vsel %vm61, %v1718, 0.0
    %1779 = vadd.xlane.f32.xlu0 %v1778
    %v1780 = vpop.xlane.xlu0 %1779
    %v1781 = vsel %vm61, %v1719, 0.0
    %1782 = vadd.xlane.f32.xlu0 %v1781
    %v1783 = vpop.xlane.xlu0 %1782
    %v1784 = vsel %vm61, %v1720, 0.0
    %1785 = vadd.xlane.f32.xlu0 %v1784
    %v1786 = vpop.xlane.xlu0 %1785
    %v1787 = vsel %vm61, %v1721, 0.0
    %1788 = vadd.xlane.f32.xlu0 %v1787
    %v1789 = vpop.xlane.xlu0 %1788
    %v1790 = vsel %vm61, %v1722, 0.0
    %1791 = vadd.xlane.f32.xlu0 %v1790
    %v1792 = vpop.xlane.xlu0 %1791
    %v1793 = vsel %vm61, %v1723, 0.0
    %1794 = vadd.xlane.f32.xlu0 %v1793
    %v1795 = vpop.xlane.xlu0 %1794
    %v1796 = vsel %vm61, %v1724, 0.0
    %1797 = vadd.xlane.f32.xlu0 %v1796
    %v1798 = vpop.xlane.xlu0 %1797
    %v1799 = vsel %vm61, %v1725, 0.0
    %1800 = vadd.xlane.f32.xlu0 %v1799
    %v1801 = vpop.xlane.xlu0 %1800
    %v1802 = vsel %vm61, %v1726, 0.0
    %1803 = vadd.xlane.f32.xlu0 %v1802
    %v1804 = vpop.xlane.xlu0 %1803
    %v1805 = vsel %vm61, %v1727, 0.0
    %1806 = vadd.xlane.f32.xlu0 %v1805
    %v1807 = vpop.xlane.xlu0 %1806
    %v1808 = vsel %vm61, %v1728, 0.0
    %1809 = vadd.xlane.f32.xlu0 %v1808
    %v1810 = vpop.xlane.xlu0 %1809
    %v1811 = vsel %vm61, %v1729, 0.0
    %1812 = vadd.xlane.f32.xlu0 %v1811
    %v1813 = vpop.xlane.xlu0 %1812
    %v1814 = vsel %vm61, %v1730, 0.0
    %1815 = vadd.xlane.f32.xlu0 %v1814
    %v1816 = vpop.xlane.xlu0 %1815
    %v1817 = vsel %vm61, %v1731, 0.0
    %1818 = vadd.xlane.f32.xlu0 %v1817
    %v1819 = vpop.xlane.xlu0 %1818
    %v1820 = vsel %vm61, %v1732, 0.0
    %1821 = vadd.xlane.f32.xlu0 %v1820
    %v1822 = vpop.xlane.xlu0 %1821
    %v1823 = vsel %vm61, %v1733, 0.0
    %1824 = vadd.xlane.f32.xlu0 %v1823
    %v1825 = vpop.xlane.xlu0 %1824
    %v1826 = vsel %vm61, %v1734, 0.0
    %1827 = vadd.xlane.f32.xlu0 %v1826
    %v1828 = vpop.xlane.xlu0 %1827
    %v1829 = vsel %vm61, %v1735, 0.0
    %1830 = vadd.xlane.f32.xlu0 %v1829
    %v1831 = vpop.xlane.xlu0 %1830
    %v1864 = vlaneseq
    %v1865 = vshrl.u32 %v1864, 7
    %v1866 = vsub.s32 %v1156, %v1865
    %v1867 = vrot.slane %v1738, %v1866
    %v1868 = vlaneseq
    %v1869 = vshrl.u32 %v1868, 7
    %v1870 = vsub.s32 %v1161, %v1869
    %v1871 = vrot.slane %v1741, %v1870
    %v1872 = vsel %vm1166, %v1871, %v1867
    %v1873 = vlaneseq
    %v1874 = vshrl.u32 %v1873, 7
    %v1875 = vsub.s32 %v1168, %v1874
    %v1876 = vrot.slane %v1744, %v1875
    %v1877 = vsel %vm1173, %v1876, %v1872
    %v1878 = vlaneseq
    %v1879 = vshrl.u32 %v1878, 7
    %v1880 = vsub.s32 %v1175, %v1879
    %v1881 = vrot.slane %v1747, %v1880
    %v1882 = vsel %vm1180, %v1881, %v1877
    %v1883 = vlaneseq
    %v1884 = vshrl.u32 %v1883, 7
    %v1885 = vsub.s32 %v1156, %v1884
    %v1886 = vrot.slane %v1750, %v1885
    %v1887 = vlaneseq
    %v1888 = vshrl.u32 %v1887, 7
    %v1889 = vsub.s32 %v1161, %v1888
    %v1890 = vrot.slane %v1753, %v1889
    %v1891 = vsel %vm1166, %v1890, %v1886
    %v1892 = vlaneseq
    %v1893 = vshrl.u32 %v1892, 7
    %v1894 = vsub.s32 %v1168, %v1893
    %v1895 = vrot.slane %v1756, %v1894
    %v1896 = vsel %vm1173, %v1895, %v1891
    %v1897 = vlaneseq
    %v1898 = vshrl.u32 %v1897, 7
    %v1899 = vsub.s32 %v1175, %v1898
    %v1900 = vrot.slane %v1759, %v1899
    %v1901 = vsel %vm1180, %v1900, %v1896
    %v1902 = vlaneseq
    %v1903 = vshrl.u32 %v1902, 7
    %v1904 = vsub.s32 %v1156, %v1903
    %v1905 = vrot.slane %v1762, %v1904
    %v1906 = vlaneseq
    %v1907 = vshrl.u32 %v1906, 7
    %v1908 = vsub.s32 %v1161, %v1907
    %v1909 = vrot.slane %v1765, %v1908
    %v1910 = vsel %vm1166, %v1909, %v1905
    %v1911 = vlaneseq
    %v1912 = vshrl.u32 %v1911, 7
    %v1913 = vsub.s32 %v1168, %v1912
    %v1914 = vrot.slane %v1768, %v1913
    %v1915 = vsel %vm1173, %v1914, %v1910
    %v1916 = vlaneseq
    %v1917 = vshrl.u32 %v1916, 7
    %v1918 = vsub.s32 %v1175, %v1917
    %v1919 = vrot.slane %v1771, %v1918
    %v1920 = vsel %vm1180, %v1919, %v1915
    %v1921 = vlaneseq
    %v1922 = vshrl.u32 %v1921, 7
    %v1923 = vsub.s32 %v1156, %v1922
    %v1924 = vrot.slane %v1774, %v1923
    %v1925 = vlaneseq
    %v1926 = vshrl.u32 %v1925, 7
    %v1927 = vsub.s32 %v1161, %v1926
    %v1928 = vrot.slane %v1777, %v1927
    %v1929 = vsel %vm1166, %v1928, %v1924
    %v1930 = vlaneseq
    %v1931 = vshrl.u32 %v1930, 7
    %v1932 = vsub.s32 %v1168, %v1931
    %v1933 = vrot.slane %v1780, %v1932
    %v1934 = vsel %vm1173, %v1933, %v1929
    %v1935 = vlaneseq
    %v1936 = vshrl.u32 %v1935, 7
    %v1937 = vsub.s32 %v1175, %v1936
    %v1938 = vrot.slane %v1783, %v1937
    %v1939 = vsel %vm1180, %v1938, %v1934
    %v1940 = vlaneseq
    %v1941 = vshrl.u32 %v1940, 7
    %v1942 = vsub.s32 %v1156, %v1941
    %v1943 = vrot.slane %v1786, %v1942
    %v1944 = vlaneseq
    %v1945 = vshrl.u32 %v1944, 7
    %v1946 = vsub.s32 %v1161, %v1945
    %v1947 = vrot.slane %v1789, %v1946
    %v1948 = vsel %vm1166, %v1947, %v1943
    %v1949 = vlaneseq
    %v1950 = vshrl.u32 %v1949, 7
    %v1951 = vsub.s32 %v1168, %v1950
    %v1952 = vrot.slane %v1792, %v1951
    %v1953 = vsel %vm1173, %v1952, %v1948
    %v1954 = vlaneseq
    %v1955 = vshrl.u32 %v1954, 7
    %v1956 = vsub.s32 %v1175, %v1955
    %v1957 = vrot.slane %v1795, %v1956
    %v1958 = vsel %vm1180, %v1957, %v1953
    %v1959 = vlaneseq
    %v1960 = vshrl.u32 %v1959, 7
    %v1961 = vsub.s32 %v1156, %v1960
    %v1962 = vrot.slane %v1798, %v1961
    %v1963 = vlaneseq
    %v1964 = vshrl.u32 %v1963, 7
    %v1965 = vsub.s32 %v1161, %v1964
    %v1966 = vrot.slane %v1801, %v1965
    %v1967 = vsel %vm1166, %v1966, %v1962
    %v1968 = vlaneseq
    %v1969 = vshrl.u32 %v1968, 7
    %v1970 = vsub.s32 %v1168, %v1969
    %v1971 = vrot.slane %v1804, %v1970
    %v1972 = vsel %vm1173, %v1971, %v1967
    %v1973 = vlaneseq
    %v1974 = vshrl.u32 %v1973, 7
    %v1975 = vsub.s32 %v1175, %v1974
    %v1976 = vrot.slane %v1807, %v1975
    %v1977 = vsel %vm1180, %v1976, %v1972
    %v1978 = vlaneseq
    %v1979 = vshrl.u32 %v1978, 7
    %v1980 = vsub.s32 %v1156, %v1979
    %v1981 = vrot.slane %v1810, %v1980
    %v1982 = vlaneseq
    %v1983 = vshrl.u32 %v1982, 7
    %v1984 = vsub.s32 %v1161, %v1983
    %v1985 = vrot.slane %v1813, %v1984
    %v1986 = vsel %vm1166, %v1985, %v1981
    %v1987 = vlaneseq
    %v1988 = vshrl.u32 %v1987, 7
    %v1989 = vsub.s32 %v1168, %v1988
    %v1990 = vrot.slane %v1816, %v1989
    %v1991 = vsel %vm1173, %v1990, %v1986
    %v1992 = vlaneseq
    %v1993 = vshrl.u32 %v1992, 7
    %v1994 = vsub.s32 %v1175, %v1993
    %v1995 = vrot.slane %v1819, %v1994
    %v1996 = vsel %vm1180, %v1995, %v1991
    %v1997 = vlaneseq
    %v1998 = vshrl.u32 %v1997, 7
    %v1999 = vsub.s32 %v1156, %v1998
    %v2000 = vrot.slane %v1822, %v1999
    %v2001 = vlaneseq
    %v2002 = vshrl.u32 %v2001, 7
    %v2003 = vsub.s32 %v1161, %v2002
    %v2004 = vrot.slane %v1825, %v2003
    %v2005 = vsel %vm1166, %v2004, %v2000
    %v2006 = vlaneseq
    %v2007 = vshrl.u32 %v2006, 7
    %v2008 = vsub.s32 %v1168, %v2007
    %v2009 = vrot.slane %v1828, %v2008
    %v2010 = vsel %vm1173, %v2009, %v2005
    %v2011 = vlaneseq
    %v2012 = vshrl.u32 %v2011, 7
    %v2013 = vsub.s32 %v1175, %v2012
    %v2014 = vrot.slane %v1831, %v2013
    %v2015 = vsel %vm1180, %v2014, %v2010
    %v2016 = vsel %vm1182, %v1901, %v1882
    %v2017 = vsel %vm1183, %v1920, %v2016
    %v2018 = vsel %vm1185, %v1939, %v2017
    %v2019 = vsel %vm1187, %v1958, %v2018
    %v2020 = vsel %vm1189, %v1977, %v2019
    %v2021 = vsel %vm1191, %v1996, %v2020
    %v2022 = vsel %vm1193, %v2015, %v2021
    %v2024 = vadd.f32 %v1613, %v2022
    %v2025 = vtanh.pop %v2024
    %s2026 = scalar_lea.vmem [#allocation2], 24
    %v2027 = vld [vmem:[%s2026] sm:$0xff]
    %v2029 = vcombine.high %v2025, %v2025
    %v2031 = vunpack.c.l.s4 1966171168
    %v2032 = vunpack.c.0.s8 %v2031
    %v2033 = vlaneseq
    %v2034 = vshrl.u32 %v2033, 7
    %v2035 = vsub.s32 %v2032, %v2034
    %v2036 = vrot.slane %v2025, %v2035
    %v2038 = vunpack.c.l.s4 1966171168
    %v2039 = vunpack.c.0.s8 %v2038
    %v2040 = vlaneseq
    %v2041 = vshrl.u32 %v2040, 7
    %v2042 = vsub.s32 %v2039, %v2041
    %v2043 = vrot.slane %v2029, %v2042
    %v2044 = vcombine.high %v2036, %v2036
    %v2045 = vcombine.high %v2043, %v2043
    %v2047 = vunpack.c.l.s4 1966171168
    %v2048 = vunpack.c.0.s8 %v2047
    %v2049 = vlaneseq
    %v2050 = vshrl.u32 %v2049, 7
    %v2051 = vsub.s32 %v2048, %v2050
    %v2052 = vrot.slane %v2036, %v2051
    %v2054 = vunpack.c.l.s4 1966171168
    %v2055 = vunpack.c.0.s8 %v2054
    %v2056 = vlaneseq
    %v2057 = vshrl.u32 %v2056, 7
    %v2058 = vsub.s32 %v2055, %v2057
    %v2059 = vrot.slane %v2043, %v2058
    %v2061 = vunpack.c.l.s4 1966171168
    %v2062 = vunpack.c.0.s8 %v2061
    %v2063 = vlaneseq
    %v2064 = vshrl.u32 %v2063, 7
    %v2065 = vsub.s32 %v2062, %v2064
    %v2066 = vrot.slane %v2044, %v2065
    %v2068 = vunpack.c.l.s4 1966171168
    %v2069 = vunpack.c.0.s8 %v2068
    %v2070 = vlaneseq
    %v2071 = vshrl.u32 %v2070, 7
    %v2072 = vsub.s32 %v2069, %v2071
    %v2073 = vrot.slane %v2045, %v2072
    %v2074 = vcombine.high %v2052, %v2052
    %v2075 = vcombine.high %v2059, %v2059
    %v2076 = vcombine.high %v2066, %v2066
    %v2077 = vcombine.high %v2073, %v2073
    %v2078 = vlaneseq
    %v2079 = vshrl.u32 %v2078, 7
    %v2080 = vsub.s32 0, %v2079
    %v2081 = vrot.slane %v2052, %v2080
    %v2082 = vlaneseq
    %v2083 = vshrl.u32 %v2082, 7
    %v2084 = vsub.s32 0, %v2083
    %v2085 = vrot.slane %v2066, %v2084
    %v2086 = vlaneseq
    %v2087 = vshrl.u32 %v2086, 7
    %v2088 = vsub.s32 0, %v2087
    %v2089 = vrot.slane %v2074, %v2088
    %v2090 = vlaneseq
    %v2091 = vshrl.u32 %v2090, 7
    %v2092 = vsub.s32 0, %v2091
    %v2093 = vrot.slane %v2076, %v2092
    %v2094 = vlaneseq
    %v2095 = vshrl.u32 %v2094, 7
    %v2096 = vsub.s32 0, %v2095
    %v2097 = vrot.slane %v2059, %v2096
    %v2098 = vlaneseq
    %v2099 = vshrl.u32 %v2098, 7
    %v2100 = vsub.s32 0, %v2099
    %v2101 = vrot.slane %v2073, %v2100
    %v2102 = vlaneseq
    %v2103 = vshrl.u32 %v2102, 7
    %v2104 = vsub.s32 0, %v2103
    %v2105 = vrot.slane %v2075, %v2104
    %v2106 = vlaneseq
    %v2107 = vshrl.u32 %v2106, 7
    %v2108 = vsub.s32 0, %v2107
    %v2109 = vrot.slane %v2077, %v2108
    %v2118 = vmul.f32 %v2081, %v37
    %v2119 = vmul.f32 %v2081, %v38
    %v2120 = vmul.f32 %v2081, %v39
    %v2121 = vmul.f32 %v2081, %v40
    %v2122 = vmul.f32 %v2085, %v37
    %v2123 = vmul.f32 %v2085, %v38
    %v2124 = vmul.f32 %v2085, %v39
    %v2125 = vmul.f32 %v2085, %v40
    %v2126 = vmul.f32 %v2089, %v37
    %v2127 = vmul.f32 %v2089, %v38
    %v2128 = vmul.f32 %v2089, %v39
    %v2129 = vmul.f32 %v2089, %v40
    %v2130 = vmul.f32 %v2093, %v37
    %v2131 = vmul.f32 %v2093, %v38
    %v2132 = vmul.f32 %v2093, %v39
    %v2133 = vmul.f32 %v2093, %v40
    %v2134 = vmul.f32 %v2097, %v37
    %v2135 = vmul.f32 %v2097, %v38
    %v2136 = vmul.f32 %v2097, %v39
    %v2137 = vmul.f32 %v2097, %v40
    %v2138 = vmul.f32 %v2101, %v37
    %v2139 = vmul.f32 %v2101, %v38
    %v2140 = vmul.f32 %v2101, %v39
    %v2141 = vmul.f32 %v2101, %v40
    %v2142 = vmul.f32 %v2105, %v37
    %v2143 = vmul.f32 %v2105, %v38
    %v2144 = vmul.f32 %v2105, %v39
    %v2145 = vmul.f32 %v2105, %v40
    %v2146 = vmul.f32 %v2109, %v37
    %v2147 = vmul.f32 %v2109, %v38
    %v2148 = vmul.f32 %v2109, %v39
    %v2149 = vmul.f32 %v2109, %v40
    %v2150 = vsel %vm61, %v2118, 0.0
    %2151 = vadd.xlane.f32.xlu0 %v2150
    %v2152 = vpop.xlane.xlu0 %2151
    %v2153 = vsel %vm61, %v2119, 0.0
    %2154 = vadd.xlane.f32.xlu0 %v2153
    %v2155 = vpop.xlane.xlu0 %2154
    %v2156 = vsel %vm61, %v2120, 0.0
    %2157 = vadd.xlane.f32.xlu0 %v2156
    %v2158 = vpop.xlane.xlu0 %2157
    %v2159 = vsel %vm61, %v2121, 0.0
    %2160 = vadd.xlane.f32.xlu0 %v2159
    %v2161 = vpop.xlane.xlu0 %2160
    %v2162 = vsel %vm61, %v2122, 0.0
    %2163 = vadd.xlane.f32.xlu0 %v2162
    %v2164 = vpop.xlane.xlu0 %2163
    %v2165 = vsel %vm61, %v2123, 0.0
    %2166 = vadd.xlane.f32.xlu0 %v2165
    %v2167 = vpop.xlane.xlu0 %2166
    %v2168 = vsel %vm61, %v2124, 0.0
    %2169 = vadd.xlane.f32.xlu0 %v2168
    %v2170 = vpop.xlane.xlu0 %2169
    %v2171 = vsel %vm61, %v2125, 0.0
    %2172 = vadd.xlane.f32.xlu0 %v2171
    %v2173 = vpop.xlane.xlu0 %2172
    %v2174 = vsel %vm61, %v2126, 0.0
    %2175 = vadd.xlane.f32.xlu0 %v2174
    %v2176 = vpop.xlane.xlu0 %2175
    %v2177 = vsel %vm61, %v2127, 0.0
    %2178 = vadd.xlane.f32.xlu0 %v2177
    %v2179 = vpop.xlane.xlu0 %2178
    %v2180 = vsel %vm61, %v2128, 0.0
    %2181 = vadd.xlane.f32.xlu0 %v2180
    %v2182 = vpop.xlane.xlu0 %2181
    %v2183 = vsel %vm61, %v2129, 0.0
    %2184 = vadd.xlane.f32.xlu0 %v2183
    %v2185 = vpop.xlane.xlu0 %2184
    %v2186 = vsel %vm61, %v2130, 0.0
    %2187 = vadd.xlane.f32.xlu0 %v2186
    %v2188 = vpop.xlane.xlu0 %2187
    %v2189 = vsel %vm61, %v2131, 0.0
    %2190 = vadd.xlane.f32.xlu0 %v2189
    %v2191 = vpop.xlane.xlu0 %2190
    %v2192 = vsel %vm61, %v2132, 0.0
    %2193 = vadd.xlane.f32.xlu0 %v2192
    %v2194 = vpop.xlane.xlu0 %2193
    %v2195 = vsel %vm61, %v2133, 0.0
    %2196 = vadd.xlane.f32.xlu0 %v2195
    %v2197 = vpop.xlane.xlu0 %2196
    %v2198 = vsel %vm61, %v2134, 0.0
    %2199 = vadd.xlane.f32.xlu0 %v2198
    %v2200 = vpop.xlane.xlu0 %2199
    %v2201 = vsel %vm61, %v2135, 0.0
    %2202 = vadd.xlane.f32.xlu0 %v2201
    %v2203 = vpop.xlane.xlu0 %2202
    %v2204 = vsel %vm61, %v2136, 0.0
    %2205 = vadd.xlane.f32.xlu0 %v2204
    %v2206 = vpop.xlane.xlu0 %2205
    %v2207 = vsel %vm61, %v2137, 0.0
    %2208 = vadd.xlane.f32.xlu0 %v2207
    %v2209 = vpop.xlane.xlu0 %2208
    %v2210 = vsel %vm61, %v2138, 0.0
    %2211 = vadd.xlane.f32.xlu0 %v2210
    %v2212 = vpop.xlane.xlu0 %2211
    %v2213 = vsel %vm61, %v2139, 0.0
    %2214 = vadd.xlane.f32.xlu0 %v2213
    %v2215 = vpop.xlane.xlu0 %2214
    %v2216 = vsel %vm61, %v2140, 0.0
    %2217 = vadd.xlane.f32.xlu0 %v2216
    %v2218 = vpop.xlane.xlu0 %2217
    %v2219 = vsel %vm61, %v2141, 0.0
    %2220 = vadd.xlane.f32.xlu0 %v2219
    %v2221 = vpop.xlane.xlu0 %2220
    %v2222 = vsel %vm61, %v2142, 0.0
    %2223 = vadd.xlane.f32.xlu0 %v2222
    %v2224 = vpop.xlane.xlu0 %2223
    %v2225 = vsel %vm61, %v2143, 0.0
    %2226 = vadd.xlane.f32.xlu0 %v2225
    %v2227 = vpop.xlane.xlu0 %2226
    %v2228 = vsel %vm61, %v2144, 0.0
    %2229 = vadd.xlane.f32.xlu0 %v2228
    %v2230 = vpop.xlane.xlu0 %2229
    %v2231 = vsel %vm61, %v2145, 0.0
    %2232 = vadd.xlane.f32.xlu0 %v2231
    %v2233 = vpop.xlane.xlu0 %2232
    %v2234 = vsel %vm61, %v2146, 0.0
    %2235 = vadd.xlane.f32.xlu0 %v2234
    %v2236 = vpop.xlane.xlu0 %2235
    %v2237 = vsel %vm61, %v2147, 0.0
    %2238 = vadd.xlane.f32.xlu0 %v2237
    %v2239 = vpop.xlane.xlu0 %2238
    %v2240 = vsel %vm61, %v2148, 0.0
    %2241 = vadd.xlane.f32.xlu0 %v2240
    %v2242 = vpop.xlane.xlu0 %2241
    %v2243 = vsel %vm61, %v2149, 0.0
    %2244 = vadd.xlane.f32.xlu0 %v2243
    %v2245 = vpop.xlane.xlu0 %2244
    %v2278 = vlaneseq
    %v2279 = vshrl.u32 %v2278, 7
    %v2280 = vsub.s32 %v1156, %v2279
    %v2281 = vrot.slane %v2152, %v2280
    %v2282 = vlaneseq
    %v2283 = vshrl.u32 %v2282, 7
    %v2284 = vsub.s32 %v1161, %v2283
    %v2285 = vrot.slane %v2155, %v2284
    %v2286 = vsel %vm1166, %v2285, %v2281
    %v2287 = vlaneseq
    %v2288 = vshrl.u32 %v2287, 7
    %v2289 = vsub.s32 %v1168, %v2288
    %v2290 = vrot.slane %v2158, %v2289
    %v2291 = vsel %vm1173, %v2290, %v2286
    %v2292 = vlaneseq
    %v2293 = vshrl.u32 %v2292, 7
    %v2294 = vsub.s32 %v1175, %v2293
    %v2295 = vrot.slane %v2161, %v2294
    %v2296 = vsel %vm1180, %v2295, %v2291
    %v2297 = vlaneseq
    %v2298 = vshrl.u32 %v2297, 7
    %v2299 = vsub.s32 %v1156, %v2298
    %v2300 = vrot.slane %v2164, %v2299
    %v2301 = vlaneseq
    %v2302 = vshrl.u32 %v2301, 7
    %v2303 = vsub.s32 %v1161, %v2302
    %v2304 = vrot.slane %v2167, %v2303
    %v2305 = vsel %vm1166, %v2304, %v2300
    %v2306 = vlaneseq
    %v2307 = vshrl.u32 %v2306, 7
    %v2308 = vsub.s32 %v1168, %v2307
    %v2309 = vrot.slane %v2170, %v2308
    %v2310 = vsel %vm1173, %v2309, %v2305
    %v2311 = vlaneseq
    %v2312 = vshrl.u32 %v2311, 7
    %v2313 = vsub.s32 %v1175, %v2312
    %v2314 = vrot.slane %v2173, %v2313
    %v2315 = vsel %vm1180, %v2314, %v2310
    %v2316 = vlaneseq
    %v2317 = vshrl.u32 %v2316, 7
    %v2318 = vsub.s32 %v1156, %v2317
    %v2319 = vrot.slane %v2176, %v2318
    %v2320 = vlaneseq
    %v2321 = vshrl.u32 %v2320, 7
    %v2322 = vsub.s32 %v1161, %v2321
    %v2323 = vrot.slane %v2179, %v2322
    %v2324 = vsel %vm1166, %v2323, %v2319
    %v2325 = vlaneseq
    %v2326 = vshrl.u32 %v2325, 7
    %v2327 = vsub.s32 %v1168, %v2326
    %v2328 = vrot.slane %v2182, %v2327
    %v2329 = vsel %vm1173, %v2328, %v2324
    %v2330 = vlaneseq
    %v2331 = vshrl.u32 %v2330, 7
    %v2332 = vsub.s32 %v1175, %v2331
    %v2333 = vrot.slane %v2185, %v2332
    %v2334 = vsel %vm1180, %v2333, %v2329
    %v2335 = vlaneseq
    %v2336 = vshrl.u32 %v2335, 7
    %v2337 = vsub.s32 %v1156, %v2336
    %v2338 = vrot.slane %v2188, %v2337
    %v2339 = vlaneseq
    %v2340 = vshrl.u32 %v2339, 7
    %v2341 = vsub.s32 %v1161, %v2340
    %v2342 = vrot.slane %v2191, %v2341
    %v2343 = vsel %vm1166, %v2342, %v2338
    %v2344 = vlaneseq
    %v2345 = vshrl.u32 %v2344, 7
    %v2346 = vsub.s32 %v1168, %v2345
    %v2347 = vrot.slane %v2194, %v2346
    %v2348 = vsel %vm1173, %v2347, %v2343
    %v2349 = vlaneseq
    %v2350 = vshrl.u32 %v2349, 7
    %v2351 = vsub.s32 %v1175, %v2350
    %v2352 = vrot.slane %v2197, %v2351
    %v2353 = vsel %vm1180, %v2352, %v2348
    %v2354 = vlaneseq
    %v2355 = vshrl.u32 %v2354, 7
    %v2356 = vsub.s32 %v1156, %v2355
    %v2357 = vrot.slane %v2200, %v2356
    %v2358 = vlaneseq
    %v2359 = vshrl.u32 %v2358, 7
    %v2360 = vsub.s32 %v1161, %v2359
    %v2361 = vrot.slane %v2203, %v2360
    %v2362 = vsel %vm1166, %v2361, %v2357
    %v2363 = vlaneseq
    %v2364 = vshrl.u32 %v2363, 7
    %v2365 = vsub.s32 %v1168, %v2364
    %v2366 = vrot.slane %v2206, %v2365
    %v2367 = vsel %vm1173, %v2366, %v2362
    %v2368 = vlaneseq
    %v2369 = vshrl.u32 %v2368, 7
    %v2370 = vsub.s32 %v1175, %v2369
    %v2371 = vrot.slane %v2209, %v2370
    %v2372 = vsel %vm1180, %v2371, %v2367
    %v2373 = vlaneseq
    %v2374 = vshrl.u32 %v2373, 7
    %v2375 = vsub.s32 %v1156, %v2374
    %v2376 = vrot.slane %v2212, %v2375
    %v2377 = vlaneseq
    %v2378 = vshrl.u32 %v2377, 7
    %v2379 = vsub.s32 %v1161, %v2378
    %v2380 = vrot.slane %v2215, %v2379
    %v2381 = vsel %vm1166, %v2380, %v2376
    %v2382 = vlaneseq
    %v2383 = vshrl.u32 %v2382, 7
    %v2384 = vsub.s32 %v1168, %v2383
    %v2385 = vrot.slane %v2218, %v2384
    %v2386 = vsel %vm1173, %v2385, %v2381
    %v2387 = vlaneseq
    %v2388 = vshrl.u32 %v2387, 7
    %v2389 = vsub.s32 %v1175, %v2388
    %v2390 = vrot.slane %v2221, %v2389
    %v2391 = vsel %vm1180, %v2390, %v2386
    %v2392 = vlaneseq
    %v2393 = vshrl.u32 %v2392, 7
    %v2394 = vsub.s32 %v1156, %v2393
    %v2395 = vrot.slane %v2224, %v2394
    %v2396 = vlaneseq
    %v2397 = vshrl.u32 %v2396, 7
    %v2398 = vsub.s32 %v1161, %v2397
    %v2399 = vrot.slane %v2227, %v2398
    %v2400 = vsel %vm1166, %v2399, %v2395
    %v2401 = vlaneseq
    %v2402 = vshrl.u32 %v2401, 7
    %v2403 = vsub.s32 %v1168, %v2402
    %v2404 = vrot.slane %v2230, %v2403
    %v2405 = vsel %vm1173, %v2404, %v2400
    %v2406 = vlaneseq
    %v2407 = vshrl.u32 %v2406, 7
    %v2408 = vsub.s32 %v1175, %v2407
    %v2409 = vrot.slane %v2233, %v2408
    %v2410 = vsel %vm1180, %v2409, %v2405
    %v2411 = vlaneseq
    %v2412 = vshrl.u32 %v2411, 7
    %v2413 = vsub.s32 %v1156, %v2412
    %v2414 = vrot.slane %v2236, %v2413
    %v2415 = vlaneseq
    %v2416 = vshrl.u32 %v2415, 7
    %v2417 = vsub.s32 %v1161, %v2416
    %v2418 = vrot.slane %v2239, %v2417
    %v2419 = vsel %vm1166, %v2418, %v2414
    %v2420 = vlaneseq
    %v2421 = vshrl.u32 %v2420, 7
    %v2422 = vsub.s32 %v1168, %v2421
    %v2423 = vrot.slane %v2242, %v2422
    %v2424 = vsel %vm1173, %v2423, %v2419
    %v2425 = vlaneseq
    %v2426 = vshrl.u32 %v2425, 7
    %v2427 = vsub.s32 %v1175, %v2426
    %v2428 = vrot.slane %v2245, %v2427
    %v2429 = vsel %vm1180, %v2428, %v2424
    %v2430 = vsel %vm1182, %v2315, %v2296
    %v2431 = vsel %vm1183, %v2334, %v2430
    %v2432 = vsel %vm1185, %v2353, %v2431
    %v2433 = vsel %vm1187, %v2372, %v2432
    %v2434 = vsel %vm1189, %v2391, %v2433
    %v2435 = vsel %vm1191, %v2410, %v2434
    %v2436 = vsel %vm1193, %v2429, %v2435
    %v2438 = vadd.f32 %v2027, %v2436
    %v2439 = vtanh.pop %v2438
    %s2440 = scalar_lea.vmem [#allocation2], 32
    %v2441 = vld [vmem:[%s2440] sm:$0xff]
    %v2443 = vcombine.high %v2439, %v2439
    %v2445 = vunpack.c.l.s4 1966171168
    %v2446 = vunpack.c.0.s8 %v2445
    %v2447 = vlaneseq
    %v2448 = vshrl.u32 %v2447, 7
    %v2449 = vsub.s32 %v2446, %v2448
    %v2450 = vrot.slane %v2439, %v2449
    %v2452 = vunpack.c.l.s4 1966171168
    %v2453 = vunpack.c.0.s8 %v2452
    %v2454 = vlaneseq
    %v2455 = vshrl.u32 %v2454, 7
    %v2456 = vsub.s32 %v2453, %v2455
    %v2457 = vrot.slane %v2443, %v2456
    %v2458 = vcombine.high %v2450, %v2450
    %v2459 = vcombine.high %v2457, %v2457
    %v2461 = vunpack.c.l.s4 1966171168
    %v2462 = vunpack.c.0.s8 %v2461
    %v2463 = vlaneseq
    %v2464 = vshrl.u32 %v2463, 7
    %v2465 = vsub.s32 %v2462, %v2464
    %v2466 = vrot.slane %v2450, %v2465
    %v2468 = vunpack.c.l.s4 1966171168
    %v2469 = vunpack.c.0.s8 %v2468
    %v2470 = vlaneseq
    %v2471 = vshrl.u32 %v2470, 7
    %v2472 = vsub.s32 %v2469, %v2471
    %v2473 = vrot.slane %v2457, %v2472
    %v2475 = vunpack.c.l.s4 1966171168
    %v2476 = vunpack.c.0.s8 %v2475
    %v2477 = vlaneseq
    %v2478 = vshrl.u32 %v2477, 7
    %v2479 = vsub.s32 %v2476, %v2478
    %v2480 = vrot.slane %v2458, %v2479
    %v2482 = vunpack.c.l.s4 1966171168
    %v2483 = vunpack.c.0.s8 %v2482
    %v2484 = vlaneseq
    %v2485 = vshrl.u32 %v2484, 7
    %v2486 = vsub.s32 %v2483, %v2485
    %v2487 = vrot.slane %v2459, %v2486
    %v2488 = vcombine.high %v2466, %v2466
    %v2489 = vcombine.high %v2473, %v2473
    %v2490 = vcombine.high %v2480, %v2480
    %v2491 = vcombine.high %v2487, %v2487
    %v2492 = vlaneseq
    %v2493 = vshrl.u32 %v2492, 7
    %v2494 = vsub.s32 0, %v2493
    %v2495 = vrot.slane %v2466, %v2494
    %v2496 = vlaneseq
    %v2497 = vshrl.u32 %v2496, 7
    %v2498 = vsub.s32 0, %v2497
    %v2499 = vrot.slane %v2480, %v2498
    %v2500 = vlaneseq
    %v2501 = vshrl.u32 %v2500, 7
    %v2502 = vsub.s32 0, %v2501
    %v2503 = vrot.slane %v2488, %v2502
    %v2504 = vlaneseq
    %v2505 = vshrl.u32 %v2504, 7
    %v2506 = vsub.s32 0, %v2505
    %v2507 = vrot.slane %v2490, %v2506
    %v2508 = vlaneseq
    %v2509 = vshrl.u32 %v2508, 7
    %v2510 = vsub.s32 0, %v2509
    %v2511 = vrot.slane %v2473, %v2510
    %v2512 = vlaneseq
    %v2513 = vshrl.u32 %v2512, 7
    %v2514 = vsub.s32 0, %v2513
    %v2515 = vrot.slane %v2487, %v2514
    %v2516 = vlaneseq
    %v2517 = vshrl.u32 %v2516, 7
    %v2518 = vsub.s32 0, %v2517
    %v2519 = vrot.slane %v2489, %v2518
    %v2520 = vlaneseq
    %v2521 = vshrl.u32 %v2520, 7
    %v2522 = vsub.s32 0, %v2521
    %v2523 = vrot.slane %v2491, %v2522
    %v2532 = vmul.f32 %v2495, %v37
    %v2533 = vmul.f32 %v2495, %v38
    %v2534 = vmul.f32 %v2495, %v39
    %v2535 = vmul.f32 %v2495, %v40
    %v2536 = vmul.f32 %v2499, %v37
    %v2537 = vmul.f32 %v2499, %v38
    %v2538 = vmul.f32 %v2499, %v39
    %v2539 = vmul.f32 %v2499, %v40
    %v2540 = vmul.f32 %v2503, %v37
    %v2541 = vmul.f32 %v2503, %v38
    %v2542 = vmul.f32 %v2503, %v39
    %v2543 = vmul.f32 %v2503, %v40
    %v2544 = vmul.f32 %v2507, %v37
    %v2545 = vmul.f32 %v2507, %v38
    %v2546 = vmul.f32 %v2507, %v39
    %v2547 = vmul.f32 %v2507, %v40
    %v2548 = vmul.f32 %v2511, %v37
    %v2549 = vmul.f32 %v2511, %v38
    %v2550 = vmul.f32 %v2511, %v39
    %v2551 = vmul.f32 %v2511, %v40
    %v2552 = vmul.f32 %v2515, %v37
    %v2553 = vmul.f32 %v2515, %v38
    %v2554 = vmul.f32 %v2515, %v39
    %v2555 = vmul.f32 %v2515, %v40
    %v2556 = vmul.f32 %v2519, %v37
    %v2557 = vmul.f32 %v2519, %v38
    %v2558 = vmul.f32 %v2519, %v39
    %v2559 = vmul.f32 %v2519, %v40
    %v2560 = vmul.f32 %v2523, %v37
    %v2561 = vmul.f32 %v2523, %v38
    %v2562 = vmul.f32 %v2523, %v39
    %v2563 = vmul.f32 %v2523, %v40
    %v2564 = vsel %vm61, %v2532, 0.0
    %2565 = vadd.xlane.f32.xlu0 %v2564
    %v2566 = vpop.xlane.xlu0 %2565
    %v2567 = vsel %vm61, %v2533, 0.0
    %2568 = vadd.xlane.f32.xlu0 %v2567
    %v2569 = vpop.xlane.xlu0 %2568
    %v2570 = vsel %vm61, %v2534, 0.0
    %2571 = vadd.xlane.f32.xlu0 %v2570
    %v2572 = vpop.xlane.xlu0 %2571
    %v2573 = vsel %vm61, %v2535, 0.0
    %2574 = vadd.xlane.f32.xlu0 %v2573
    %v2575 = vpop.xlane.xlu0 %2574
    %v2576 = vsel %vm61, %v2536, 0.0
    %2577 = vadd.xlane.f32.xlu0 %v2576
    %v2578 = vpop.xlane.xlu0 %2577
    %v2579 = vsel %vm61, %v2537, 0.0
    %2580 = vadd.xlane.f32.xlu0 %v2579
    %v2581 = vpop.xlane.xlu0 %2580
    %v2582 = vsel %vm61, %v2538, 0.0
    %2583 = vadd.xlane.f32.xlu0 %v2582
    %v2584 = vpop.xlane.xlu0 %2583
    %v2585 = vsel %vm61, %v2539, 0.0
    %2586 = vadd.xlane.f32.xlu0 %v2585
    %v2587 = vpop.xlane.xlu0 %2586
    %v2588 = vsel %vm61, %v2540, 0.0
    %2589 = vadd.xlane.f32.xlu0 %v2588
    %v2590 = vpop.xlane.xlu0 %2589
    %v2591 = vsel %vm61, %v2541, 0.0
    %2592 = vadd.xlane.f32.xlu0 %v2591
    %v2593 = vpop.xlane.xlu0 %2592
    %v2594 = vsel %vm61, %v2542, 0.0
    %2595 = vadd.xlane.f32.xlu0 %v2594
    %v2596 = vpop.xlane.xlu0 %2595
    %v2597 = vsel %vm61, %v2543, 0.0
    %2598 = vadd.xlane.f32.xlu0 %v2597
    %v2599 = vpop.xlane.xlu0 %2598
    %v2600 = vsel %vm61, %v2544, 0.0
    %2601 = vadd.xlane.f32.xlu0 %v2600
    %v2602 = vpop.xlane.xlu0 %2601
    %v2603 = vsel %vm61, %v2545, 0.0
    %2604 = vadd.xlane.f32.xlu0 %v2603
    %v2605 = vpop.xlane.xlu0 %2604
    %v2606 = vsel %vm61, %v2546, 0.0
    %2607 = vadd.xlane.f32.xlu0 %v2606
    %v2608 = vpop.xlane.xlu0 %2607
    %v2609 = vsel %vm61, %v2547, 0.0
    %2610 = vadd.xlane.f32.xlu0 %v2609
    %v2611 = vpop.xlane.xlu0 %2610
    %v2612 = vsel %vm61, %v2548, 0.0
    %2613 = vadd.xlane.f32.xlu0 %v2612
    %v2614 = vpop.xlane.xlu0 %2613
    %v2615 = vsel %vm61, %v2549, 0.0
    %2616 = vadd.xlane.f32.xlu0 %v2615
    %v2617 = vpop.xlane.xlu0 %2616
    %v2618 = vsel %vm61, %v2550, 0.0
    %2619 = vadd.xlane.f32.xlu0 %v2618
    %v2620 = vpop.xlane.xlu0 %2619
    %v2621 = vsel %vm61, %v2551, 0.0
    %2622 = vadd.xlane.f32.xlu0 %v2621
    %v2623 = vpop.xlane.xlu0 %2622
    %v2624 = vsel %vm61, %v2552, 0.0
    %2625 = vadd.xlane.f32.xlu0 %v2624
    %v2626 = vpop.xlane.xlu0 %2625
    %v2627 = vsel %vm61, %v2553, 0.0
    %2628 = vadd.xlane.f32.xlu0 %v2627
    %v2629 = vpop.xlane.xlu0 %2628
    %v2630 = vsel %vm61, %v2554, 0.0
    %2631 = vadd.xlane.f32.xlu0 %v2630
    %v2632 = vpop.xlane.xlu0 %2631
    %v2633 = vsel %vm61, %v2555, 0.0
    %2634 = vadd.xlane.f32.xlu0 %v2633
    %v2635 = vpop.xlane.xlu0 %2634
    %v2636 = vsel %vm61, %v2556, 0.0
    %2637 = vadd.xlane.f32.xlu0 %v2636
    %v2638 = vpop.xlane.xlu0 %2637
    %v2639 = vsel %vm61, %v2557, 0.0
    %2640 = vadd.xlane.f32.xlu0 %v2639
    %v2641 = vpop.xlane.xlu0 %2640
    %v2642 = vsel %vm61, %v2558, 0.0
    %2643 = vadd.xlane.f32.xlu0 %v2642
    %v2644 = vpop.xlane.xlu0 %2643
    %v2645 = vsel %vm61, %v2559, 0.0
    %2646 = vadd.xlane.f32.xlu0 %v2645
    %v2647 = vpop.xlane.xlu0 %2646
    %v2648 = vsel %vm61, %v2560, 0.0
    %2649 = vadd.xlane.f32.xlu0 %v2648
    %v2650 = vpop.xlane.xlu0 %2649
    %v2651 = vsel %vm61, %v2561, 0.0
    %2652 = vadd.xlane.f32.xlu0 %v2651
    %v2653 = vpop.xlane.xlu0 %2652
    %v2654 = vsel %vm61, %v2562, 0.0
    %2655 = vadd.xlane.f32.xlu0 %v2654
    %v2656 = vpop.xlane.xlu0 %2655
    %v2657 = vsel %vm61, %v2563, 0.0
    %2658 = vadd.xlane.f32.xlu0 %v2657
    %v2659 = vpop.xlane.xlu0 %2658
    %v2692 = vlaneseq
    %v2693 = vshrl.u32 %v2692, 7
    %v2694 = vsub.s32 %v1156, %v2693
    %v2695 = vrot.slane %v2566, %v2694
    %v2696 = vlaneseq
    %v2697 = vshrl.u32 %v2696, 7
    %v2698 = vsub.s32 %v1161, %v2697
    %v2699 = vrot.slane %v2569, %v2698
    %v2700 = vsel %vm1166, %v2699, %v2695
    %v2701 = vlaneseq
    %v2702 = vshrl.u32 %v2701, 7
    %v2703 = vsub.s32 %v1168, %v2702
    %v2704 = vrot.slane %v2572, %v2703
    %v2705 = vsel %vm1173, %v2704, %v2700
    %v2706 = vlaneseq
    %v2707 = vshrl.u32 %v2706, 7
    %v2708 = vsub.s32 %v1175, %v2707
    %v2709 = vrot.slane %v2575, %v2708
    %v2710 = vsel %vm1180, %v2709, %v2705
    %v2711 = vlaneseq
    %v2712 = vshrl.u32 %v2711, 7
    %v2713 = vsub.s32 %v1156, %v2712
    %v2714 = vrot.slane %v2578, %v2713
    %v2715 = vlaneseq
    %v2716 = vshrl.u32 %v2715, 7
    %v2717 = vsub.s32 %v1161, %v2716
    %v2718 = vrot.slane %v2581, %v2717
    %v2719 = vsel %vm1166, %v2718, %v2714
    %v2720 = vlaneseq
    %v2721 = vshrl.u32 %v2720, 7
    %v2722 = vsub.s32 %v1168, %v2721
    %v2723 = vrot.slane %v2584, %v2722
    %v2724 = vsel %vm1173, %v2723, %v2719
    %v2725 = vlaneseq
    %v2726 = vshrl.u32 %v2725, 7
    %v2727 = vsub.s32 %v1175, %v2726
    %v2728 = vrot.slane %v2587, %v2727
    %v2729 = vsel %vm1180, %v2728, %v2724
    %v2730 = vlaneseq
    %v2731 = vshrl.u32 %v2730, 7
    %v2732 = vsub.s32 %v1156, %v2731
    %v2733 = vrot.slane %v2590, %v2732
    %v2734 = vlaneseq
    %v2735 = vshrl.u32 %v2734, 7
    %v2736 = vsub.s32 %v1161, %v2735
    %v2737 = vrot.slane %v2593, %v2736
    %v2738 = vsel %vm1166, %v2737, %v2733
    %v2739 = vlaneseq
    %v2740 = vshrl.u32 %v2739, 7
    %v2741 = vsub.s32 %v1168, %v2740
    %v2742 = vrot.slane %v2596, %v2741
    %v2743 = vsel %vm1173, %v2742, %v2738
    %v2744 = vlaneseq
    %v2745 = vshrl.u32 %v2744, 7
    %v2746 = vsub.s32 %v1175, %v2745
    %v2747 = vrot.slane %v2599, %v2746
    %v2748 = vsel %vm1180, %v2747, %v2743
    %v2749 = vlaneseq
    %v2750 = vshrl.u32 %v2749, 7
    %v2751 = vsub.s32 %v1156, %v2750
    %v2752 = vrot.slane %v2602, %v2751
    %v2753 = vlaneseq
    %v2754 = vshrl.u32 %v2753, 7
    %v2755 = vsub.s32 %v1161, %v2754
    %v2756 = vrot.slane %v2605, %v2755
    %v2757 = vsel %vm1166, %v2756, %v2752
    %v2758 = vlaneseq
    %v2759 = vshrl.u32 %v2758, 7
    %v2760 = vsub.s32 %v1168, %v2759
    %v2761 = vrot.slane %v2608, %v2760
    %v2762 = vsel %vm1173, %v2761, %v2757
    %v2763 = vlaneseq
    %v2764 = vshrl.u32 %v2763, 7
    %v2765 = vsub.s32 %v1175, %v2764
    %v2766 = vrot.slane %v2611, %v2765
    %v2767 = vsel %vm1180, %v2766, %v2762
    %v2768 = vlaneseq
    %v2769 = vshrl.u32 %v2768, 7
    %v2770 = vsub.s32 %v1156, %v2769
    %v2771 = vrot.slane %v2614, %v2770
    %v2772 = vlaneseq
    %v2773 = vshrl.u32 %v2772, 7
    %v2774 = vsub.s32 %v1161, %v2773
    %v2775 = vrot.slane %v2617, %v2774
    %v2776 = vsel %vm1166, %v2775, %v2771
    %v2777 = vlaneseq
    %v2778 = vshrl.u32 %v2777, 7
    %v2779 = vsub.s32 %v1168, %v2778
    %v2780 = vrot.slane %v2620, %v2779
    %v2781 = vsel %vm1173, %v2780, %v2776
    %v2782 = vlaneseq
    %v2783 = vshrl.u32 %v2782, 7
    %v2784 = vsub.s32 %v1175, %v2783
    %v2785 = vrot.slane %v2623, %v2784
    %v2786 = vsel %vm1180, %v2785, %v2781
    %v2787 = vlaneseq
    %v2788 = vshrl.u32 %v2787, 7
    %v2789 = vsub.s32 %v1156, %v2788
    %v2790 = vrot.slane %v2626, %v2789
    %v2791 = vlaneseq
    %v2792 = vshrl.u32 %v2791, 7
    %v2793 = vsub.s32 %v1161, %v2792
    %v2794 = vrot.slane %v2629, %v2793
    %v2795 = vsel %vm1166, %v2794, %v2790
    %v2796 = vlaneseq
    %v2797 = vshrl.u32 %v2796, 7
    %v2798 = vsub.s32 %v1168, %v2797
    %v2799 = vrot.slane %v2632, %v2798
    %v2800 = vsel %vm1173, %v2799, %v2795
    %v2801 = vlaneseq
    %v2802 = vshrl.u32 %v2801, 7
    %v2803 = vsub.s32 %v1175, %v2802
    %v2804 = vrot.slane %v2635, %v2803
    %v2805 = vsel %vm1180, %v2804, %v2800
    %v2806 = vlaneseq
    %v2807 = vshrl.u32 %v2806, 7
    %v2808 = vsub.s32 %v1156, %v2807
    %v2809 = vrot.slane %v2638, %v2808
    %v2810 = vlaneseq
    %v2811 = vshrl.u32 %v2810, 7
    %v2812 = vsub.s32 %v1161, %v2811
    %v2813 = vrot.slane %v2641, %v2812
    %v2814 = vsel %vm1166, %v2813, %v2809
    %v2815 = vlaneseq
    %v2816 = vshrl.u32 %v2815, 7
    %v2817 = vsub.s32 %v1168, %v2816
    %v2818 = vrot.slane %v2644, %v2817
    %v2819 = vsel %vm1173, %v2818, %v2814
    %v2820 = vlaneseq
    %v2821 = vshrl.u32 %v2820, 7
    %v2822 = vsub.s32 %v1175, %v2821
    %v2823 = vrot.slane %v2647, %v2822
    %v2824 = vsel %vm1180, %v2823, %v2819
    %v2825 = vlaneseq
    %v2826 = vshrl.u32 %v2825, 7
    %v2827 = vsub.s32 %v1156, %v2826
    %v2828 = vrot.slane %v2650, %v2827
    %v2829 = vlaneseq
    %v2830 = vshrl.u32 %v2829, 7
    %v2831 = vsub.s32 %v1161, %v2830
    %v2832 = vrot.slane %v2653, %v2831
    %v2833 = vsel %vm1166, %v2832, %v2828
    %v2834 = vlaneseq
    %v2835 = vshrl.u32 %v2834, 7
    %v2836 = vsub.s32 %v1168, %v2835
    %v2837 = vrot.slane %v2656, %v2836
    %v2838 = vsel %vm1173, %v2837, %v2833
    %v2839 = vlaneseq
    %v2840 = vshrl.u32 %v2839, 7
    %v2841 = vsub.s32 %v1175, %v2840
    %v2842 = vrot.slane %v2659, %v2841
    %v2843 = vsel %vm1180, %v2842, %v2838
    %v2844 = vsel %vm1182, %v2729, %v2710
    %v2845 = vsel %vm1183, %v2748, %v2844
    %v2846 = vsel %vm1185, %v2767, %v2845
    %v2847 = vsel %vm1187, %v2786, %v2846
    %v2848 = vsel %vm1189, %v2805, %v2847
    %v2849 = vsel %vm1191, %v2824, %v2848
    %v2850 = vsel %vm1193, %v2843, %v2849
    %v2852 = vadd.f32 %v2441, %v2850
    %v2853 = vtanh.pop %v2852
    %s2854 = scalar_lea.vmem [#allocation2], 40
    %v2855 = vld [vmem:[%s2854] sm:$0xff]
    %v2857 = vcombine.high %v2853, %v2853
    %v2859 = vunpack.c.l.s4 1966171168
    %v2860 = vunpack.c.0.s8 %v2859
    %v2861 = vlaneseq
    %v2862 = vshrl.u32 %v2861, 7
    %v2863 = vsub.s32 %v2860, %v2862
    %v2864 = vrot.slane %v2853, %v2863
    %v2866 = vunpack.c.l.s4 1966171168
    %v2867 = vunpack.c.0.s8 %v2866
    %v2868 = vlaneseq
    %v2869 = vshrl.u32 %v2868, 7
    %v2870 = vsub.s32 %v2867, %v2869
    %v2871 = vrot.slane %v2857, %v2870
    %v2872 = vcombine.high %v2864, %v2864
    %v2873 = vcombine.high %v2871, %v2871
    %v2875 = vunpack.c.l.s4 1966171168
    %v2876 = vunpack.c.0.s8 %v2875
    %v2877 = vlaneseq
    %v2878 = vshrl.u32 %v2877, 7
    %v2879 = vsub.s32 %v2876, %v2878
    %v2880 = vrot.slane %v2864, %v2879
    %v2882 = vunpack.c.l.s4 1966171168
    %v2883 = vunpack.c.0.s8 %v2882
    %v2884 = vlaneseq
    %v2885 = vshrl.u32 %v2884, 7
    %v2886 = vsub.s32 %v2883, %v2885
    %v2887 = vrot.slane %v2871, %v2886
    %v2889 = vunpack.c.l.s4 1966171168
    %v2890 = vunpack.c.0.s8 %v2889
    %v2891 = vlaneseq
    %v2892 = vshrl.u32 %v2891, 7
    %v2893 = vsub.s32 %v2890, %v2892
    %v2894 = vrot.slane %v2872, %v2893
    %v2896 = vunpack.c.l.s4 1966171168
    %v2897 = vunpack.c.0.s8 %v2896
    %v2898 = vlaneseq
    %v2899 = vshrl.u32 %v2898, 7
    %v2900 = vsub.s32 %v2897, %v2899
    %v2901 = vrot.slane %v2873, %v2900
    %v2902 = vcombine.high %v2880, %v2880
    %v2903 = vcombine.high %v2887, %v2887
    %v2904 = vcombine.high %v2894, %v2894
    %v2905 = vcombine.high %v2901, %v2901
    %v2906 = vlaneseq
    %v2907 = vshrl.u32 %v2906, 7
    %v2908 = vsub.s32 0, %v2907
    %v2909 = vrot.slane %v2880, %v2908
    %v2910 = vlaneseq
    %v2911 = vshrl.u32 %v2910, 7
    %v2912 = vsub.s32 0, %v2911
    %v2913 = vrot.slane %v2894, %v2912
    %v2914 = vlaneseq
    %v2915 = vshrl.u32 %v2914, 7
    %v2916 = vsub.s32 0, %v2915
    %v2917 = vrot.slane %v2902, %v2916
    %v2918 = vlaneseq
    %v2919 = vshrl.u32 %v2918, 7
    %v2920 = vsub.s32 0, %v2919
    %v2921 = vrot.slane %v2904, %v2920
    %v2922 = vlaneseq
    %v2923 = vshrl.u32 %v2922, 7
    %v2924 = vsub.s32 0, %v2923
    %v2925 = vrot.slane %v2887, %v2924
    %v2926 = vlaneseq
    %v2927 = vshrl.u32 %v2926, 7
    %v2928 = vsub.s32 0, %v2927
    %v2929 = vrot.slane %v2901, %v2928
    %v2930 = vlaneseq
    %v2931 = vshrl.u32 %v2930, 7
    %v2932 = vsub.s32 0, %v2931
    %v2933 = vrot.slane %v2903, %v2932
    %v2934 = vlaneseq
    %v2935 = vshrl.u32 %v2934, 7
    %v2936 = vsub.s32 0, %v2935
    %v2937 = vrot.slane %v2905, %v2936
    %v2946 = vmul.f32 %v2909, %v37
    %v2947 = vmul.f32 %v2909, %v38
    %v2948 = vmul.f32 %v2909, %v39
    %v2949 = vmul.f32 %v2909, %v40
    %v2950 = vmul.f32 %v2913, %v37
    %v2951 = vmul.f32 %v2913, %v38
    %v2952 = vmul.f32 %v2913, %v39
    %v2953 = vmul.f32 %v2913, %v40
    %v2954 = vmul.f32 %v2917, %v37
    %v2955 = vmul.f32 %v2917, %v38
    %v2956 = vmul.f32 %v2917, %v39
    %v2957 = vmul.f32 %v2917, %v40
    %v2958 = vmul.f32 %v2921, %v37
    %v2959 = vmul.f32 %v2921, %v38
    %v2960 = vmul.f32 %v2921, %v39
    %v2961 = vmul.f32 %v2921, %v40
    %v2962 = vmul.f32 %v2925, %v37
    %v2963 = vmul.f32 %v2925, %v38
    %v2964 = vmul.f32 %v2925, %v39
    %v2965 = vmul.f32 %v2925, %v40
    %v2966 = vmul.f32 %v2929, %v37
    %v2967 = vmul.f32 %v2929, %v38
    %v2968 = vmul.f32 %v2929, %v39
    %v2969 = vmul.f32 %v2929, %v40
    %v2970 = vmul.f32 %v2933, %v37
    %v2971 = vmul.f32 %v2933, %v38
    %v2972 = vmul.f32 %v2933, %v39
    %v2973 = vmul.f32 %v2933, %v40
    %v2974 = vmul.f32 %v2937, %v37
    %v2975 = vmul.f32 %v2937, %v38
    %v2976 = vmul.f32 %v2937, %v39
    %v2977 = vmul.f32 %v2937, %v40
    %v2978 = vsel %vm61, %v2946, 0.0
    %2979 = vadd.xlane.f32.xlu0 %v2978
    %v2980 = vpop.xlane.xlu0 %2979
    %v2981 = vsel %vm61, %v2947, 0.0
    %2982 = vadd.xlane.f32.xlu0 %v2981
    %v2983 = vpop.xlane.xlu0 %2982
    %v2984 = vsel %vm61, %v2948, 0.0
    %2985 = vadd.xlane.f32.xlu0 %v2984
    %v2986 = vpop.xlane.xlu0 %2985
    %v2987 = vsel %vm61, %v2949, 0.0
    %2988 = vadd.xlane.f32.xlu0 %v2987
    %v2989 = vpop.xlane.xlu0 %2988
    %v2990 = vsel %vm61, %v2950, 0.0
    %2991 = vadd.xlane.f32.xlu0 %v2990
    %v2992 = vpop.xlane.xlu0 %2991
    %v2993 = vsel %vm61, %v2951, 0.0
    %2994 = vadd.xlane.f32.xlu0 %v2993
    %v2995 = vpop.xlane.xlu0 %2994
    %v2996 = vsel %vm61, %v2952, 0.0
    %2997 = vadd.xlane.f32.xlu0 %v2996
    %v2998 = vpop.xlane.xlu0 %2997
    %v2999 = vsel %vm61, %v2953, 0.0
    %3000 = vadd.xlane.f32.xlu0 %v2999
    %v3001 = vpop.xlane.xlu0 %3000
    %v3002 = vsel %vm61, %v2954, 0.0
    %3003 = vadd.xlane.f32.xlu0 %v3002
    %v3004 = vpop.xlane.xlu0 %3003
    %v3005 = vsel %vm61, %v2955, 0.0
    %3006 = vadd.xlane.f32.xlu0 %v3005
    %v3007 = vpop.xlane.xlu0 %3006
    %v3008 = vsel %vm61, %v2956, 0.0
    %3009 = vadd.xlane.f32.xlu0 %v3008
    %v3010 = vpop.xlane.xlu0 %3009
    %v3011 = vsel %vm61, %v2957, 0.0
    %3012 = vadd.xlane.f32.xlu0 %v3011
    %v3013 = vpop.xlane.xlu0 %3012
    %v3014 = vsel %vm61, %v2958, 0.0
    %3015 = vadd.xlane.f32.xlu0 %v3014
    %v3016 = vpop.xlane.xlu0 %3015
    %v3017 = vsel %vm61, %v2959, 0.0
    %3018 = vadd.xlane.f32.xlu0 %v3017
    %v3019 = vpop.xlane.xlu0 %3018
    %v3020 = vsel %vm61, %v2960, 0.0
    %3021 = vadd.xlane.f32.xlu0 %v3020
    %v3022 = vpop.xlane.xlu0 %3021
    %v3023 = vsel %vm61, %v2961, 0.0
    %3024 = vadd.xlane.f32.xlu0 %v3023
    %v3025 = vpop.xlane.xlu0 %3024
    %v3026 = vsel %vm61, %v2962, 0.0
    %3027 = vadd.xlane.f32.xlu0 %v3026
    %v3028 = vpop.xlane.xlu0 %3027
    %v3029 = vsel %vm61, %v2963, 0.0
    %3030 = vadd.xlane.f32.xlu0 %v3029
    %v3031 = vpop.xlane.xlu0 %3030
    %v3032 = vsel %vm61, %v2964, 0.0
    %3033 = vadd.xlane.f32.xlu0 %v3032
    %v3034 = vpop.xlane.xlu0 %3033
    %v3035 = vsel %vm61, %v2965, 0.0
    %3036 = vadd.xlane.f32.xlu0 %v3035
    %v3037 = vpop.xlane.xlu0 %3036
    %v3038 = vsel %vm61, %v2966, 0.0
    %3039 = vadd.xlane.f32.xlu0 %v3038
    %v3040 = vpop.xlane.xlu0 %3039
    %v3041 = vsel %vm61, %v2967, 0.0
    %3042 = vadd.xlane.f32.xlu0 %v3041
    %v3043 = vpop.xlane.xlu0 %3042
    %v3044 = vsel %vm61, %v2968, 0.0
    %3045 = vadd.xlane.f32.xlu0 %v3044
    %v3046 = vpop.xlane.xlu0 %3045
    %v3047 = vsel %vm61, %v2969, 0.0
    %3048 = vadd.xlane.f32.xlu0 %v3047
    %v3049 = vpop.xlane.xlu0 %3048
    %v3050 = vsel %vm61, %v2970, 0.0
    %3051 = vadd.xlane.f32.xlu0 %v3050
    %v3052 = vpop.xlane.xlu0 %3051
    %v3053 = vsel %vm61, %v2971, 0.0
    %3054 = vadd.xlane.f32.xlu0 %v3053
    %v3055 = vpop.xlane.xlu0 %3054
    %v3056 = vsel %vm61, %v2972, 0.0
    %3057 = vadd.xlane.f32.xlu0 %v3056
    %v3058 = vpop.xlane.xlu0 %3057
    %v3059 = vsel %vm61, %v2973, 0.0
    %3060 = vadd.xlane.f32.xlu0 %v3059
    %v3061 = vpop.xlane.xlu0 %3060
    %v3062 = vsel %vm61, %v2974, 0.0
    %3063 = vadd.xlane.f32.xlu0 %v3062
    %v3064 = vpop.xlane.xlu0 %3063
    %v3065 = vsel %vm61, %v2975, 0.0
    %3066 = vadd.xlane.f32.xlu0 %v3065
    %v3067 = vpop.xlane.xlu0 %3066
    %v3068 = vsel %vm61, %v2976, 0.0
    %3069 = vadd.xlane.f32.xlu0 %v3068
    %v3070 = vpop.xlane.xlu0 %3069
    %v3071 = vsel %vm61, %v2977, 0.0
    %3072 = vadd.xlane.f32.xlu0 %v3071
    %v3073 = vpop.xlane.xlu0 %3072
    %v3106 = vlaneseq
    %v3107 = vshrl.u32 %v3106, 7
    %v3108 = vsub.s32 %v1156, %v3107
    %v3109 = vrot.slane %v2980, %v3108
    %v3110 = vlaneseq
    %v3111 = vshrl.u32 %v3110, 7
    %v3112 = vsub.s32 %v1161, %v3111
    %v3113 = vrot.slane %v2983, %v3112
    %v3114 = vsel %vm1166, %v3113, %v3109
    %v3115 = vlaneseq
    %v3116 = vshrl.u32 %v3115, 7
    %v3117 = vsub.s32 %v1168, %v3116
    %v3118 = vrot.slane %v2986, %v3117
    %v3119 = vsel %vm1173, %v3118, %v3114
    %v3120 = vlaneseq
    %v3121 = vshrl.u32 %v3120, 7
    %v3122 = vsub.s32 %v1175, %v3121
    %v3123 = vrot.slane %v2989, %v3122
    %v3124 = vsel %vm1180, %v3123, %v3119
    %v3125 = vlaneseq
    %v3126 = vshrl.u32 %v3125, 7
    %v3127 = vsub.s32 %v1156, %v3126
    %v3128 = vrot.slane %v2992, %v3127
    %v3129 = vlaneseq
    %v3130 = vshrl.u32 %v3129, 7
    %v3131 = vsub.s32 %v1161, %v3130
    %v3132 = vrot.slane %v2995, %v3131
    %v3133 = vsel %vm1166, %v3132, %v3128
    %v3134 = vlaneseq
    %v3135 = vshrl.u32 %v3134, 7
    %v3136 = vsub.s32 %v1168, %v3135
    %v3137 = vrot.slane %v2998, %v3136
    %v3138 = vsel %vm1173, %v3137, %v3133
    %v3139 = vlaneseq
    %v3140 = vshrl.u32 %v3139, 7
    %v3141 = vsub.s32 %v1175, %v3140
    %v3142 = vrot.slane %v3001, %v3141
    %v3143 = vsel %vm1180, %v3142, %v3138
    %v3144 = vlaneseq
    %v3145 = vshrl.u32 %v3144, 7
    %v3146 = vsub.s32 %v1156, %v3145
    %v3147 = vrot.slane %v3004, %v3146
    %v3148 = vlaneseq
    %v3149 = vshrl.u32 %v3148, 7
    %v3150 = vsub.s32 %v1161, %v3149
    %v3151 = vrot.slane %v3007, %v3150
    %v3152 = vsel %vm1166, %v3151, %v3147
    %v3153 = vlaneseq
    %v3154 = vshrl.u32 %v3153, 7
    %v3155 = vsub.s32 %v1168, %v3154
    %v3156 = vrot.slane %v3010, %v3155
    %v3157 = vsel %vm1173, %v3156, %v3152
    %v3158 = vlaneseq
    %v3159 = vshrl.u32 %v3158, 7
    %v3160 = vsub.s32 %v1175, %v3159
    %v3161 = vrot.slane %v3013, %v3160
    %v3162 = vsel %vm1180, %v3161, %v3157
    %v3163 = vlaneseq
    %v3164 = vshrl.u32 %v3163, 7
    %v3165 = vsub.s32 %v1156, %v3164
    %v3166 = vrot.slane %v3016, %v3165
    %v3167 = vlaneseq
    %v3168 = vshrl.u32 %v3167, 7
    %v3169 = vsub.s32 %v1161, %v3168
    %v3170 = vrot.slane %v3019, %v3169
    %v3171 = vsel %vm1166, %v3170, %v3166
    %v3172 = vlaneseq
    %v3173 = vshrl.u32 %v3172, 7
    %v3174 = vsub.s32 %v1168, %v3173
    %v3175 = vrot.slane %v3022, %v3174
    %v3176 = vsel %vm1173, %v3175, %v3171
    %v3177 = vlaneseq
    %v3178 = vshrl.u32 %v3177, 7
    %v3179 = vsub.s32 %v1175, %v3178
    %v3180 = vrot.slane %v3025, %v3179
    %v3181 = vsel %vm1180, %v3180, %v3176
    %v3182 = vlaneseq
    %v3183 = vshrl.u32 %v3182, 7
    %v3184 = vsub.s32 %v1156, %v3183
    %v3185 = vrot.slane %v3028, %v3184
    %v3186 = vlaneseq
    %v3187 = vshrl.u32 %v3186, 7
    %v3188 = vsub.s32 %v1161, %v3187
    %v3189 = vrot.slane %v3031, %v3188
    %v3190 = vsel %vm1166, %v3189, %v3185
    %v3191 = vlaneseq
    %v3192 = vshrl.u32 %v3191, 7
    %v3193 = vsub.s32 %v1168, %v3192
    %v3194 = vrot.slane %v3034, %v3193
    %v3195 = vsel %vm1173, %v3194, %v3190
    %v3196 = vlaneseq
    %v3197 = vshrl.u32 %v3196, 7
    %v3198 = vsub.s32 %v1175, %v3197
    %v3199 = vrot.slane %v3037, %v3198
    %v3200 = vsel %vm1180, %v3199, %v3195
    %v3201 = vlaneseq
    %v3202 = vshrl.u32 %v3201, 7
    %v3203 = vsub.s32 %v1156, %v3202
    %v3204 = vrot.slane %v3040, %v3203
    %v3205 = vlaneseq
    %v3206 = vshrl.u32 %v3205, 7
    %v3207 = vsub.s32 %v1161, %v3206
    %v3208 = vrot.slane %v3043, %v3207
    %v3209 = vsel %vm1166, %v3208, %v3204
    %v3210 = vlaneseq
    %v3211 = vshrl.u32 %v3210, 7
    %v3212 = vsub.s32 %v1168, %v3211
    %v3213 = vrot.slane %v3046, %v3212
    %v3214 = vsel %vm1173, %v3213, %v3209
    %v3215 = vlaneseq
    %v3216 = vshrl.u32 %v3215, 7
    %v3217 = vsub.s32 %v1175, %v3216
    %v3218 = vrot.slane %v3049, %v3217
    %v3219 = vsel %vm1180, %v3218, %v3214
    %v3220 = vlaneseq
    %v3221 = vshrl.u32 %v3220, 7
    %v3222 = vsub.s32 %v1156, %v3221
    %v3223 = vrot.slane %v3052, %v3222
    %v3224 = vlaneseq
    %v3225 = vshrl.u32 %v3224, 7
    %v3226 = vsub.s32 %v1161, %v3225
    %v3227 = vrot.slane %v3055, %v3226
    %v3228 = vsel %vm1166, %v3227, %v3223
    %v3229 = vlaneseq
    %v3230 = vshrl.u32 %v3229, 7
    %v3231 = vsub.s32 %v1168, %v3230
    %v3232 = vrot.slane %v3058, %v3231
    %v3233 = vsel %vm1173, %v3232, %v3228
    %v3234 = vlaneseq
    %v3235 = vshrl.u32 %v3234, 7
    %v3236 = vsub.s32 %v1175, %v3235
    %v3237 = vrot.slane %v3061, %v3236
    %v3238 = vsel %vm1180, %v3237, %v3233
    %v3239 = vlaneseq
    %v3240 = vshrl.u32 %v3239, 7
    %v3241 = vsub.s32 %v1156, %v3240
    %v3242 = vrot.slane %v3064, %v3241
    %v3243 = vlaneseq
    %v3244 = vshrl.u32 %v3243, 7
    %v3245 = vsub.s32 %v1161, %v3244
    %v3246 = vrot.slane %v3067, %v3245
    %v3247 = vsel %vm1166, %v3246, %v3242
    %v3248 = vlaneseq
    %v3249 = vshrl.u32 %v3248, 7
    %v3250 = vsub.s32 %v1168, %v3249
    %v3251 = vrot.slane %v3070, %v3250
    %v3252 = vsel %vm1173, %v3251, %v3247
    %v3253 = vlaneseq
    %v3254 = vshrl.u32 %v3253, 7
    %v3255 = vsub.s32 %v1175, %v3254
    %v3256 = vrot.slane %v3073, %v3255
    %v3257 = vsel %vm1180, %v3256, %v3252
    %v3258 = vsel %vm1182, %v3143, %v3124
    %v3259 = vsel %vm1183, %v3162, %v3258
    %v3260 = vsel %vm1185, %v3181, %v3259
    %v3261 = vsel %vm1187, %v3200, %v3260
    %v3262 = vsel %vm1189, %v3219, %v3261
    %v3263 = vsel %vm1191, %v3238, %v3262
    %v3264 = vsel %vm1193, %v3257, %v3263
    %v3266 = vadd.f32 %v2855, %v3264
    %v3267 = vtanh.pop %v3266
    %s3268 = scalar_lea.vmem [#allocation2], 48
    %v3269 = vld [vmem:[%s3268] sm:$0xff]
    %v3271 = vcombine.high %v3267, %v3267
    %v3273 = vunpack.c.l.s4 1966171168
    %v3274 = vunpack.c.0.s8 %v3273
    %v3275 = vlaneseq
    %v3276 = vshrl.u32 %v3275, 7
    %v3277 = vsub.s32 %v3274, %v3276
    %v3278 = vrot.slane %v3267, %v3277
    %v3280 = vunpack.c.l.s4 1966171168
    %v3281 = vunpack.c.0.s8 %v3280
    %v3282 = vlaneseq
    %v3283 = vshrl.u32 %v3282, 7
    %v3284 = vsub.s32 %v3281, %v3283
    %v3285 = vrot.slane %v3271, %v3284
    %v3286 = vcombine.high %v3278, %v3278
    %v3287 = vcombine.high %v3285, %v3285
    %v3289 = vunpack.c.l.s4 1966171168
    %v3290 = vunpack.c.0.s8 %v3289
    %v3291 = vlaneseq
    %v3292 = vshrl.u32 %v3291, 7
    %v3293 = vsub.s32 %v3290, %v3292
    %v3294 = vrot.slane %v3278, %v3293
    %v3296 = vunpack.c.l.s4 1966171168
    %v3297 = vunpack.c.0.s8 %v3296
    %v3298 = vlaneseq
    %v3299 = vshrl.u32 %v3298, 7
    %v3300 = vsub.s32 %v3297, %v3299
    %v3301 = vrot.slane %v3285, %v3300
    %v3303 = vunpack.c.l.s4 1966171168
    %v3304 = vunpack.c.0.s8 %v3303
    %v3305 = vlaneseq
    %v3306 = vshrl.u32 %v3305, 7
    %v3307 = vsub.s32 %v3304, %v3306
    %v3308 = vrot.slane %v3286, %v3307
    %v3310 = vunpack.c.l.s4 1966171168
    %v3311 = vunpack.c.0.s8 %v3310
    %v3312 = vlaneseq
    %v3313 = vshrl.u32 %v3312, 7
    %v3314 = vsub.s32 %v3311, %v3313
    %v3315 = vrot.slane %v3287, %v3314
    %v3316 = vcombine.high %v3294, %v3294
    %v3317 = vcombine.high %v3301, %v3301
    %v3318 = vcombine.high %v3308, %v3308
    %v3319 = vcombine.high %v3315, %v3315
    %v3320 = vlaneseq
    %v3321 = vshrl.u32 %v3320, 7
    %v3322 = vsub.s32 0, %v3321
    %v3323 = vrot.slane %v3294, %v3322
    %v3324 = vlaneseq
    %v3325 = vshrl.u32 %v3324, 7
    %v3326 = vsub.s32 0, %v3325
    %v3327 = vrot.slane %v3308, %v3326
    %v3328 = vlaneseq
    %v3329 = vshrl.u32 %v3328, 7
    %v3330 = vsub.s32 0, %v3329
    %v3331 = vrot.slane %v3316, %v3330
    %v3332 = vlaneseq
    %v3333 = vshrl.u32 %v3332, 7
    %v3334 = vsub.s32 0, %v3333
    %v3335 = vrot.slane %v3318, %v3334
    %v3336 = vlaneseq
    %v3337 = vshrl.u32 %v3336, 7
    %v3338 = vsub.s32 0, %v3337
    %v3339 = vrot.slane %v3301, %v3338
    %v3340 = vlaneseq
    %v3341 = vshrl.u32 %v3340, 7
    %v3342 = vsub.s32 0, %v3341
    %v3343 = vrot.slane %v3315, %v3342
    %v3344 = vlaneseq
    %v3345 = vshrl.u32 %v3344, 7
    %v3346 = vsub.s32 0, %v3345
    %v3347 = vrot.slane %v3317, %v3346
    %v3348 = vlaneseq
    %v3349 = vshrl.u32 %v3348, 7
    %v3350 = vsub.s32 0, %v3349
    %v3351 = vrot.slane %v3319, %v3350
    %v3360 = vmul.f32 %v3323, %v37
    %v3361 = vmul.f32 %v3323, %v38
    %v3362 = vmul.f32 %v3323, %v39
    %v3363 = vmul.f32 %v3323, %v40
    %v3364 = vmul.f32 %v3327, %v37
    %v3365 = vmul.f32 %v3327, %v38
    %v3366 = vmul.f32 %v3327, %v39
    %v3367 = vmul.f32 %v3327, %v40
    %v3368 = vmul.f32 %v3331, %v37
    %v3369 = vmul.f32 %v3331, %v38
    %v3370 = vmul.f32 %v3331, %v39
    %v3371 = vmul.f32 %v3331, %v40
    %v3372 = vmul.f32 %v3335, %v37
    %v3373 = vmul.f32 %v3335, %v38
    %v3374 = vmul.f32 %v3335, %v39
    %v3375 = vmul.f32 %v3335, %v40
    %v3376 = vmul.f32 %v3339, %v37
    %v3377 = vmul.f32 %v3339, %v38
    %v3378 = vmul.f32 %v3339, %v39
    %v3379 = vmul.f32 %v3339, %v40
    %v3380 = vmul.f32 %v3343, %v37
    %v3381 = vmul.f32 %v3343, %v38
    %v3382 = vmul.f32 %v3343, %v39
    %v3383 = vmul.f32 %v3343, %v40
    %v3384 = vmul.f32 %v3347, %v37
    %v3385 = vmul.f32 %v3347, %v38
    %v3386 = vmul.f32 %v3347, %v39
    %v3387 = vmul.f32 %v3347, %v40
    %v3388 = vmul.f32 %v3351, %v37
    %v3389 = vmul.f32 %v3351, %v38
    %v3390 = vmul.f32 %v3351, %v39
    %v3391 = vmul.f32 %v3351, %v40
    %v3392 = vsel %vm61, %v3360, 0.0
    %3393 = vadd.xlane.f32.xlu0 %v3392
    %v3394 = vpop.xlane.xlu0 %3393
    %v3395 = vsel %vm61, %v3361, 0.0
    %3396 = vadd.xlane.f32.xlu0 %v3395
    %v3397 = vpop.xlane.xlu0 %3396
    %v3398 = vsel %vm61, %v3362, 0.0
    %3399 = vadd.xlane.f32.xlu0 %v3398
    %v3400 = vpop.xlane.xlu0 %3399
    %v3401 = vsel %vm61, %v3363, 0.0
    %3402 = vadd.xlane.f32.xlu0 %v3401
    %v3403 = vpop.xlane.xlu0 %3402
    %v3404 = vsel %vm61, %v3364, 0.0
    %3405 = vadd.xlane.f32.xlu0 %v3404
    %v3406 = vpop.xlane.xlu0 %3405
    %v3407 = vsel %vm61, %v3365, 0.0
    %3408 = vadd.xlane.f32.xlu0 %v3407
    %v3409 = vpop.xlane.xlu0 %3408
    %v3410 = vsel %vm61, %v3366, 0.0
    %3411 = vadd.xlane.f32.xlu0 %v3410
    %v3412 = vpop.xlane.xlu0 %3411
    %v3413 = vsel %vm61, %v3367, 0.0
    %3414 = vadd.xlane.f32.xlu0 %v3413
    %v3415 = vpop.xlane.xlu0 %3414
    %v3416 = vsel %vm61, %v3368, 0.0
    %3417 = vadd.xlane.f32.xlu0 %v3416
    %v3418 = vpop.xlane.xlu0 %3417
    %v3419 = vsel %vm61, %v3369, 0.0
    %3420 = vadd.xlane.f32.xlu0 %v3419
    %v3421 = vpop.xlane.xlu0 %3420
    %v3422 = vsel %vm61, %v3370, 0.0
    %3423 = vadd.xlane.f32.xlu0 %v3422
    %v3424 = vpop.xlane.xlu0 %3423
    %v3425 = vsel %vm61, %v3371, 0.0
    %3426 = vadd.xlane.f32.xlu0 %v3425
    %v3427 = vpop.xlane.xlu0 %3426
    %v3428 = vsel %vm61, %v3372, 0.0
    %3429 = vadd.xlane.f32.xlu0 %v3428
    %v3430 = vpop.xlane.xlu0 %3429
    %v3431 = vsel %vm61, %v3373, 0.0
    %3432 = vadd.xlane.f32.xlu0 %v3431
    %v3433 = vpop.xlane.xlu0 %3432
    %v3434 = vsel %vm61, %v3374, 0.0
    %3435 = vadd.xlane.f32.xlu0 %v3434
    %v3436 = vpop.xlane.xlu0 %3435
    %v3437 = vsel %vm61, %v3375, 0.0
    %3438 = vadd.xlane.f32.xlu0 %v3437
    %v3439 = vpop.xlane.xlu0 %3438
    %v3440 = vsel %vm61, %v3376, 0.0
    %3441 = vadd.xlane.f32.xlu0 %v3440
    %v3442 = vpop.xlane.xlu0 %3441
    %v3443 = vsel %vm61, %v3377, 0.0
    %3444 = vadd.xlane.f32.xlu0 %v3443
    %v3445 = vpop.xlane.xlu0 %3444
    %v3446 = vsel %vm61, %v3378, 0.0
    %3447 = vadd.xlane.f32.xlu0 %v3446
    %v3448 = vpop.xlane.xlu0 %3447
    %v3449 = vsel %vm61, %v3379, 0.0
    %3450 = vadd.xlane.f32.xlu0 %v3449
    %v3451 = vpop.xlane.xlu0 %3450
    %v3452 = vsel %vm61, %v3380, 0.0
    %3453 = vadd.xlane.f32.xlu0 %v3452
    %v3454 = vpop.xlane.xlu0 %3453
    %v3455 = vsel %vm61, %v3381, 0.0
    %3456 = vadd.xlane.f32.xlu0 %v3455
    %v3457 = vpop.xlane.xlu0 %3456
    %v3458 = vsel %vm61, %v3382, 0.0
    %3459 = vadd.xlane.f32.xlu0 %v3458
    %v3460 = vpop.xlane.xlu0 %3459
    %v3461 = vsel %vm61, %v3383, 0.0
    %3462 = vadd.xlane.f32.xlu0 %v3461
    %v3463 = vpop.xlane.xlu0 %3462
    %v3464 = vsel %vm61, %v3384, 0.0
    %3465 = vadd.xlane.f32.xlu0 %v3464
    %v3466 = vpop.xlane.xlu0 %3465
    %v3467 = vsel %vm61, %v3385, 0.0
    %3468 = vadd.xlane.f32.xlu0 %v3467
    %v3469 = vpop.xlane.xlu0 %3468
    %v3470 = vsel %vm61, %v3386, 0.0
    %3471 = vadd.xlane.f32.xlu0 %v3470
    %v3472 = vpop.xlane.xlu0 %3471
    %v3473 = vsel %vm61, %v3387, 0.0
    %3474 = vadd.xlane.f32.xlu0 %v3473
    %v3475 = vpop.xlane.xlu0 %3474
    %v3476 = vsel %vm61, %v3388, 0.0
    %3477 = vadd.xlane.f32.xlu0 %v3476
    %v3478 = vpop.xlane.xlu0 %3477
    %v3479 = vsel %vm61, %v3389, 0.0
    %3480 = vadd.xlane.f32.xlu0 %v3479
    %v3481 = vpop.xlane.xlu0 %3480
    %v3482 = vsel %vm61, %v3390, 0.0
    %3483 = vadd.xlane.f32.xlu0 %v3482
    %v3484 = vpop.xlane.xlu0 %3483
    %v3485 = vsel %vm61, %v3391, 0.0
    %3486 = vadd.xlane.f32.xlu0 %v3485
    %v3487 = vpop.xlane.xlu0 %3486
    %v3520 = vlaneseq
    %v3521 = vshrl.u32 %v3520, 7
    %v3522 = vsub.s32 %v1156, %v3521
    %v3523 = vrot.slane %v3394, %v3522
    %v3524 = vlaneseq
    %v3525 = vshrl.u32 %v3524, 7
    %v3526 = vsub.s32 %v1161, %v3525
    %v3527 = vrot.slane %v3397, %v3526
    %v3528 = vsel %vm1166, %v3527, %v3523
    %v3529 = vlaneseq
    %v3530 = vshrl.u32 %v3529, 7
    %v3531 = vsub.s32 %v1168, %v3530
    %v3532 = vrot.slane %v3400, %v3531
    %v3533 = vsel %vm1173, %v3532, %v3528
    %v3534 = vlaneseq
    %v3535 = vshrl.u32 %v3534, 7
    %v3536 = vsub.s32 %v1175, %v3535
    %v3537 = vrot.slane %v3403, %v3536
    %v3538 = vsel %vm1180, %v3537, %v3533
    %v3539 = vlaneseq
    %v3540 = vshrl.u32 %v3539, 7
    %v3541 = vsub.s32 %v1156, %v3540
    %v3542 = vrot.slane %v3406, %v3541
    %v3543 = vlaneseq
    %v3544 = vshrl.u32 %v3543, 7
    %v3545 = vsub.s32 %v1161, %v3544
    %v3546 = vrot.slane %v3409, %v3545
    %v3547 = vsel %vm1166, %v3546, %v3542
    %v3548 = vlaneseq
    %v3549 = vshrl.u32 %v3548, 7
    %v3550 = vsub.s32 %v1168, %v3549
    %v3551 = vrot.slane %v3412, %v3550
    %v3552 = vsel %vm1173, %v3551, %v3547
    %v3553 = vlaneseq
    %v3554 = vshrl.u32 %v3553, 7
    %v3555 = vsub.s32 %v1175, %v3554
    %v3556 = vrot.slane %v3415, %v3555
    %v3557 = vsel %vm1180, %v3556, %v3552
    %v3558 = vlaneseq
    %v3559 = vshrl.u32 %v3558, 7
    %v3560 = vsub.s32 %v1156, %v3559
    %v3561 = vrot.slane %v3418, %v3560
    %v3562 = vlaneseq
    %v3563 = vshrl.u32 %v3562, 7
    %v3564 = vsub.s32 %v1161, %v3563
    %v3565 = vrot.slane %v3421, %v3564
    %v3566 = vsel %vm1166, %v3565, %v3561
    %v3567 = vlaneseq
    %v3568 = vshrl.u32 %v3567, 7
    %v3569 = vsub.s32 %v1168, %v3568
    %v3570 = vrot.slane %v3424, %v3569
    %v3571 = vsel %vm1173, %v3570, %v3566
    %v3572 = vlaneseq
    %v3573 = vshrl.u32 %v3572, 7
    %v3574 = vsub.s32 %v1175, %v3573
    %v3575 = vrot.slane %v3427, %v3574
    %v3576 = vsel %vm1180, %v3575, %v3571
    %v3577 = vlaneseq
    %v3578 = vshrl.u32 %v3577, 7
    %v3579 = vsub.s32 %v1156, %v3578
    %v3580 = vrot.slane %v3430, %v3579
    %v3581 = vlaneseq
    %v3582 = vshrl.u32 %v3581, 7
    %v3583 = vsub.s32 %v1161, %v3582
    %v3584 = vrot.slane %v3433, %v3583
    %v3585 = vsel %vm1166, %v3584, %v3580
    %v3586 = vlaneseq
    %v3587 = vshrl.u32 %v3586, 7
    %v3588 = vsub.s32 %v1168, %v3587
    %v3589 = vrot.slane %v3436, %v3588
    %v3590 = vsel %vm1173, %v3589, %v3585
    %v3591 = vlaneseq
    %v3592 = vshrl.u32 %v3591, 7
    %v3593 = vsub.s32 %v1175, %v3592
    %v3594 = vrot.slane %v3439, %v3593
    %v3595 = vsel %vm1180, %v3594, %v3590
    %v3596 = vlaneseq
    %v3597 = vshrl.u32 %v3596, 7
    %v3598 = vsub.s32 %v1156, %v3597
    %v3599 = vrot.slane %v3442, %v3598
    %v3600 = vlaneseq
    %v3601 = vshrl.u32 %v3600, 7
    %v3602 = vsub.s32 %v1161, %v3601
    %v3603 = vrot.slane %v3445, %v3602
    %v3604 = vsel %vm1166, %v3603, %v3599
    %v3605 = vlaneseq
    %v3606 = vshrl.u32 %v3605, 7
    %v3607 = vsub.s32 %v1168, %v3606
    %v3608 = vrot.slane %v3448, %v3607
    %v3609 = vsel %vm1173, %v3608, %v3604
    %v3610 = vlaneseq
    %v3611 = vshrl.u32 %v3610, 7
    %v3612 = vsub.s32 %v1175, %v3611
    %v3613 = vrot.slane %v3451, %v3612
    %v3614 = vsel %vm1180, %v3613, %v3609
    %v3615 = vlaneseq
    %v3616 = vshrl.u32 %v3615, 7
    %v3617 = vsub.s32 %v1156, %v3616
    %v3618 = vrot.slane %v3454, %v3617
    %v3619 = vlaneseq
    %v3620 = vshrl.u32 %v3619, 7
    %v3621 = vsub.s32 %v1161, %v3620
    %v3622 = vrot.slane %v3457, %v3621
    %v3623 = vsel %vm1166, %v3622, %v3618
    %v3624 = vlaneseq
    %v3625 = vshrl.u32 %v3624, 7
    %v3626 = vsub.s32 %v1168, %v3625
    %v3627 = vrot.slane %v3460, %v3626
    %v3628 = vsel %vm1173, %v3627, %v3623
    %v3629 = vlaneseq
    %v3630 = vshrl.u32 %v3629, 7
    %v3631 = vsub.s32 %v1175, %v3630
    %v3632 = vrot.slane %v3463, %v3631
    %v3633 = vsel %vm1180, %v3632, %v3628
    %v3634 = vlaneseq
    %v3635 = vshrl.u32 %v3634, 7
    %v3636 = vsub.s32 %v1156, %v3635
    %v3637 = vrot.slane %v3466, %v3636
    %v3638 = vlaneseq
    %v3639 = vshrl.u32 %v3638, 7
    %v3640 = vsub.s32 %v1161, %v3639
    %v3641 = vrot.slane %v3469, %v3640
    %v3642 = vsel %vm1166, %v3641, %v3637
    %v3643 = vlaneseq
    %v3644 = vshrl.u32 %v3643, 7
    %v3645 = vsub.s32 %v1168, %v3644
    %v3646 = vrot.slane %v3472, %v3645
    %v3647 = vsel %vm1173, %v3646, %v3642
    %v3648 = vlaneseq
    %v3649 = vshrl.u32 %v3648, 7
    %v3650 = vsub.s32 %v1175, %v3649
    %v3651 = vrot.slane %v3475, %v3650
    %v3652 = vsel %vm1180, %v3651, %v3647
    %v3653 = vlaneseq
    %v3654 = vshrl.u32 %v3653, 7
    %v3655 = vsub.s32 %v1156, %v3654
    %v3656 = vrot.slane %v3478, %v3655
    %v3657 = vlaneseq
    %v3658 = vshrl.u32 %v3657, 7
    %v3659 = vsub.s32 %v1161, %v3658
    %v3660 = vrot.slane %v3481, %v3659
    %v3661 = vsel %vm1166, %v3660, %v3656
    %v3662 = vlaneseq
    %v3663 = vshrl.u32 %v3662, 7
    %v3664 = vsub.s32 %v1168, %v3663
    %v3665 = vrot.slane %v3484, %v3664
    %v3666 = vsel %vm1173, %v3665, %v3661
    %v3667 = vlaneseq
    %v3668 = vshrl.u32 %v3667, 7
    %v3669 = vsub.s32 %v1175, %v3668
    %v3670 = vrot.slane %v3487, %v3669
    %v3671 = vsel %vm1180, %v3670, %v3666
    %v3672 = vsel %vm1182, %v3557, %v3538
    %v3673 = vsel %vm1183, %v3576, %v3672
    %v3674 = vsel %vm1185, %v3595, %v3673
    %v3675 = vsel %vm1187, %v3614, %v3674
    %v3676 = vsel %vm1189, %v3633, %v3675
    %v3677 = vsel %vm1191, %v3652, %v3676
    %v3678 = vsel %vm1193, %v3671, %v3677
    %v3680 = vadd.f32 %v3269, %v3678
    %v3681 = vtanh.pop %v3680
    %s3682 = scalar_lea.vmem [#allocation2], 56
    %v3683 = vld [vmem:[%s3682] sm:$0xff]
    %v3685 = vcombine.high %v3681, %v3681
    %v3687 = vunpack.c.l.s4 1966171168
    %v3688 = vunpack.c.0.s8 %v3687
    %v3689 = vlaneseq
    %v3690 = vshrl.u32 %v3689, 7
    %v3691 = vsub.s32 %v3688, %v3690
    %v3692 = vrot.slane %v3681, %v3691
    %v3694 = vunpack.c.l.s4 1966171168
    %v3695 = vunpack.c.0.s8 %v3694
    %v3696 = vlaneseq
    %v3697 = vshrl.u32 %v3696, 7
    %v3698 = vsub.s32 %v3695, %v3697
    %v3699 = vrot.slane %v3685, %v3698
    %v3700 = vcombine.high %v3692, %v3692
    %v3701 = vcombine.high %v3699, %v3699
    %v3703 = vunpack.c.l.s4 1966171168
    %v3704 = vunpack.c.0.s8 %v3703
    %v3705 = vlaneseq
    %v3706 = vshrl.u32 %v3705, 7
    %v3707 = vsub.s32 %v3704, %v3706
    %v3708 = vrot.slane %v3692, %v3707
    %v3710 = vunpack.c.l.s4 1966171168
    %v3711 = vunpack.c.0.s8 %v3710
    %v3712 = vlaneseq
    %v3713 = vshrl.u32 %v3712, 7
    %v3714 = vsub.s32 %v3711, %v3713
    %v3715 = vrot.slane %v3699, %v3714
    %v3717 = vunpack.c.l.s4 1966171168
    %v3718 = vunpack.c.0.s8 %v3717
    %v3719 = vlaneseq
    %v3720 = vshrl.u32 %v3719, 7
    %v3721 = vsub.s32 %v3718, %v3720
    %v3722 = vrot.slane %v3700, %v3721
    %v3724 = vunpack.c.l.s4 1966171168
    %v3725 = vunpack.c.0.s8 %v3724
    %v3726 = vlaneseq
    %v3727 = vshrl.u32 %v3726, 7
    %v3728 = vsub.s32 %v3725, %v3727
    %v3729 = vrot.slane %v3701, %v3728
    %v3730 = vcombine.high %v3708, %v3708
    %v3731 = vcombine.high %v3715, %v3715
    %v3732 = vcombine.high %v3722, %v3722
    %v3733 = vcombine.high %v3729, %v3729
    %v3734 = vlaneseq
    %v3735 = vshrl.u32 %v3734, 7
    %v3736 = vsub.s32 0, %v3735
    %v3737 = vrot.slane %v3708, %v3736
    %v3738 = vlaneseq
    %v3739 = vshrl.u32 %v3738, 7
    %v3740 = vsub.s32 0, %v3739
    %v3741 = vrot.slane %v3722, %v3740
    %v3742 = vlaneseq
    %v3743 = vshrl.u32 %v3742, 7
    %v3744 = vsub.s32 0, %v3743
    %v3745 = vrot.slane %v3730, %v3744
    %v3746 = vlaneseq
    %v3747 = vshrl.u32 %v3746, 7
    %v3748 = vsub.s32 0, %v3747
    %v3749 = vrot.slane %v3732, %v3748
    %v3750 = vlaneseq
    %v3751 = vshrl.u32 %v3750, 7
    %v3752 = vsub.s32 0, %v3751
    %v3753 = vrot.slane %v3715, %v3752
    %v3754 = vlaneseq
    %v3755 = vshrl.u32 %v3754, 7
    %v3756 = vsub.s32 0, %v3755
    %v3757 = vrot.slane %v3729, %v3756
    %v3758 = vlaneseq
    %v3759 = vshrl.u32 %v3758, 7
    %v3760 = vsub.s32 0, %v3759
    %v3761 = vrot.slane %v3731, %v3760
    %v3762 = vlaneseq
    %v3763 = vshrl.u32 %v3762, 7
    %v3764 = vsub.s32 0, %v3763
    %v3765 = vrot.slane %v3733, %v3764
    %v3774 = vmul.f32 %v3737, %v37
    %v3775 = vmul.f32 %v3737, %v38
    %v3776 = vmul.f32 %v3737, %v39
    %v3777 = vmul.f32 %v3737, %v40
    %v3778 = vmul.f32 %v3741, %v37
    %v3779 = vmul.f32 %v3741, %v38
    %v3780 = vmul.f32 %v3741, %v39
    %v3781 = vmul.f32 %v3741, %v40
    %v3782 = vmul.f32 %v3745, %v37
    %v3783 = vmul.f32 %v3745, %v38
    %v3784 = vmul.f32 %v3745, %v39
    %v3785 = vmul.f32 %v3745, %v40
    %v3786 = vmul.f32 %v3749, %v37
    %v3787 = vmul.f32 %v3749, %v38
    %v3788 = vmul.f32 %v3749, %v39
    %v3789 = vmul.f32 %v3749, %v40
    %v3790 = vmul.f32 %v3753, %v37
    %v3791 = vmul.f32 %v3753, %v38
    %v3792 = vmul.f32 %v3753, %v39
    %v3793 = vmul.f32 %v3753, %v40
    %v3794 = vmul.f32 %v3757, %v37
    %v3795 = vmul.f32 %v3757, %v38
    %v3796 = vmul.f32 %v3757, %v39
    %v3797 = vmul.f32 %v3757, %v40
    %v3798 = vmul.f32 %v3761, %v37
    %v3799 = vmul.f32 %v3761, %v38
    %v3800 = vmul.f32 %v3761, %v39
    %v3801 = vmul.f32 %v3761, %v40
    %v3802 = vmul.f32 %v3765, %v37
    %v3803 = vmul.f32 %v3765, %v38
    %v3804 = vmul.f32 %v3765, %v39
    %v3805 = vmul.f32 %v3765, %v40
    %v3806 = vsel %vm61, %v3774, 0.0
    %3807 = vadd.xlane.f32.xlu0 %v3806
    %v3808 = vpop.xlane.xlu0 %3807
    %v3809 = vsel %vm61, %v3775, 0.0
    %3810 = vadd.xlane.f32.xlu0 %v3809
    %v3811 = vpop.xlane.xlu0 %3810
    %v3812 = vsel %vm61, %v3776, 0.0
    %3813 = vadd.xlane.f32.xlu0 %v3812
    %v3814 = vpop.xlane.xlu0 %3813
    %v3815 = vsel %vm61, %v3777, 0.0
    %3816 = vadd.xlane.f32.xlu0 %v3815
    %v3817 = vpop.xlane.xlu0 %3816
    %v3818 = vsel %vm61, %v3778, 0.0
    %3819 = vadd.xlane.f32.xlu0 %v3818
    %v3820 = vpop.xlane.xlu0 %3819
    %v3821 = vsel %vm61, %v3779, 0.0
    %3822 = vadd.xlane.f32.xlu0 %v3821
    %v3823 = vpop.xlane.xlu0 %3822
    %v3824 = vsel %vm61, %v3780, 0.0
    %3825 = vadd.xlane.f32.xlu0 %v3824
    %v3826 = vpop.xlane.xlu0 %3825
    %v3827 = vsel %vm61, %v3781, 0.0
    %3828 = vadd.xlane.f32.xlu0 %v3827
    %v3829 = vpop.xlane.xlu0 %3828
    %v3830 = vsel %vm61, %v3782, 0.0
    %3831 = vadd.xlane.f32.xlu0 %v3830
    %v3832 = vpop.xlane.xlu0 %3831
    %v3833 = vsel %vm61, %v3783, 0.0
    %3834 = vadd.xlane.f32.xlu0 %v3833
    %v3835 = vpop.xlane.xlu0 %3834
    %v3836 = vsel %vm61, %v3784, 0.0
    %3837 = vadd.xlane.f32.xlu0 %v3836
    %v3838 = vpop.xlane.xlu0 %3837
    %v3839 = vsel %vm61, %v3785, 0.0
    %3840 = vadd.xlane.f32.xlu0 %v3839
    %v3841 = vpop.xlane.xlu0 %3840
    %v3842 = vsel %vm61, %v3786, 0.0
    %3843 = vadd.xlane.f32.xlu0 %v3842
    %v3844 = vpop.xlane.xlu0 %3843
    %v3845 = vsel %vm61, %v3787, 0.0
    %3846 = vadd.xlane.f32.xlu0 %v3845
    %v3847 = vpop.xlane.xlu0 %3846
    %v3848 = vsel %vm61, %v3788, 0.0
    %3849 = vadd.xlane.f32.xlu0 %v3848
    %v3850 = vpop.xlane.xlu0 %3849
    %v3851 = vsel %vm61, %v3789, 0.0
    %3852 = vadd.xlane.f32.xlu0 %v3851
    %v3853 = vpop.xlane.xlu0 %3852
    %v3854 = vsel %vm61, %v3790, 0.0
    %3855 = vadd.xlane.f32.xlu0 %v3854
    %v3856 = vpop.xlane.xlu0 %3855
    %v3857 = vsel %vm61, %v3791, 0.0
    %3858 = vadd.xlane.f32.xlu0 %v3857
    %v3859 = vpop.xlane.xlu0 %3858
    %v3860 = vsel %vm61, %v3792, 0.0
    %3861 = vadd.xlane.f32.xlu0 %v3860
    %v3862 = vpop.xlane.xlu0 %3861
    %v3863 = vsel %vm61, %v3793, 0.0
    %3864 = vadd.xlane.f32.xlu0 %v3863
    %v3865 = vpop.xlane.xlu0 %3864
    %v3866 = vsel %vm61, %v3794, 0.0
    %3867 = vadd.xlane.f32.xlu0 %v3866
    %v3868 = vpop.xlane.xlu0 %3867
    %v3869 = vsel %vm61, %v3795, 0.0
    %3870 = vadd.xlane.f32.xlu0 %v3869
    %v3871 = vpop.xlane.xlu0 %3870
    %v3872 = vsel %vm61, %v3796, 0.0
    %3873 = vadd.xlane.f32.xlu0 %v3872
    %v3874 = vpop.xlane.xlu0 %3873
    %v3875 = vsel %vm61, %v3797, 0.0
    %3876 = vadd.xlane.f32.xlu0 %v3875
    %v3877 = vpop.xlane.xlu0 %3876
    %v3878 = vsel %vm61, %v3798, 0.0
    %3879 = vadd.xlane.f32.xlu0 %v3878
    %v3880 = vpop.xlane.xlu0 %3879
    %v3881 = vsel %vm61, %v3799, 0.0
    %3882 = vadd.xlane.f32.xlu0 %v3881
    %v3883 = vpop.xlane.xlu0 %3882
    %v3884 = vsel %vm61, %v3800, 0.0
    %3885 = vadd.xlane.f32.xlu0 %v3884
    %v3886 = vpop.xlane.xlu0 %3885
    %v3887 = vsel %vm61, %v3801, 0.0
    %3888 = vadd.xlane.f32.xlu0 %v3887
    %v3889 = vpop.xlane.xlu0 %3888
    %v3890 = vsel %vm61, %v3802, 0.0
    %3891 = vadd.xlane.f32.xlu0 %v3890
    %v3892 = vpop.xlane.xlu0 %3891
    %v3893 = vsel %vm61, %v3803, 0.0
    %3894 = vadd.xlane.f32.xlu0 %v3893
    %v3895 = vpop.xlane.xlu0 %3894
    %v3896 = vsel %vm61, %v3804, 0.0
    %3897 = vadd.xlane.f32.xlu0 %v3896
    %v3898 = vpop.xlane.xlu0 %3897
    %v3899 = vsel %vm61, %v3805, 0.0
    %3900 = vadd.xlane.f32.xlu0 %v3899
    %v3901 = vpop.xlane.xlu0 %3900
    %v3934 = vlaneseq
    %v3935 = vshrl.u32 %v3934, 7
    %v3936 = vsub.s32 %v1156, %v3935
    %v3937 = vrot.slane %v3808, %v3936
    %v3938 = vlaneseq
    %v3939 = vshrl.u32 %v3938, 7
    %v3940 = vsub.s32 %v1161, %v3939
    %v3941 = vrot.slane %v3811, %v3940
    %v3942 = vsel %vm1166, %v3941, %v3937
    %v3943 = vlaneseq
    %v3944 = vshrl.u32 %v3943, 7
    %v3945 = vsub.s32 %v1168, %v3944
    %v3946 = vrot.slane %v3814, %v3945
    %v3947 = vsel %vm1173, %v3946, %v3942
    %v3948 = vlaneseq
    %v3949 = vshrl.u32 %v3948, 7
    %v3950 = vsub.s32 %v1175, %v3949
    %v3951 = vrot.slane %v3817, %v3950
    %v3952 = vsel %vm1180, %v3951, %v3947
    %v3953 = vlaneseq
    %v3954 = vshrl.u32 %v3953, 7
    %v3955 = vsub.s32 %v1156, %v3954
    %v3956 = vrot.slane %v3820, %v3955
    %v3957 = vlaneseq
    %v3958 = vshrl.u32 %v3957, 7
    %v3959 = vsub.s32 %v1161, %v3958
    %v3960 = vrot.slane %v3823, %v3959
    %v3961 = vsel %vm1166, %v3960, %v3956
    %v3962 = vlaneseq
    %v3963 = vshrl.u32 %v3962, 7
    %v3964 = vsub.s32 %v1168, %v3963
    %v3965 = vrot.slane %v3826, %v3964
    %v3966 = vsel %vm1173, %v3965, %v3961
    %v3967 = vlaneseq
    %v3968 = vshrl.u32 %v3967, 7
    %v3969 = vsub.s32 %v1175, %v3968
    %v3970 = vrot.slane %v3829, %v3969
    %v3971 = vsel %vm1180, %v3970, %v3966
    %v3972 = vlaneseq
    %v3973 = vshrl.u32 %v3972, 7
    %v3974 = vsub.s32 %v1156, %v3973
    %v3975 = vrot.slane %v3832, %v3974
    %v3976 = vlaneseq
    %v3977 = vshrl.u32 %v3976, 7
    %v3978 = vsub.s32 %v1161, %v3977
    %v3979 = vrot.slane %v3835, %v3978
    %v3980 = vsel %vm1166, %v3979, %v3975
    %v3981 = vlaneseq
    %v3982 = vshrl.u32 %v3981, 7
    %v3983 = vsub.s32 %v1168, %v3982
    %v3984 = vrot.slane %v3838, %v3983
    %v3985 = vsel %vm1173, %v3984, %v3980
    %v3986 = vlaneseq
    %v3987 = vshrl.u32 %v3986, 7
    %v3988 = vsub.s32 %v1175, %v3987
    %v3989 = vrot.slane %v3841, %v3988
    %v3990 = vsel %vm1180, %v3989, %v3985
    %v3991 = vlaneseq
    %v3992 = vshrl.u32 %v3991, 7
    %v3993 = vsub.s32 %v1156, %v3992
    %v3994 = vrot.slane %v3844, %v3993
    %v3995 = vlaneseq
    %v3996 = vshrl.u32 %v3995, 7
    %v3997 = vsub.s32 %v1161, %v3996
    %v3998 = vrot.slane %v3847, %v3997
    %v3999 = vsel %vm1166, %v3998, %v3994
    %v4000 = vlaneseq
    %v4001 = vshrl.u32 %v4000, 7
    %v4002 = vsub.s32 %v1168, %v4001
    %v4003 = vrot.slane %v3850, %v4002
    %v4004 = vsel %vm1173, %v4003, %v3999
    %v4005 = vlaneseq
    %v4006 = vshrl.u32 %v4005, 7
    %v4007 = vsub.s32 %v1175, %v4006
    %v4008 = vrot.slane %v3853, %v4007
    %v4009 = vsel %vm1180, %v4008, %v4004
    %v4010 = vlaneseq
    %v4011 = vshrl.u32 %v4010, 7
    %v4012 = vsub.s32 %v1156, %v4011
    %v4013 = vrot.slane %v3856, %v4012
    %v4014 = vlaneseq
    %v4015 = vshrl.u32 %v4014, 7
    %v4016 = vsub.s32 %v1161, %v4015
    %v4017 = vrot.slane %v3859, %v4016
    %v4018 = vsel %vm1166, %v4017, %v4013
    %v4019 = vlaneseq
    %v4020 = vshrl.u32 %v4019, 7
    %v4021 = vsub.s32 %v1168, %v4020
    %v4022 = vrot.slane %v3862, %v4021
    %v4023 = vsel %vm1173, %v4022, %v4018
    %v4024 = vlaneseq
    %v4025 = vshrl.u32 %v4024, 7
    %v4026 = vsub.s32 %v1175, %v4025
    %v4027 = vrot.slane %v3865, %v4026
    %v4028 = vsel %vm1180, %v4027, %v4023
    %v4029 = vlaneseq
    %v4030 = vshrl.u32 %v4029, 7
    %v4031 = vsub.s32 %v1156, %v4030
    %v4032 = vrot.slane %v3868, %v4031
    %v4033 = vlaneseq
    %v4034 = vshrl.u32 %v4033, 7
    %v4035 = vsub.s32 %v1161, %v4034
    %v4036 = vrot.slane %v3871, %v4035
    %v4037 = vsel %vm1166, %v4036, %v4032
    %v4038 = vlaneseq
    %v4039 = vshrl.u32 %v4038, 7
    %v4040 = vsub.s32 %v1168, %v4039
    %v4041 = vrot.slane %v3874, %v4040
    %v4042 = vsel %vm1173, %v4041, %v4037
    %v4043 = vlaneseq
    %v4044 = vshrl.u32 %v4043, 7
    %v4045 = vsub.s32 %v1175, %v4044
    %v4046 = vrot.slane %v3877, %v4045
    %v4047 = vsel %vm1180, %v4046, %v4042
    %v4048 = vlaneseq
    %v4049 = vshrl.u32 %v4048, 7
    %v4050 = vsub.s32 %v1156, %v4049
    %v4051 = vrot.slane %v3880, %v4050
    %v4052 = vlaneseq
    %v4053 = vshrl.u32 %v4052, 7
    %v4054 = vsub.s32 %v1161, %v4053
    %v4055 = vrot.slane %v3883, %v4054
    %v4056 = vsel %vm1166, %v4055, %v4051
    %v4057 = vlaneseq
    %v4058 = vshrl.u32 %v4057, 7
    %v4059 = vsub.s32 %v1168, %v4058
    %v4060 = vrot.slane %v3886, %v4059
    %v4061 = vsel %vm1173, %v4060, %v4056
    %v4062 = vlaneseq
    %v4063 = vshrl.u32 %v4062, 7
    %v4064 = vsub.s32 %v1175, %v4063
    %v4065 = vrot.slane %v3889, %v4064
    %v4066 = vsel %vm1180, %v4065, %v4061
    %v4067 = vlaneseq
    %v4068 = vshrl.u32 %v4067, 7
    %v4069 = vsub.s32 %v1156, %v4068
    %v4070 = vrot.slane %v3892, %v4069
    %v4071 = vlaneseq
    %v4072 = vshrl.u32 %v4071, 7
    %v4073 = vsub.s32 %v1161, %v4072
    %v4074 = vrot.slane %v3895, %v4073
    %v4075 = vsel %vm1166, %v4074, %v4070
    %v4076 = vlaneseq
    %v4077 = vshrl.u32 %v4076, 7
    %v4078 = vsub.s32 %v1168, %v4077
    %v4079 = vrot.slane %v3898, %v4078
    %v4080 = vsel %vm1173, %v4079, %v4075
    %v4081 = vlaneseq
    %v4082 = vshrl.u32 %v4081, 7
    %v4083 = vsub.s32 %v1175, %v4082
    %v4084 = vrot.slane %v3901, %v4083
    %v4085 = vsel %vm1180, %v4084, %v4080
    %v4086 = vsel %vm1182, %v3971, %v3952
    %v4087 = vsel %vm1183, %v3990, %v4086
    %v4088 = vsel %vm1185, %v4009, %v4087
    %v4089 = vsel %vm1187, %v4028, %v4088
    %v4090 = vsel %vm1189, %v4047, %v4089
    %v4091 = vsel %vm1191, %v4066, %v4090
    %v4092 = vsel %vm1193, %v4085, %v4091
    %v4094 = vadd.f32 %v3683, %v4092
    %v4095 = vtanh.pop %v4094
    %v4112 = vlaneseq
    %v4113 = vshrl.u32 %v4112, 7
    %v4114 = vsub.s32 %v1156, %v4113
    %v4115 = vrot.slane %v1118, %v4114
    %v4116 = vlaneseq
    %v4117 = vshrl.u32 %v4116, 7
    %v4118 = vsub.s32 %v1161, %v4117
    %v4119 = vrot.slane %v1119, %v4118
    %v4120 = vsel %vm1166, %v4119, %v4115
    %v4121 = vlaneseq
    %v4122 = vshrl.u32 %v4121, 7
    %v4123 = vsub.s32 %v1156, %v4122
    %v4124 = vrot.slane %v1120, %v4123
    %v4125 = vlaneseq
    %v4126 = vshrl.u32 %v4125, 7
    %v4127 = vsub.s32 %v1161, %v4126
    %v4128 = vrot.slane %v1121, %v4127
    %v4129 = vsel %vm1166, %v4128, %v4124
    %v4130 = vlaneseq
    %v4131 = vshrl.u32 %v4130, 7
    %v4132 = vsub.s32 %v1156, %v4131
    %v4133 = vrot.slane %v1122, %v4132
    %v4134 = vlaneseq
    %v4135 = vshrl.u32 %v4134, 7
    %v4136 = vsub.s32 %v1161, %v4135
    %v4137 = vrot.slane %v1123, %v4136
    %v4138 = vsel %vm1166, %v4137, %v4133
    %v4139 = vlaneseq
    %v4140 = vshrl.u32 %v4139, 7
    %v4141 = vsub.s32 %v1156, %v4140
    %v4142 = vrot.slane %v1124, %v4141
    %v4143 = vlaneseq
    %v4144 = vshrl.u32 %v4143, 7
    %v4145 = vsub.s32 %v1161, %v4144
    %v4146 = vrot.slane %v1125, %v4145
    %v4147 = vsel %vm1166, %v4146, %v4142
    %v4148 = vlaneseq
    %v4149 = vshrl.u32 %v4148, 7
    %v4150 = vsub.s32 %v1156, %v4149
    %v4151 = vrot.slane %v1126, %v4150
    %v4152 = vlaneseq
    %v4153 = vshrl.u32 %v4152, 7
    %v4154 = vsub.s32 %v1161, %v4153
    %v4155 = vrot.slane %v1127, %v4154
    %v4156 = vsel %vm1166, %v4155, %v4151
    %v4157 = vlaneseq
    %v4158 = vshrl.u32 %v4157, 7
    %v4159 = vsub.s32 %v1156, %v4158
    %v4160 = vrot.slane %v1128, %v4159
    %v4161 = vlaneseq
    %v4162 = vshrl.u32 %v4161, 7
    %v4163 = vsub.s32 %v1161, %v4162
    %v4164 = vrot.slane %v1129, %v4163
    %v4165 = vsel %vm1166, %v4164, %v4160
    %v4166 = vlaneseq
    %v4167 = vshrl.u32 %v4166, 7
    %v4168 = vsub.s32 %v1156, %v4167
    %v4169 = vrot.slane %v1130, %v4168
    %v4170 = vlaneseq
    %v4171 = vshrl.u32 %v4170, 7
    %v4172 = vsub.s32 %v1161, %v4171
    %v4173 = vrot.slane %v1131, %v4172
    %v4174 = vsel %vm1166, %v4173, %v4169
    %v4175 = vlaneseq
    %v4176 = vshrl.u32 %v4175, 7
    %v4177 = vsub.s32 %v1156, %v4176
    %v4178 = vrot.slane %v1132, %v4177
    %v4179 = vlaneseq
    %v4180 = vshrl.u32 %v4179, 7
    %v4181 = vsub.s32 %v1161, %v4180
    %v4182 = vrot.slane %v1133, %v4181
    %v4183 = vsel %vm1166, %v4182, %v4178
    %v4184 = vsel %vm1182, %v4129, %v4120
    %v4185 = vsel %vm1183, %v4138, %v4184
    %v4186 = vsel %vm1185, %v4147, %v4185
    %v4187 = vsel %vm1187, %v4156, %v4186
    %v4188 = vsel %vm1189, %v4165, %v4187
    %v4189 = vsel %vm1191, %v4174, %v4188
    %v4190 = vsel %vm1193, %v4183, %v4189
    %4193 = vrot.lane.b32.xlu0 %v4095, 16
    %v4194 = vpop.permute.xlu0 %4193
    %vm4196 = vcmask 130048
    %v4197 = vsel %vm4196, %v4190, %v4194
    %v4198 = vlaneseq
    %v4199 = vshrl.u32 %v4198, 7
    %v4200 = vsub.s32 0, %v4199
    %v4201 = vrot.slane %v48, %v4200
    %vm4202 = vcmask 392192
    %v4204 = vsel %vm4202, %v4197, 0
    %4206 = vmatprep.subr.mxu0 0.0
    %4207 = vmatpush1.msra.mxu0 %v42
    %4208 = vmatprep.subr.mxu0 0.0
    %4209 = vmatpush1.msra.mxu0 %v43
    %4210 = vmatprep.subr.mxu0 0.0
    %4211 = vmatpush1.msra.mxu0 %v44
    %4212 = vmatprep.subr.mxu0 0.0
    %4213 = vmatpush1.msra.mxu0 %v45
    %4214 = vmatprep.subr.mxu0 0.0
    %4215 = vmatpush1.msra.mxu0 %v46
    %4216 = vmatprep.subr.mxu0 0.0
    %4217 = vmatpush1.msra.mxu0 %v47
    %4218 = vmatprep.subr.mxu0 0.0
    %4219 = vmatpush1.msra.mxu0 0.0
    %4220 = vmatprep.subr.mxu0 0.0
    %4221 = vmatpush1.msra.mxu0 0.0
    %4222 = vmatprep.subr.mxu0 0.0
    %4223 = vmatpush1.msra.mxu0 0.0
    %4224 = vmatprep.subr.mxu0 0.0
    %4225 = vmatpush1.msra.mxu0 0.0
    %4226 = vmatprep.subr.mxu0 0.0
    %4227 = vmatpush1.msra.mxu0 0.0
    %4228 = vmatprep.subr.mxu0 0.0
    %4229 = vmatpush1.msra.mxu0 0.0
    %4230 = vmatprep.subr.mxu0 0.0
    %4231 = vmatpush1.msra.mxu0 0.0
    %4232 = vmatprep.subr.mxu0 0.0
    %4233 = vmatpush1.msra.mxu0 0.0
    %4234 = vmatprep.subr.mxu0 0.0
    %4235 = vmatpush1.msra.mxu0 0.0
    %4236 = vmatprep.subr.mxu0 0.0
    %4237 = vmatpush1.msra.mxu0 0.0
    %4238 = vmatprep.subr.mxu0 0.0
    %4239 = vmatpush1.msra.mxu0 0.0
    %4240 = vmatprep.subr.mxu0 0.0
    %4241 = vmatpush1.msra.mxu0 0.0
    %4242 = vmatprep.subr.mxu0 0.0
    %4243 = vmatpush1.msra.mxu0 0.0
    %4244 = vmatprep.subr.mxu0 0.0
    %4245 = vmatpush1.msra.mxu0 0.0
    %4246 = vmatprep.subr.mxu0 0.0
    %4247 = vmatpush1.msra.mxu0 0.0
    %4248 = vmatprep.subr.mxu0 0.0
    %4249 = vmatpush1.msra.mxu0 0.0
    %4250 = vmatprep.subr.mxu0 0.0
    %4251 = vmatpush1.msra.mxu0 0.0
    %4252 = vmatprep.subr.mxu0 0.0
    %4253 = vmatpush1.msra.mxu0 0.0
    %4254 = vmatprep.subr.mxu0 0.0
    %4255 = vmatpush1.msra.mxu0 0.0
    %4256 = vmatprep.subr.mxu0 0.0
    %4257 = vmatpush1.msra.mxu0 0.0
    %4258 = vmatprep.subr.mxu0 0.0
    %4259 = vmatpush1.msra.mxu0 0.0
    %4260 = vmatprep.subr.mxu0 0.0
    %4261 = vmatpush1.msra.mxu0 0.0
    %4262 = vmatprep.subr.mxu0 0.0
    %4263 = vmatpush1.msra.mxu0 0.0
    %4264 = vmatprep.subr.mxu0 0.0
    %4265 = vmatpush1.msra.mxu0 0.0
    %4266 = vmatprep.subr.mxu0 0.0
    %4267 = vmatpush1.msra.mxu0 0.0
    %4268 = vmatprep.subr.mxu0 0.0
    %4269 = vmatpush1.msra.mxu0 0.0
    %4270 = vmatprep.mubr.f32.mxu0 0.0
    %4271 = vmatmul.mubr.f32.gmra.mrb[0].mxu0 %v4204
    %v4272 = vpop.f32.mrb[0].mxu0
    %v4273 = vadd.f32 %v4201, %v4272
    %v4274 = vpop.f32.mrb[0].mxu0
    %4275 = vdwg.mxu0
    %4276 = vst.msk [vmem:[#allocation6] sm:$0xff] %vm4196, %v4273
    // Predicated region
    $region18: #{tpu_custom_call.1} parent=1 // pred_check
      _
    $region19: #{tpu_custom_call.1} parent=1 // pred_check_branch
      %4278 = sbr.rel (0) target = $region21
    $region20: #{tpu_custom_call.1} parent=1 // pred_region
      %s4280 = ssub.s32 128, 128
      %4281 = vsyncadd [#allocation5], %s4280
      %s4283 = sshll.u32 [#allocation6], 4
      %s4284 = int_to_ptr.vmem [resolvable:$true] %s4283
      %4286 = dma.vmem_to_hbm [thread:$0]  %s4284, 128, %s3, [#allocation5]
    $region21: #{tpu_custom_call.1} parent=1 // pred_fallthru
      _
    // Predicated region
    $region22: #{tpu_custom_call.1} parent=1 // pred_check
      _
    $region23: #{tpu_custom_call.1} parent=1 // pred_check_branch
      %4288 = sbr.rel (0) target = $region25
    $region24: #{tpu_custom_call.1} parent=1 // pred_region
      %4289 = dma.done [#allocation5], 128
    $region25: #{tpu_custom_call.1} parent=1 // pred_fallthru
      _
    %4290 = vsyncpa [#allocation4], 1
    %4291 = vsyncpa [#allocation5], 1

</llo_original>
